<compile_context>
chip_gen: v7x
topology: tpu7x:2x2x1
jax: 0.10.0
libtpu: 0.0.40
codegen_flags: <defaults>
</compile_context>

<pallas_src>
import functools
import math

import jax
import jax.numpy as jnp
from jax.experimental import pallas as pl
from jax.experimental.pallas import tpu as pltpu

BN_EPS = 1e-5


def _round_up(x, m):
    return ((x + m - 1) // m) * m


@functools.lru_cache(maxsize=None)
def _vmem_sizes():
    """Per-generation (vmem_limit_bytes, tile_budget_bytes)."""
    cap = 64 * 1024 * 1024
    try:
        cap = int(getattr(pltpu.get_tpu_info(), "vmem_capacity_bytes", cap))
    except Exception:
        pass
    limit = min((cap * 3) // 4, 96 * 1024 * 1024)   # 48 MiB on v7x, 96 MiB on v5e/v6e
    return int(limit), int(limit) // 2


@functools.lru_cache(maxsize=None)
def _buffered_one_supported():
    """Probe once whether pipeline_mode=pl.Buffered(1) is accepted on this jax."""
    try:
        with jax.ensure_compile_time_eval():
            def k(x_ref, o_ref):
                o_ref[...] = x_ref[...]
            spec = pl.BlockSpec((8, 128), lambda i: (0, 0),
                                pipeline_mode=pl.Buffered(1))
            x = jnp.zeros((8, 128), jnp.float32)
            out = pl.pallas_call(
                k, out_shape=jax.ShapeDtypeStruct((8, 128), jnp.float32),
                grid=(1,), in_specs=[spec],
                out_specs=pl.BlockSpec((8, 128), lambda i: (0, 0)))(x)
            jax.block_until_ready(out)
        return True
    except Exception:
        return False


def _choose_nb(n, ho, wo, cin, cp, nph, hph, wph, w_bytes):
    """Images per grid block, sized against the per-generation VMEM budget."""
    _, budget = _vmem_sizes()
    m_img = ho * wo
    # VMEM-tiled footprints (last two dims padded to the (16,128) bf16 tile).
    x_img = nph * hph * _round_up(wph, 16) * _round_up(cin, 128) * 2
    y_img = _round_up(m_img, 16) * cp * 2
    acc_img = _round_up(m_img, 8) * cp * 4
    pass1 = 2 * x_img + 2 * y_img + acc_img
    # pass 2: conv tile + residual (bf16, double-buffered) + f32 output.
    pass2 = 2 * (_round_up(m_img, 16) * cp * 4 + _round_up(m_img, 8) * cp * 4)
    per_img = max(pass1, pass2)
    avail = max(budget - w_bytes - 64 * 1024, per_img)
    nb = max(1, int(avail // per_img))
    # rows-per-block (NB*Ho*Wo) must stay a multiple of 8 (sublane dim).
    m8 = 8 // math.gcd(m_img, 8)
    nb = max(m8, (nb // m8) * m8)
    if n >= 2 * m8:                      # keep >=2 grid steps -> megacore on v7x
        nb = min(nb, _round_up((n + 1) // 2, m8))
    nb = min(nb, _round_up(n, m8))
    return nb


# ----------------------------------------------------------------------------
# Pass 1: fused conv (taps over a polyphase NHWC block, MXU) + partial BN stats
# ----------------------------------------------------------------------------
def _conv_stats_kernel(x_ref, w_ref, y_ref, stats_ref, *, tap_info, ho, wo):
    nb = x_ref.shape[1]
    acc = None
    for t, (ph_i, oh, ow) in enumerate(tap_info):
        # contiguous stride-1 window of phase ph_i: (NB, Ho, Wo, Cin), bf16
        xw = x_ref[ph_i, :, oh:oh + ho, ow:ow + wo, :]
        xm = xw.reshape(nb * ho * wo, xw.shape[-1])
        d = jnp.dot(xm, w_ref[t], preferred_element_type=jnp.float32)
        acc = d if acc is None else acc + d
    y_ref[...] = acc.astype(y_ref.dtype)
    # per-block partial statistics (reduced in JAX) -> grid axis stays "parallel"
    stats_ref[0, 0:1, :] = jnp.sum(acc, axis=0, keepdims=True)
    stats_ref[0, 1:2, :] = jnp.sum(acc * acc, axis=0, keepdims=True)


# ----------------------------------------------------------------------------
# Pass 2: BatchNorm apply + optional residual + optional ReLU (VPU, f32)
# ----------------------------------------------------------------------------
def _bn_apply_kernel(*refs, apply_relu, add_residual):
    if add_residual:
        y_ref, scale_ref, shift_ref, r_ref, o_ref = refs
    else:
        y_ref, scale_ref, shift_ref, o_ref = refs
        r_ref = None
    y = y_ref[...].astype(jnp.float32) * scale_ref[...] + shift_ref[...]
    if add_residual:
        y = y + r_ref[...].astype(jnp.float32)
    if apply_relu:
        y = jnp.maximum(y, 0.0)
    o_ref[...] = y.astype(o_ref.dtype)


# ----------------------------------------------------------------------------
# Wrapper: Conv2d(bias=False) + BatchNorm(batch stats) [+ residual] [+ ReLU]
# ----------------------------------------------------------------------------
def conv_bn_act(x_nhwc, w_taps, gamma, beta, *, stride, padding, residual=None,
                apply_relu=True, out_dtype=jnp.float32):
    """x_nhwc: (N, H, W, Cin).  w_taps: (kh, kw, Cin, Cout).
    residual: (N, Ho, Wo, Cout) or None.  Returns (N, Ho, Wo, Cout)."""
    N, H, W, Cin = x_nhwc.shape
    kh, kw, _, Cout = w_taps.shape
    s = int(stride)
    Hp, Wp = H + 2 * padding, W + 2 * padding
    Ho = (Hp - kh) // s + 1
    Wo = (Wp - kw) // s + 1
    Cp = _round_up(Cout, 128)
    ntaps = kh * kw

    # taps -> (phase, row-offset, col-offset); the polyphase split turns every
    # tap into a contiguous stride-1 window (no strided / haloed DMA needed).
    taps_hw = [(dh, dw) for dh in range(kh) for dw in range(kw)]
    phases = sorted({(dh % s, dw % s) for (dh, dw) in taps_hw})
    phase_pos = {p: i for i, p in enumerate(phases)}
    tap_info = tuple((phase_pos[(dh % s, dw % s)], dh // s, dw // s)
                     for (dh, dw) in taps_hw)
    nph = len(phases)
    Hph = -(-Hp // s)
    Wph = -(-Wp // s)

    w_bufs = 1 if _buffered_one_supported() else 2
    w_bytes = w_bufs * ntaps * _round_up(Cin, 16) * Cp * 2
    NB = _choose_nb(N, Ho, Wo, Cin, Cp, nph, Hph, Wph, w_bytes)
    Npad = _round_up(N, NB)
    n_blocks = Npad // NB
    M = Npad * Ho * Wo
    MB = NB * Ho * Wo

    # ---- JAX-side prep: one bf16 pass over the activation (no im2col) -------
    xb = x_nhwc.astype(jnp.bfloat16)
    xb = jnp.pad(xb, ((0, Npad - N), (padding, padding), (padding, padding), (0, 0)))
    ph_arrs = []
    for (i, j) in phases:
        ph = xb[:, i::s, j::s, :]
        ph = jnp.pad(ph, ((0, 0), (0, Hph - ph.shape[1]),
                          (0, Wph - ph.shape[2]), (0, 0)))
        ph_arrs.append(ph)
    x_ph = jnp.stack(ph_arrs, axis=0)                 # (nph, Npad, Hph, Wph, Cin)

    wt = jnp.pad(w_taps.astype(jnp.bfloat16).reshape(ntaps, Cin, Cout),
                 ((0, 0), (0, 0), (0, Cp - Cout)))    # (ntaps, Cin, Cp)

    limit, _ = _vmem_sizes()
    w_kwargs = {"pipeline_mode": pl.Buffered(1)} if w_bufs == 1 else {}

    # ---- pass 1: conv + partial stats (megacore-parallel over batch blocks) --
    kern1 = functools.partial(_conv_stats_kernel, tap_info=tap_info, ho=Ho, wo=Wo)
    y_conv, part_stats = pl.pallas_call(
        kern1,
        out_shape=(jax.ShapeDtypeStruct((M, Cp), jnp.bfloat16),
                   jax.ShapeDtypeStruct((n_blocks, 2, Cp), jnp.float32)),
        grid=(n_blocks,),
        in_specs=[
            pl.BlockSpec((nph, NB, Hph, Wph, Cin), lambda b: (0, b, 0, 0, 0)),
            pl.BlockSpec((ntaps, Cin, Cp), lambda b: (0, 0, 0), **w_kwargs),
        ],
        out_specs=(
            pl.BlockSpec((MB, Cp), lambda b: (b, 0)),
            pl.BlockSpec((1, 2, Cp), lambda b: (b, 0, 0)),
        ),
        compiler_params=pltpu.CompilerParams(
            dimension_semantics=("parallel",),
            vmem_limit_bytes=limit),
        cost_estimate=pl.CostEstimate(
            flops=2 * M * ntaps * Cin * Cp,
            transcendentals=0,
            bytes_accessed=(x_ph.size * 2 + wt.size * 2 + M * Cp * 2
                            + n_blocks * 2 * Cp * 4)),
    )(x_ph, wt)

    # ---- tiny per-channel math in plain JAX (batch mean / biased variance) ---
    count = jnp.float32(N * Ho * Wo)
    stats = jnp.sum(part_stats, axis=0)               # (2, Cp)
    mu = stats[0] / count
    var = jnp.maximum(stats[1] / count - mu * mu, 0.0)
    inv = jax.lax.rsqrt(var + BN_EPS)
    g = jnp.pad(gamma.astype(jnp.float32), (0, Cp - Cout))
    b = jnp.pad(beta.astype(jnp.float32), (0, Cp - Cout))
    scale = (g * inv).reshape(1, Cp)
    shift = (b - mu * g * inv).reshape(1, Cp)

    # ---- pass 2: BN apply + residual + ReLU ----------------------------------
    args = [y_conv, scale, shift]
    in_specs = [pl.BlockSpec((MB, Cp), lambda bb: (bb, 0)),
                pl.BlockSpec((1, Cp), lambda bb: (0, 0)),
                pl.BlockSpec((1, Cp), lambda bb: (0, 0))]
    if residual is not None:
        r = jnp.pad(residual.astype(jnp.bfloat16),
                    ((0, Npad - N), (0, 0), (0, 0), (0, Cp - Cout)))
        args.append(r.reshape(M, Cp))
        in_specs.append(pl.BlockSpec((MB, Cp), lambda bb: (bb, 0)))

    kern2 = functools.partial(_bn_apply_kernel, apply_relu=apply_relu,
                              add_residual=residual is not None)
    out = pl.pallas_call(
        kern2,
        out_shape=jax.ShapeDtypeStruct((M, Cp), out_dtype),
        grid=(n_blocks,),
        in_specs=in_specs,
        out_specs=pl.BlockSpec((MB, Cp), lambda bb: (bb, 0)),
        compiler_params=pltpu.CompilerParams(
            dimension_semantics=("parallel",),
            vmem_limit_bytes=limit),
    )(*args)

    return out[:N * Ho * Wo, :Cout].reshape(N, Ho, Wo, Cout)


# ----------------------------------------------------------------------------
# BasicBlock forward
# ----------------------------------------------------------------------------
def _torch_w_to_taps(w):
    """(Cout, Cin, kh, kw) PyTorch layout -> (kh, kw, Cin, Cout)."""
    return jnp.transpose(w, (2, 3, 1, 0))


@functools.partial(jax.jit, static_argnames=("stride",))
def basic_block_forward(x_nchw, params, stride=1):
    x = jnp.transpose(x_nchw, (0, 2, 3, 1)).astype(jnp.float32)   # NHWC
    N, H, W, Cin = x.shape
    Cout = params["conv1_w"].shape[0]

    # conv1 (3x3 / stride, pad 1) + bn1 + relu   (intermediate kept in bf16)
    y1 = conv_bn_act(x, _torch_w_to_taps(params["conv1_w"]),
                     params["bn1_g"], params["bn1_b"],
                     stride=stride, padding=1, residual=None,
                     apply_relu=True, out_dtype=jnp.bfloat16)      # (N,Ho,Wo,Cout)

    # shortcut branch
    if stride == 1:
        assert Cin == Cout, "identity shortcut requires in_channels == out_channels"
        res = x
    else:
        res = conv_bn_act(x, _torch_w_to_taps(params["down_w"]),
                          params["down_g"], params["down_b"],
                          stride=stride, padding=0, residual=None,
                          apply_relu=False, out_dtype=jnp.bfloat16)

    # conv2 (3x3 / 1, pad 1) + bn2 + shortcut add + relu (fused into pass 2)
    out = conv_bn_act(y1, _torch_w_to_taps(params["conv2_w"]),
                      params["bn2_g"], params["bn2_b"],
                      stride=1, padding=1, residual=res,
                      apply_relu=True, out_dtype=jnp.float32)
    return jnp.transpose(out, (0, 3, 1, 2))                        # back to NCHW


# ----------------------------------------------------------------------------
# Pure-JAX reference (numerical sanity check)
# ----------------------------------------------------------------------------
def reference_basic_block(x, params, stride):
    dn = ("NCHW", "OIHW", "NCHW")

    def conv(v, w, s, pad):
        return jax.lax.conv_general_dilated(
            v, w, (s, s), pad, dimension_numbers=dn,
            precision=jax.lax.Precision.HIGHEST)

    def bn(y, g, b):
        mu = jnp.mean(y, axis=(0, 2, 3), keepdims=True)
        var = jnp.mean(jnp.square(y - mu), axis=(0, 2, 3), keepdims=True)
        return (y - mu) * jax.lax.rsqrt(var + BN_EPS) * g.reshape(1, -1, 1, 1) \
               + b.reshape(1, -1, 1, 1)

    out = jnp.maximum(bn(conv(x, params["conv1_w"], stride, ((1, 1), (1, 1))),
                         params["bn1_g"], params["bn1_b"]), 0.0)
    out = bn(conv(out, params["conv2_w"], 1, ((1, 1), (1, 1))),
             params["bn2_g"], params["bn2_b"])
    if stride == 1:
        idn = x
    else:
        idn = bn(conv(x, params["down_w"], stride, ((0, 0), (0, 0))),
                 params["down_g"], params["down_b"])
    return jnp.maximum(out + idn, 0.0)


def _make_params(key, cin, cout, with_downsample):
    ks = jax.random.split(key, 9)
    p = {
        "conv1_w": 0.2 * jax.random.normal(ks[0], (cout, cin, 3, 3), jnp.float32),
        "bn1_g": 1.0 + 0.1 * jax.random.normal(ks[1], (cout,), jnp.float32),
        "bn1_b": 0.1 * jax.random.normal(ks[2], (cout,), jnp.float32),
        "conv2_w": 0.2 * jax.random.normal(ks[3], (cout, cout, 3, 3), jnp.float32),
        "bn2_g": 1.0 + 0.1 * jax.random.normal(ks[4], (cout,), jnp.float32),
        "bn2_b": 0.1 * jax.random.normal(ks[5], (cout,), jnp.float32),
    }
    if with_downsample:
        p["down_w"] = 0.2 * jax.random.normal(ks[6], (cout, cin, 1, 1), jnp.float32)
        p["down_g"] = 1.0 + 0.1 * jax.random.normal(ks[7], (cout,), jnp.float32)
        p["down_b"] = 0.1 * jax.random.normal(ks[8], (cout,), jnp.float32)
    return p


if __name__ == "__main__":
    key = jax.random.PRNGKey(0)
    k_x1, k_x2, k_p1, k_p2 = jax.random.split(key, 4)

    # Case 1: stride=1, identity shortcut (in_channels == out_channels).
    N, Cin, H, W = 2, 8, 16, 16
    x1 = jax.random.normal(k_x1, (N, Cin, H, W), jnp.float32)
    params1 = _make_params(k_p1, Cin, Cin, with_downsample=False)
    out1 = jax.block_until_ready(basic_block_forward(x1, params1, stride=1))
    ref1 = reference_basic_block(x1, params1, 1)
    assert out1.shape == (N, Cin, H, W)
    assert bool(jnp.allclose(out1, ref1, atol=4e-2, rtol=4e-2)), \
        f"case1 max err {float(jnp.max(jnp.abs(out1 - ref1)))}"

    # Case 2: stride=2 with 1x1-conv + BN downsample shortcut.
    Cout, H2, W2 = 16, 32, 32
    x2 = jax.random.normal(k_x2, (N, Cin, H2, W2), jnp.float32)
    params2 = _make_params(k_p2, Cin, Cout, with_downsample=True)
    out2 = jax.block_until_ready(basic_block_forward(x2, params2, stride=2))
    ref2 = reference_basic_block(x2, params2, 2)
    assert out2.shape == (N, Cout, H2 // 2, W2 // 2)
    assert bool(jnp.allclose(out2, ref2, atol=4e-2, rtol=4e-2)), \
        f"case2 max err {float(jnp.max(jnp.abs(out2 - ref2)))}"

    print("KERNEL_OK")
</pallas_src>

<mosaic_0001>
module attributes {stable_mosaic.version = 11 : i64} {
  func.func @_conv_stats_kernel(%arg0: i32, %arg1: memref<1x1x18x18x8xbf16, #tpu.memory_space<vmem>>, %arg2: memref<9x8x128xbf16, #tpu.memory_space<vmem>>, %arg3: memref<256x128xbf16, #tpu.memory_space<vmem>>, %arg4: memref<1x2x128xf32, #tpu.memory_space<vmem>>) attributes {dimension_semantics = [#tpu.dimension_semantics<parallel>], iteration_bounds = array<i64: 2>, scalar_prefetch = 0 : i64, scratch_operands = 0 : i64, tpu.core_type = #tpu.core_type<tc>, window_params = [{transform_indices = @transform_0, window_bounds = array<i64: 1, 1, 18, 18, 8>}, {pipeline_mode = #tpu.pipeline_mode<synchronous>, transform_indices = @transform_1, window_bounds = array<i64: 9, 8, 128>}, {transform_indices = @transform_2, window_bounds = array<i64: 256, 128>}, {transform_indices = @transform_3, window_bounds = array<i64: 1, 2, 128>}]} {
    %c0 = arith.constant 0 : index
    %c0_0 = arith.constant 0 : index
    %c0_1 = arith.constant 0 : index
    %c0_2 = arith.constant 0 : index
    %c0_3 = arith.constant 0 : index
    %0 = vector.load %arg1[%c0, %c0_0, %c0_1, %c0_2, %c0_3] : memref<1x1x18x18x8xbf16, #tpu.memory_space<vmem>>, vector<1x1x16x16x8xbf16>
    %1 = vector.shape_cast %0 : vector<1x1x16x16x8xbf16> to vector<1x16x16x8xbf16>
    %2 = vector.shape_cast %1 : vector<1x16x16x8xbf16> to vector<256x8xbf16>
    %c0_4 = arith.constant 0 : index
    %c0_5 = arith.constant 0 : index
    %c0_6 = arith.constant 0 : index
    %3 = vector.load %arg2[%c0_4, %c0_5, %c0_6] : memref<9x8x128xbf16, #tpu.memory_space<vmem>>, vector<1x8x128xbf16>
    %4 = vector.shape_cast %3 : vector<1x8x128xbf16> to vector<8x128xbf16>
    %cst = arith.constant dense<0.000000e+00> : vector<256x128xf32>
    %5 = tpu.matmul %2, %4, %cst {dimension_numbers = #tpu.dot_dimension_numbers<[1], [0], [0], [1], [0, 0, 1, 1], [], []>} : vector<256x8xbf16>, vector<8x128xbf16>, vector<256x128xf32> -> vector<256x128xf32>
    %c0_7 = arith.constant 0 : index
    %c0_8 = arith.constant 0 : index
    %c0_9 = arith.constant 0 : index
    %c1 = arith.constant 1 : index
    %c0_10 = arith.constant 0 : index
    %6 = vector.load %arg1[%c0_7, %c0_8, %c0_9, %c1, %c0_10] : memref<1x1x18x18x8xbf16, #tpu.memory_space<vmem>>, vector<1x1x16x16x8xbf16>
    %7 = vector.shape_cast %6 : vector<1x1x16x16x8xbf16> to vector<1x16x16x8xbf16>
    %8 = vector.shape_cast %7 : vector<1x16x16x8xbf16> to vector<256x8xbf16>
    %c1_11 = arith.constant 1 : index
    %c0_12 = arith.constant 0 : index
    %c0_13 = arith.constant 0 : index
    %9 = vector.load %arg2[%c1_11, %c0_12, %c0_13] : memref<9x8x128xbf16, #tpu.memory_space<vmem>>, vector<1x8x128xbf16>
    %10 = vector.shape_cast %9 : vector<1x8x128xbf16> to vector<8x128xbf16>
    %cst_14 = arith.constant dense<0.000000e+00> : vector<256x128xf32>
    %11 = tpu.matmul %8, %10, %cst_14 {dimension_numbers = #tpu.dot_dimension_numbers<[1], [0], [0], [1], [0, 0, 1, 1], [], []>} : vector<256x8xbf16>, vector<8x128xbf16>, vector<256x128xf32> -> vector<256x128xf32>
    %12 = arith.addf %5, %11 : vector<256x128xf32>
    %c0_15 = arith.constant 0 : index
    %c0_16 = arith.constant 0 : index
    %c0_17 = arith.constant 0 : index
    %c2 = arith.constant 2 : index
    %c0_18 = arith.constant 0 : index
    %13 = vector.load %arg1[%c0_15, %c0_16, %c0_17, %c2, %c0_18] : memref<1x1x18x18x8xbf16, #tpu.memory_space<vmem>>, vector<1x1x16x16x8xbf16>
    %14 = vector.shape_cast %13 : vector<1x1x16x16x8xbf16> to vector<1x16x16x8xbf16>
    %15 = vector.shape_cast %14 : vector<1x16x16x8xbf16> to vector<256x8xbf16>
    %c2_19 = arith.constant 2 : index
    %c0_20 = arith.constant 0 : index
    %c0_21 = arith.constant 0 : index
    %16 = vector.load %arg2[%c2_19, %c0_20, %c0_21] : memref<9x8x128xbf16, #tpu.memory_space<vmem>>, vector<1x8x128xbf16>
    %17 = vector.shape_cast %16 : vector<1x8x128xbf16> to vector<8x128xbf16>
    %cst_22 = arith.constant dense<0.000000e+00> : vector<256x128xf32>
    %18 = tpu.matmul %15, %17, %cst_22 {dimension_numbers = #tpu.dot_dimension_numbers<[1], [0], [0], [1], [0, 0, 1, 1], [], []>} : vector<256x8xbf16>, vector<8x128xbf16>, vector<256x128xf32> -> vector<256x128xf32>
    %19 = arith.addf %12, %18 : vector<256x128xf32>
    %c0_23 = arith.constant 0 : index
    %c0_24 = arith.constant 0 : index
    %c1_25 = arith.constant 1 : index
    %c0_26 = arith.constant 0 : index
    %c0_27 = arith.constant 0 : index
    %20 = vector.load %arg1[%c0_23, %c0_24, %c1_25, %c0_26, %c0_27] : memref<1x1x18x18x8xbf16, #tpu.memory_space<vmem>>, vector<1x1x16x16x8xbf16>
    %21 = vector.shape_cast %20 : vector<1x1x16x16x8xbf16> to vector<1x16x16x8xbf16>
    %22 = vector.shape_cast %21 : vector<1x16x16x8xbf16> to vector<256x8xbf16>
    %c3 = arith.constant 3 : index
    %c0_28 = arith.constant 0 : index
    %c0_29 = arith.constant 0 : index
    %23 = vector.load %arg2[%c3, %c0_28, %c0_29] : memref<9x8x128xbf16, #tpu.memory_space<vmem>>, vector<1x8x128xbf16>
    %24 = vector.shape_cast %23 : vector<1x8x128xbf16> to vector<8x128xbf16>
    %cst_30 = arith.constant dense<0.000000e+00> : vector<256x128xf32>
    %25 = tpu.matmul %22, %24, %cst_30 {dimension_numbers = #tpu.dot_dimension_numbers<[1], [0], [0], [1], [0, 0, 1, 1], [], []>} : vector<256x8xbf16>, vector<8x128xbf16>, vector<256x128xf32> -> vector<256x128xf32>
    %26 = arith.addf %19, %25 : vector<256x128xf32>
    %c0_31 = arith.constant 0 : index
    %c0_32 = arith.constant 0 : index
    %c1_33 = arith.constant 1 : index
    %c1_34 = arith.constant 1 : index
    %c0_35 = arith.constant 0 : index
    %27 = vector.load %arg1[%c0_31, %c0_32, %c1_33, %c1_34, %c0_35] : memref<1x1x18x18x8xbf16, #tpu.memory_space<vmem>>, vector<1x1x16x16x8xbf16>
    %28 = vector.shape_cast %27 : vector<1x1x16x16x8xbf16> to vector<1x16x16x8xbf16>
    %29 = vector.shape_cast %28 : vector<1x16x16x8xbf16> to vector<256x8xbf16>
    %c4 = arith.constant 4 : index
    %c0_36 = arith.constant 0 : index
    %c0_37 = arith.constant 0 : index
    %30 = vector.load %arg2[%c4, %c0_36, %c0_37] : memref<9x8x128xbf16, #tpu.memory_space<vmem>>, vector<1x8x128xbf16>
    %31 = vector.shape_cast %30 : vector<1x8x128xbf16> to vector<8x128xbf16>
    %cst_38 = arith.constant dense<0.000000e+00> : vector<256x128xf32>
    %32 = tpu.matmul %29, %31, %cst_38 {dimension_numbers = #tpu.dot_dimension_numbers<[1], [0], [0], [1], [0, 0, 1, 1], [], []>} : vector<256x8xbf16>, vector<8x128xbf16>, vector<256x128xf32> -> vector<256x128xf32>
    %33 = arith.addf %26, %32 : vector<256x128xf32>
    %c0_39 = arith.constant 0 : index
    %c0_40 = arith.constant 0 : index
    %c1_41 = arith.constant 1 : index
    %c2_42 = arith.constant 2 : index
    %c0_43 = arith.constant 0 : index
    %34 = vector.load %arg1[%c0_39, %c0_40, %c1_41, %c2_42, %c0_43] : memref<1x1x18x18x8xbf16, #tpu.memory_space<vmem>>, vector<1x1x16x16x8xbf16>
    %35 = vector.shape_cast %34 : vector<1x1x16x16x8xbf16> to vector<1x16x16x8xbf16>
    %36 = vector.shape_cast %35 : vector<1x16x16x8xbf16> to vector<256x8xbf16>
    %c5 = arith.constant 5 : index
    %c0_44 = arith.constant 0 : index
    %c0_45 = arith.constant 0 : index
    %37 = vector.load %arg2[%c5, %c0_44, %c0_45] : memref<9x8x128xbf16, #tpu.memory_space<vmem>>, vector<1x8x128xbf16>
    %38 = vector.shape_cast %37 : vector<1x8x128xbf16> to vector<8x128xbf16>
    %cst_46 = arith.constant dense<0.000000e+00> : vector<256x128xf32>
    %39 = tpu.matmul %36, %38, %cst_46 {dimension_numbers = #tpu.dot_dimension_numbers<[1], [0], [0], [1], [0, 0, 1, 1], [], []>} : vector<256x8xbf16>, vector<8x128xbf16>, vector<256x128xf32> -> vector<256x128xf32>
    %40 = arith.addf %33, %39 : vector<256x128xf32>
    %c0_47 = arith.constant 0 : index
    %c0_48 = arith.constant 0 : index
    %c2_49 = arith.constant 2 : index
    %c0_50 = arith.constant 0 : index
    %c0_51 = arith.constant 0 : index
    %41 = vector.load %arg1[%c0_47, %c0_48, %c2_49, %c0_50, %c0_51] : memref<1x1x18x18x8xbf16, #tpu.memory_space<vmem>>, vector<1x1x16x16x8xbf16>
    %42 = vector.shape_cast %41 : vector<1x1x16x16x8xbf16> to vector<1x16x16x8xbf16>
    %43 = vector.shape_cast %42 : vector<1x16x16x8xbf16> to vector<256x8xbf16>
    %c6 = arith.constant 6 : index
    %c0_52 = arith.constant 0 : index
    %c0_53 = arith.constant 0 : index
    %44 = vector.load %arg2[%c6, %c0_52, %c0_53] : memref<9x8x128xbf16, #tpu.memory_space<vmem>>, vector<1x8x128xbf16>
    %45 = vector.shape_cast %44 : vector<1x8x128xbf16> to vector<8x128xbf16>
    %cst_54 = arith.constant dense<0.000000e+00> : vector<256x128xf32>
    %46 = tpu.matmul %43, %45, %cst_54 {dimension_numbers = #tpu.dot_dimension_numbers<[1], [0], [0], [1], [0, 0, 1, 1], [], []>} : vector<256x8xbf16>, vector<8x128xbf16>, vector<256x128xf32> -> vector<256x128xf32>
    %47 = arith.addf %40, %46 : vector<256x128xf32>
    %c0_55 = arith.constant 0 : index
    %c0_56 = arith.constant 0 : index
    %c2_57 = arith.constant 2 : index
    %c1_58 = arith.constant 1 : index
    %c0_59 = arith.constant 0 : index
    %48 = vector.load %arg1[%c0_55, %c0_56, %c2_57, %c1_58, %c0_59] : memref<1x1x18x18x8xbf16, #tpu.memory_space<vmem>>, vector<1x1x16x16x8xbf16>
    %49 = vector.shape_cast %48 : vector<1x1x16x16x8xbf16> to vector<1x16x16x8xbf16>
    %50 = vector.shape_cast %49 : vector<1x16x16x8xbf16> to vector<256x8xbf16>
    %c7 = arith.constant 7 : index
    %c0_60 = arith.constant 0 : index
    %c0_61 = arith.constant 0 : index
    %51 = vector.load %arg2[%c7, %c0_60, %c0_61] : memref<9x8x128xbf16, #tpu.memory_space<vmem>>, vector<1x8x128xbf16>
    %52 = vector.shape_cast %51 : vector<1x8x128xbf16> to vector<8x128xbf16>
    %cst_62 = arith.constant dense<0.000000e+00> : vector<256x128xf32>
    %53 = tpu.matmul %50, %52, %cst_62 {dimension_numbers = #tpu.dot_dimension_numbers<[1], [0], [0], [1], [0, 0, 1, 1], [], []>} : vector<256x8xbf16>, vector<8x128xbf16>, vector<256x128xf32> -> vector<256x128xf32>
    %54 = arith.addf %47, %53 : vector<256x128xf32>
    %c0_63 = arith.constant 0 : index
    %c0_64 = arith.constant 0 : index
    %c2_65 = arith.constant 2 : index
    %c2_66 = arith.constant 2 : index
    %c0_67 = arith.constant 0 : index
    %55 = vector.load %arg1[%c0_63, %c0_64, %c2_65, %c2_66, %c0_67] : memref<1x1x18x18x8xbf16, #tpu.memory_space<vmem>>, vector<1x1x16x16x8xbf16>
    %56 = vector.shape_cast %55 : vector<1x1x16x16x8xbf16> to vector<1x16x16x8xbf16>
    %57 = vector.shape_cast %56 : vector<1x16x16x8xbf16> to vector<256x8xbf16>
    %c8 = arith.constant 8 : index
    %c0_68 = arith.constant 0 : index
    %c0_69 = arith.constant 0 : index
    %58 = vector.load %arg2[%c8, %c0_68, %c0_69] : memref<9x8x128xbf16, #tpu.memory_space<vmem>>, vector<1x8x128xbf16>
    %59 = vector.shape_cast %58 : vector<1x8x128xbf16> to vector<8x128xbf16>
    %cst_70 = arith.constant dense<0.000000e+00> : vector<256x128xf32>
    %60 = tpu.matmul %57, %59, %cst_70 {dimension_numbers = #tpu.dot_dimension_numbers<[1], [0], [0], [1], [0, 0, 1, 1], [], []>} : vector<256x8xbf16>, vector<8x128xbf16>, vector<256x128xf32> -> vector<256x128xf32>
    %61 = arith.addf %54, %60 : vector<256x128xf32>
    %62 = arith.truncf %61 : vector<256x128xf32> to vector<256x128xbf16>
    %c0_71 = arith.constant 0 : index
    %c0_72 = arith.constant 0 : index
    %63 = vector.load %arg3[%c0_71, %c0_72] : memref<256x128xbf16, #tpu.memory_space<vmem>>, vector<256x128xbf16>
    tpu.vector_store %arg3[%c0_71, %c0_72], %62 {strides = array<i32>} : memref<256x128xbf16, #tpu.memory_space<vmem>>, vector<256x128xbf16>,
    %cst_73 = arith.constant dense<0.000000e+00> : vector<128xf32>
    %64 = vector.multi_reduction <add>, %61, %cst_73 [0] : vector<256x128xf32> to vector<128xf32>
    %65 = vector.shape_cast %64 : vector<128xf32> to vector<1x128xf32>
    %c0_74 = arith.constant 0 : index
    %c0_75 = arith.constant 0 : index
    %c0_76 = arith.constant 0 : index
    %66 = vector.load %arg4[%c0_74, %c0_75, %c0_76] : memref<1x2x128xf32, #tpu.memory_space<vmem>>, vector<1x1x128xf32>
    %67 = vector.shape_cast %66 : vector<1x1x128xf32> to vector<1x128xf32>
    %68 = vector.shape_cast %65 : vector<1x128xf32> to vector<1x1x128xf32>
    tpu.vector_store %arg4[%c0_74, %c0_75, %c0_76], %68 {strides = array<i32>} : memref<1x2x128xf32, #tpu.memory_space<vmem>>, vector<1x1x128xf32>,
    %69 = arith.mulf %61, %61 : vector<256x128xf32>
    %cst_77 = arith.constant dense<0.000000e+00> : vector<128xf32>
    %70 = vector.multi_reduction <add>, %69, %cst_77 [0] : vector<256x128xf32> to vector<128xf32>
    %71 = vector.shape_cast %70 : vector<128xf32> to vector<1x128xf32>
    %c0_78 = arith.constant 0 : index
    %c1_79 = arith.constant 1 : index
    %c0_80 = arith.constant 0 : index
    %72 = vector.load %arg4[%c0_78, %c1_79, %c0_80] : memref<1x2x128xf32, #tpu.memory_space<vmem>>, vector<1x1x128xf32>
    %73 = vector.shape_cast %72 : vector<1x1x128xf32> to vector<1x128xf32>
    %74 = vector.shape_cast %71 : vector<1x128xf32> to vector<1x1x128xf32>
    tpu.vector_store %arg4[%c0_78, %c1_79, %c0_80], %74 {strides = array<i32>} : memref<1x2x128xf32, #tpu.memory_space<vmem>>, vector<1x1x128xf32>,
    return
  }
  func.func @transform_0(%arg0: i32) -> (i32, i32, i32, i32, i32) {
    %c0_i32 = arith.constant 0 : i32
    %c0_i32_0 = arith.constant 0 : i32
    %c0_i32_1 = arith.constant 0 : i32
    %c0_i32_2 = arith.constant 0 : i32
    %c0_i32_3 = arith.constant 0 : i32
    return %c0_i32, %arg0, %c0_i32_0, %c0_i32_1, %c0_i32_2 : i32, i32, i32, i32, i32
  }
  func.func @transform_1(%arg0: i32) -> (i32, i32, i32) {
    %c0_i32 = arith.constant 0 : i32
    %c0_i32_0 = arith.constant 0 : i32
    %c0_i32_1 = arith.constant 0 : i32
    %c0_i32_2 = arith.constant 0 : i32
    return %c0_i32, %c0_i32_0, %c0_i32_1 : i32, i32, i32
  }
  func.func @transform_2(%arg0: i32) -> (i32, i32) {
    %c0_i32 = arith.constant 0 : i32
    %c0_i32_0 = arith.constant 0 : i32
    return %arg0, %c0_i32 : i32, i32
  }
  func.func @transform_3(%arg0: i32) -> (i32, i32, i32) {
    %c0_i32 = arith.constant 0 : i32
    %c0_i32_0 = arith.constant 0 : i32
    %c0_i32_1 = arith.constant 0 : i32
    return %arg0, %c0_i32, %c0_i32_0 : i32, i32, i32
  }
}

module attributes {stable_mosaic.version = 11 : i64} {
  func.func @_bn_apply_kernel(%arg0: i32, %arg1: memref<256x128xbf16, #tpu.memory_space<vmem>>, %arg2: memref<1x128xf32, #tpu.memory_space<vmem>>, %arg3: memref<1x128xf32, #tpu.memory_space<vmem>>, %arg4: memref<256x128xbf16, #tpu.memory_space<vmem>>, %arg5: memref<256x128xf32, #tpu.memory_space<vmem>>) attributes {dimension_semantics = [#tpu.dimension_semantics<parallel>], iteration_bounds = array<i64: 2>, scalar_prefetch = 0 : i64, scratch_operands = 0 : i64, tpu.core_type = #tpu.core_type<tc>, window_params = [{transform_indices = @transform_0, window_bounds = array<i64: 256, 128>}, {pipeline_mode = #tpu.pipeline_mode<synchronous>, transform_indices = @transform_1, window_bounds = array<i64: 1, 128>}, {pipeline_mode = #tpu.pipeline_mode<synchronous>, transform_indices = @transform_2, window_bounds = array<i64: 1, 128>}, {transform_indices = @transform_3, window_bounds = array<i64: 256, 128>}, {transform_indices = @transform_4, window_bounds = array<i64: 256, 128>}]} {
    %c0 = arith.constant 0 : index
    %c0_0 = arith.constant 0 : index
    %0 = vector.load %arg1[%c0, %c0_0] : memref<256x128xbf16, #tpu.memory_space<vmem>>, vector<256x128xbf16>
    %1 = arith.extf %0 : vector<256x128xbf16> to vector<256x128xf32>
    %c0_1 = arith.constant 0 : index
    %c0_2 = arith.constant 0 : index
    %2 = vector.load %arg2[%c0_1, %c0_2] : memref<1x128xf32, #tpu.memory_space<vmem>>, vector<1x128xf32>
    %3 = vector.broadcast %2 : vector<1x128xf32> to vector<256x128xf32>
    %4 = arith.mulf %1, %3 : vector<256x128xf32>
    %c0_3 = arith.constant 0 : index
    %c0_4 = arith.constant 0 : index
    %5 = vector.load %arg3[%c0_3, %c0_4] : memref<1x128xf32, #tpu.memory_space<vmem>>, vector<1x128xf32>
    %6 = vector.broadcast %5 : vector<1x128xf32> to vector<256x128xf32>
    %7 = arith.addf %4, %6 : vector<256x128xf32>
    %c0_5 = arith.constant 0 : index
    %c0_6 = arith.constant 0 : index
    %8 = vector.load %arg4[%c0_5, %c0_6] : memref<256x128xbf16, #tpu.memory_space<vmem>>, vector<256x128xbf16>
    %9 = arith.extf %8 : vector<256x128xbf16> to vector<256x128xf32>
    %10 = arith.addf %7, %9 : vector<256x128xf32>
    %cst = arith.constant 0.000000e+00 : f32
    %11 = vector.broadcast %cst : f32 to vector<256x128xf32>
    %12 = arith.maximumf %10, %11 : vector<256x128xf32>
    %c0_7 = arith.constant 0 : index
    %c0_8 = arith.constant 0 : index
    %13 = vector.load %arg5[%c0_7, %c0_8] : memref<256x128xf32, #tpu.memory_space<vmem>>, vector<256x128xf32>
    tpu.vector_store %arg5[%c0_7, %c0_8], %12 {strides = array<i32>} : memref<256x128xf32, #tpu.memory_space<vmem>>, vector<256x128xf32>,
    return
  }
  func.func @transform_0(%arg0: i32) -> (i32, i32) {
    %c0_i32 = arith.constant 0 : i32
    %c0_i32_0 = arith.constant 0 : i32
    return %arg0, %c0_i32 : i32, i32
  }
  func.func @transform_1(%arg0: i32) -> (i32, i32) {
    %c0_i32 = arith.constant 0 : i32
    %c0_i32_0 = arith.constant 0 : i32
    %c0_i32_1 = arith.constant 0 : i32
    return %c0_i32, %c0_i32_0 : i32, i32
  }
  func.func @transform_2(%arg0: i32) -> (i32, i32) {
    %c0_i32 = arith.constant 0 : i32
    %c0_i32_0 = arith.constant 0 : i32
    %c0_i32_1 = arith.constant 0 : i32
    return %c0_i32, %c0_i32_0 : i32, i32
  }
  func.func @transform_3(%arg0: i32) -> (i32, i32) {
    %c0_i32 = arith.constant 0 : i32
    %c0_i32_0 = arith.constant 0 : i32
    return %arg0, %c0_i32 : i32, i32
  }
  func.func @transform_4(%arg0: i32) -> (i32, i32) {
    %c0_i32 = arith.constant 0 : i32
    %c0_i32_0 = arith.constant 0 : i32
    return %arg0, %c0_i32 : i32, i32
  }
}

module attributes {stable_mosaic.version = 11 : i64} {
  func.func @_bn_apply_kernel(%arg0: i32, %arg1: memref<256x128xbf16, #tpu.memory_space<vmem>>, %arg2: memref<1x128xf32, #tpu.memory_space<vmem>>, %arg3: memref<1x128xf32, #tpu.memory_space<vmem>>, %arg4: memref<256x128xbf16, #tpu.memory_space<vmem>>) attributes {dimension_semantics = [#tpu.dimension_semantics<parallel>], iteration_bounds = array<i64: 2>, scalar_prefetch = 0 : i64, scratch_operands = 0 : i64, tpu.core_type = #tpu.core_type<tc>, window_params = [{transform_indices = @transform_0, window_bounds = array<i64: 256, 128>}, {pipeline_mode = #tpu.pipeline_mode<synchronous>, transform_indices = @transform_1, window_bounds = array<i64: 1, 128>}, {pipeline_mode = #tpu.pipeline_mode<synchronous>, transform_indices = @transform_2, window_bounds = array<i64: 1, 128>}, {transform_indices = @transform_3, window_bounds = array<i64: 256, 128>}]} {
    %c0 = arith.constant 0 : index
    %c0_0 = arith.constant 0 : index
    %0 = vector.load %arg1[%c0, %c0_0] : memref<256x128xbf16, #tpu.memory_space<vmem>>, vector<256x128xbf16>
    %1 = arith.extf %0 : vector<256x128xbf16> to vector<256x128xf32>
    %c0_1 = arith.constant 0 : index
    %c0_2 = arith.constant 0 : index
    %2 = vector.load %arg2[%c0_1, %c0_2] : memref<1x128xf32, #tpu.memory_space<vmem>>, vector<1x128xf32>
    %3 = vector.broadcast %2 : vector<1x128xf32> to vector<256x128xf32>
    %4 = arith.mulf %1, %3 : vector<256x128xf32>
    %c0_3 = arith.constant 0 : index
    %c0_4 = arith.constant 0 : index
    %5 = vector.load %arg3[%c0_3, %c0_4] : memref<1x128xf32, #tpu.memory_space<vmem>>, vector<1x128xf32>
    %6 = vector.broadcast %5 : vector<1x128xf32> to vector<256x128xf32>
    %7 = arith.addf %4, %6 : vector<256x128xf32>
    %cst = arith.constant 0.000000e+00 : f32
    %8 = vector.broadcast %cst : f32 to vector<256x128xf32>
    %9 = arith.maximumf %7, %8 : vector<256x128xf32>
    %10 = arith.truncf %9 : vector<256x128xf32> to vector<256x128xbf16>
    %c0_5 = arith.constant 0 : index
    %c0_6 = arith.constant 0 : index
    %11 = vector.load %arg4[%c0_5, %c0_6] : memref<256x128xbf16, #tpu.memory_space<vmem>>, vector<256x128xbf16>
    tpu.vector_store %arg4[%c0_5, %c0_6], %10 {strides = array<i32>} : memref<256x128xbf16, #tpu.memory_space<vmem>>, vector<256x128xbf16>,
    return
  }
  func.func @transform_0(%arg0: i32) -> (i32, i32) {
    %c0_i32 = arith.constant 0 : i32
    %c0_i32_0 = arith.constant 0 : i32
    return %arg0, %c0_i32 : i32, i32
  }
  func.func @transform_1(%arg0: i32) -> (i32, i32) {
    %c0_i32 = arith.constant 0 : i32
    %c0_i32_0 = arith.constant 0 : i32
    %c0_i32_1 = arith.constant 0 : i32
    return %c0_i32, %c0_i32_0 : i32, i32
  }
  func.func @transform_2(%arg0: i32) -> (i32, i32) {
    %c0_i32 = arith.constant 0 : i32
    %c0_i32_0 = arith.constant 0 : i32
    %c0_i32_1 = arith.constant 0 : i32
    return %c0_i32, %c0_i32_0 : i32, i32
  }
  func.func @transform_3(%arg0: i32) -> (i32, i32) {
    %c0_i32 = arith.constant 0 : i32
    %c0_i32_0 = arith.constant 0 : i32
    return %arg0, %c0_i32 : i32, i32
  }
}

</mosaic_0001>

<llo_original>
// kernel: basic_block_forward.5
$region0: #{basic_block_forward.5}
  #allocation0 [shape = 'u32[]', space=smem, size = 0x4, offset = 0x4, fixed_abs, tag = 'smem constant byte address 0x4 - core index']
  #allocation1 [shape = 'u32[144,128]{1,0:T(1,128)}', space=vmem, size = 0x12000, scoped, tag = 'internal scratch']
  %s0 = inlined_call_operand.vmem [shape: bf16[512,128], index: 0, kind: input, shape index: {}]
  %s1 = inlined_call_operand.vmem [shape: f32[1,128], index: 1, kind: input, shape index: {}]
  %s2 = inlined_call_operand.vmem [shape: f32[1,128], index: 2, kind: input, shape index: {}]
  %s3 = inlined_call_operand.vmem [shape: bf16[512,128], index: 3, kind: output, shape index: {}]
  %s4 = sld [smem:[#allocation0]]
  $region45: #{basic_block_forward.5} parent=0
    _
  %s6 = ssub.s32 1, %s4
  %s7 = scalar_select 0, %s6, %s4
  loop: start=0, step=1, limit=4
  $region2: #{basic_block_forward.5} parent=0 // loop_pre_header
    _
  $region3: #{basic_block_forward.5} parent=0 // loop_header
    %s9 = sphi 0, %s13
    %p10 = scmp.ge.s32.totalorder %s9, 4
    %s19 = sphi 0, %s21
    %s22 = sphi 0, %s19
    %s23 = sphi 0, %s22
    %s39 = sphi 0, %s23
    %s43 = sphi 0, %s43
    %s45 = sphi 0, %s43
    %s46 = sphi 0, %s45
    %s60 = sphi 0, %s46
    %s64 = sphi 0, %s64
    %s66 = sphi 0, %s64
    %s67 = sphi 0, %s66
    %s81 = sphi 0, %s67
    %s87 = sphi 0, %s89
    %s90 = sphi 0, %s87
    %s91 = sphi 0, %s90
    %s107 = sphi 0, %s91
  $region4: #{basic_block_forward.5} parent=0 // loop_header_branch
    %12 = sbr.rel (%p10) target = $region8
  $region5: #{basic_block_forward.5} parent=0 // loop_body
    %s14 = ssub.s32 %s9, 1
    %s15 = ssub.s32 %s9, 2
    %s16 = sadd.s32 %s9, 1
    %s17 = ssub.s32 %s9, %s16
    %p18 = scmp.eq.s32.totalorder %s17, 0
    %s20 = sadd.s32 %s19, 1
    %s21 = scalar_select %p18, %s19, %s20
    %p24 = pneg %p18
    %p25 = scmp.eq.s32.totalorder %s9, 1
    %p26 = por %p24, %p25
    %p27 = scmp.ne.s32.totalorder %s19, %s22
    %p28 = scmp.eq.s32.totalorder %s9, 0
    %p29 = por %p27, %p28
    %p30 = scmp.ne.s32.totalorder %s19, %s22
    %p31 = scmp.eq.s32.totalorder %s14, 1
    %p32 = por %p30, %p31
    %p33 = scmp.ne.s32.totalorder %s22, %s23
    %p34 = scmp.eq.s32.totalorder %s14, 0
    %p35 = por %p33, %p34
    %p36 = scmp.ne.s32.totalorder %s22, %s23
    %p37 = scmp.eq.s32.totalorder %s15, 1
    %p38 = por %p36, %p37
    %p40 = scmp.ne.s32.totalorder %s23, %s39
    %p41 = scmp.eq.s32.totalorder %s15, 0
    %p42 = por %p40, %p41
    %s44 = sadd.s32 %s43, 1
    %p47 = scmp.eq.s32.totalorder %s9, 1
    %p48 = scmp.ne.s32.totalorder %s43, %s45
    %p49 = scmp.eq.s32.totalorder %s9, 0
    %p50 = por %p48, %p49
    %p51 = scmp.ne.s32.totalorder %s43, %s45
    %p52 = scmp.eq.s32.totalorder %s14, 1
    %p53 = por %p51, %p52
    %p54 = scmp.ne.s32.totalorder %s45, %s46
    %p55 = scmp.eq.s32.totalorder %s14, 0
    %p56 = por %p54, %p55
    %p57 = scmp.ne.s32.totalorder %s45, %s46
    %p58 = scmp.eq.s32.totalorder %s15, 1
    %p59 = por %p57, %p58
    %p61 = scmp.ne.s32.totalorder %s46, %s60
    %p62 = scmp.eq.s32.totalorder %s15, 0
    %p63 = por %p61, %p62
    %s65 = sadd.s32 %s64, 1
    %p68 = scmp.eq.s32.totalorder %s9, 1
    %p69 = scmp.ne.s32.totalorder %s64, %s66
    %p70 = scmp.eq.s32.totalorder %s9, 0
    %p71 = por %p69, %p70
    %p72 = scmp.ne.s32.totalorder %s64, %s66
    %p73 = scmp.eq.s32.totalorder %s14, 1
    %p74 = por %p72, %p73
    %p75 = scmp.ne.s32.totalorder %s66, %s67
    %p76 = scmp.eq.s32.totalorder %s14, 0
    %p77 = por %p75, %p76
    %p78 = scmp.ne.s32.totalorder %s66, %s67
    %p79 = scmp.eq.s32.totalorder %s15, 1
    %p80 = por %p78, %p79
    %p82 = scmp.ne.s32.totalorder %s67, %s81
    %p83 = scmp.eq.s32.totalorder %s15, 0
    %p84 = por %p82, %p83
    %s85 = ssub.s32 %s9, %s16
    %p86 = scmp.eq.s32.totalorder %s85, 0
    %s88 = sadd.s32 %s87, 1
    %s89 = scalar_select %p86, %s87, %s88
    %p92 = pneg %p86
    %p93 = scmp.eq.s32.totalorder %s9, 1
    %p94 = por %p92, %p93
    %p95 = scmp.ne.s32.totalorder %s87, %s90
    %p96 = scmp.eq.s32.totalorder %s9, 0
    %p97 = por %p95, %p96
    %p98 = scmp.ne.s32.totalorder %s87, %s90
    %p99 = scmp.eq.s32.totalorder %s14, 1
    %p100 = por %p98, %p99
    %p101 = scmp.ne.s32.totalorder %s90, %s91
    %p102 = scmp.eq.s32.totalorder %s14, 0
    %p103 = por %p101, %p102
    %p104 = scmp.ne.s32.totalorder %s90, %s91
    %p105 = scmp.eq.s32.totalorder %s15, 1
    %p106 = por %p104, %p105
    %p108 = scmp.ne.s32.totalorder %s91, %s107
    %p109 = scmp.eq.s32.totalorder %s15, 0
    %p110 = por %p108, %p109
    %p111 = scmp.le.s32.totalorder 1, %s9
    %p112 = scmp.lt.s32.totalorder %s9, 3
    %p113 = pnand %p111, %p112
    %p114 = pneg %p113
    // Predicated region
    $region9: #{basic_block_forward.5} parent=5 // pred_check
      _
    $region10: #{basic_block_forward.5} parent=5 // pred_check_branch
      %116 = sbr.rel (%p113) target = $region12
    $region11: #{basic_block_forward.5} parent=5 // pred_region
      %s117 = ssub.s32 %s9, 1
      // Predicated region
      $region13: #{basic_block_forward.5} parent=11 // pred_check
        %p118 = pneg %p56
      $region14: #{basic_block_forward.5} parent=11 // pred_check_branch
        %120 = sbr.rel (%p118) target = $region16
      $region15: #{basic_block_forward.5} parent=11 // pred_region
        _
      $region16: #{basic_block_forward.5} parent=11 // pred_fallthru
        _
      // Predicated region
      $region17: #{basic_block_forward.5} parent=11 // pred_check
        %p121 = pneg %p77
      $region18: #{basic_block_forward.5} parent=11 // pred_check_branch
        %123 = sbr.rel (%p121) target = $region20
      $region19: #{basic_block_forward.5} parent=11 // pred_region
        _
      $region20: #{basic_block_forward.5} parent=11 // pred_fallthru
        _
    $region12: #{basic_block_forward.5} parent=5 // pred_fallthru
      _
    %p124 = scmp.lt.s32.totalorder %s9, 2
    // Predicated region
    $region21: #{basic_block_forward.5} parent=5 // pred_check
      %p125 = pneg %p124
    $region22: #{basic_block_forward.5} parent=5 // pred_check_branch
      %127 = sbr.rel (%p125) target = $region24
    $region23: #{basic_block_forward.5} parent=5 // pred_region
      // Predicated region
      $region25: #{basic_block_forward.5} parent=23 // pred_check
        %p128 = pneg %p29
      $region26: #{basic_block_forward.5} parent=23 // pred_check_branch
        %130 = sbr.rel (%p128) target = $region28
      $region27: #{basic_block_forward.5} parent=23 // pred_region
        %s131 = smul.u32 32, %s9
        %p132 = scmp.lt.s32.totalorder %s131, 63
        %s133 = scalar_select %p132, %s131, 63
        %s134 = smul.addr %s133, 4
        %s135 = scalar_lea.vmem %s0, %s134
        %s136 = smul.u32 32, %s9
      $region28: #{basic_block_forward.5} parent=23 // pred_fallthru
        _
    $region24: #{basic_block_forward.5} parent=5 // pred_fallthru
      _
    %p137 = scmp.le.s32.totalorder 1, %s9
    %p138 = scmp.lt.s32.totalorder %s9, 3
    %p139 = pnand %p137, %p138
    %p140 = pneg %p139
    // Predicated region
    $region29: #{basic_block_forward.5} parent=5 // pred_check
      _
    $region30: #{basic_block_forward.5} parent=5 // pred_check_branch
      %142 = sbr.rel (%p139) target = $region32
    $region31: #{basic_block_forward.5} parent=5 // pred_region
      %s143 = ssub.s32 %s9, 1
      %s144 = smul.u32 32, %s14
      %p145 = scmp.lt.s32.totalorder %s144, 63
      %s146 = scalar_select %p145, %s144, 63
      %s147 = smul.addr %s146, 4
      %s148 = scalar_lea.vmem %s0, %s147
      %p149 = pneg %p35
      %p150 = pneg %p32
      %p151 = pneg %p56
      %p152 = pneg %p53
      %p153 = pneg %p77
      %p154 = pneg %p74
      %p155 = pneg %p103
      %p156 = pneg %p100
      %s157 = smul.u32 32, %s14
      %p158 = scmp.lt.s32.totalorder %s157, 63
      %s159 = scalar_select %p158, %s157, 63
      %s160 = smul.addr %s159, 4
      %s161 = scalar_lea.vmem %s3, %s160
      %s162 = smul.u32 32, %s14
      %p163 = scmp.lt.s32.totalorder %s162, 63
      %s164 = scalar_select %p163, %s162, 63
      %s165 = smul.addr %s164, 4
      %s166 = scalar_lea.vmem %s0, %s165
      %s167 = smul.u32 32, %s14
      %s168 = smul.u32 32, %s14
      %p169 = scmp.lt.s32.totalorder %s168, 63
      %s170 = scalar_select %p169, %s168, 63
      %s171 = smul.addr %s170, 4
      %s172 = scalar_lea.vmem %s3, %s171
      %s173 = smul.u32 32, %s14
      %v174 = vld [vmem:[%s166] sm:$0xf]
      %v175 = vld [vmem:[%s166 + $0x4] sm:$0xf]
      %v176 = vld [vmem:[%s166 + $0x8] sm:$0xf]
      %v177 = vld [vmem:[%s166 + $0xc] sm:$0xf]
      %v178 = vld [vmem:[%s166 + $0x10] sm:$0xf]
      %v179 = vld [vmem:[%s166 + $0x14] sm:$0xf]
      %v180 = vld [vmem:[%s166 + $0x18] sm:$0xf]
      %v181 = vld [vmem:[%s166 + $0x1c] sm:$0xf]
      %v182 = vld [vmem:[%s166 + $0x20] sm:$0xf]
      %v183 = vld [vmem:[%s166 + $0x24] sm:$0xf]
      %v184 = vld [vmem:[%s166 + $0x28] sm:$0xf]
      %v185 = vld [vmem:[%s166 + $0x2c] sm:$0xf]
      %v186 = vld [vmem:[%s166 + $0x30] sm:$0xf]
      %v187 = vld [vmem:[%s166 + $0x34] sm:$0xf]
      %v188 = vld [vmem:[%s166 + $0x38] sm:$0xf]
      %v189 = vld [vmem:[%s166 + $0x3c] sm:$0xf]
      %v190 = vld [vmem:[%s166 + $0x40] sm:$0xf]
      %v191 = vld [vmem:[%s166 + $0x44] sm:$0xf]
      %v192 = vld [vmem:[%s166 + $0x48] sm:$0xf]
      %v193 = vld [vmem:[%s166 + $0x4c] sm:$0xf]
      %v194 = vld [vmem:[%s166 + $0x50] sm:$0xf]
      %v195 = vld [vmem:[%s166 + $0x54] sm:$0xf]
      %v196 = vld [vmem:[%s166 + $0x58] sm:$0xf]
      %v197 = vld [vmem:[%s166 + $0x5c] sm:$0xf]
      %v198 = vld [vmem:[%s166 + $0x60] sm:$0xf]
      %v199 = vld [vmem:[%s166 + $0x64] sm:$0xf]
      %v200 = vld [vmem:[%s166 + $0x68] sm:$0xf]
      %v201 = vld [vmem:[%s166 + $0x6c] sm:$0xf]
      %v202 = vld [vmem:[%s166 + $0x70] sm:$0xf]
      %v203 = vld [vmem:[%s166 + $0x74] sm:$0xf]
      %v204 = vld [vmem:[%s166 + $0x78] sm:$0xf]
      %v205 = vld [vmem:[%s166 + $0x7c] sm:$0xf]
      %v206 = vunpack.c.l.bf16 %v174
      %v207 = vunpack.c.l.bf16 %v175
      %v208 = vunpack.c.l.bf16 %v176
      %v209 = vunpack.c.l.bf16 %v177
      %v210 = vunpack.c.l.bf16 %v178
      %v211 = vunpack.c.l.bf16 %v179
      %v212 = vunpack.c.l.bf16 %v180
      %v213 = vunpack.c.l.bf16 %v181
      %v214 = vunpack.c.l.bf16 %v182
      %v215 = vunpack.c.l.bf16 %v183
      %v216 = vunpack.c.l.bf16 %v184
      %v217 = vunpack.c.l.bf16 %v185
      %v218 = vunpack.c.l.bf16 %v186
      %v219 = vunpack.c.l.bf16 %v187
      %v220 = vunpack.c.l.bf16 %v188
      %v221 = vunpack.c.l.bf16 %v189
      %v222 = vunpack.c.l.bf16 %v190
      %v223 = vunpack.c.l.bf16 %v191
      %v224 = vunpack.c.l.bf16 %v192
      %v225 = vunpack.c.l.bf16 %v193
      %v226 = vunpack.c.l.bf16 %v194
      %v227 = vunpack.c.l.bf16 %v195
      %v228 = vunpack.c.l.bf16 %v196
      %v229 = vunpack.c.l.bf16 %v197
      %v230 = vunpack.c.l.bf16 %v198
      %v231 = vunpack.c.l.bf16 %v199
      %v232 = vunpack.c.l.bf16 %v200
      %v233 = vunpack.c.l.bf16 %v201
      %v234 = vunpack.c.l.bf16 %v202
      %v235 = vunpack.c.l.bf16 %v203
      %v236 = vunpack.c.l.bf16 %v204
      %v237 = vunpack.c.l.bf16 %v205
      %v238 = vld [vmem:[%s1] sm:$0x1]
      %v240 = vlaneseq
      %v241 = vshrl.u32 %v240, 7
      %v242 = vsub.s32 0, %v241
      %v243 = vrot.slane %v238, %v242
      %v245 = vmul.f32 %v206, %v243
      %v246 = vmul.f32 %v207, %v243
      %v247 = vmul.f32 %v208, %v243
      %v248 = vmul.f32 %v209, %v243
      %v249 = vmul.f32 %v210, %v243
      %v250 = vmul.f32 %v211, %v243
      %v251 = vmul.f32 %v212, %v243
      %v252 = vmul.f32 %v213, %v243
      %v253 = vmul.f32 %v214, %v243
      %v254 = vmul.f32 %v215, %v243
      %v255 = vmul.f32 %v216, %v243
      %v256 = vmul.f32 %v217, %v243
      %v257 = vmul.f32 %v218, %v243
      %v258 = vmul.f32 %v219, %v243
      %v259 = vmul.f32 %v220, %v243
      %v260 = vmul.f32 %v221, %v243
      %v261 = vmul.f32 %v222, %v243
      %v262 = vmul.f32 %v223, %v243
      %v263 = vmul.f32 %v224, %v243
      %v264 = vmul.f32 %v225, %v243
      %v265 = vmul.f32 %v226, %v243
      %v266 = vmul.f32 %v227, %v243
      %v267 = vmul.f32 %v228, %v243
      %v268 = vmul.f32 %v229, %v243
      %v269 = vmul.f32 %v230, %v243
      %v270 = vmul.f32 %v231, %v243
      %v271 = vmul.f32 %v232, %v243
      %v272 = vmul.f32 %v233, %v243
      %v273 = vmul.f32 %v234, %v243
      %v274 = vmul.f32 %v235, %v243
      %v275 = vmul.f32 %v236, %v243
      %v276 = vmul.f32 %v237, %v243
      %v277 = vld [vmem:[%s2] sm:$0x1]
      %v279 = vlaneseq
      %v280 = vshrl.u32 %v279, 7
      %v281 = vsub.s32 0, %v280
      %v282 = vrot.slane %v277, %v281
      %v284 = vadd.f32 %v245, %v282
      %v285 = vadd.f32 %v246, %v282
      %v286 = vadd.f32 %v247, %v282
      %v287 = vadd.f32 %v248, %v282
      %v288 = vadd.f32 %v249, %v282
      %v289 = vadd.f32 %v250, %v282
      %v290 = vadd.f32 %v251, %v282
      %v291 = vadd.f32 %v252, %v282
      %v292 = vadd.f32 %v253, %v282
      %v293 = vadd.f32 %v254, %v282
      %v294 = vadd.f32 %v255, %v282
      %v295 = vadd.f32 %v256, %v282
      %v296 = vadd.f32 %v257, %v282
      %v297 = vadd.f32 %v258, %v282
      %v298 = vadd.f32 %v259, %v282
      %v299 = vadd.f32 %v260, %v282
      %v300 = vadd.f32 %v261, %v282
      %v301 = vadd.f32 %v262, %v282
      %v302 = vadd.f32 %v263, %v282
      %v303 = vadd.f32 %v264, %v282
      %v304 = vadd.f32 %v265, %v282
      %v305 = vadd.f32 %v266, %v282
      %v306 = vadd.f32 %v267, %v282
      %v307 = vadd.f32 %v268, %v282
      %v308 = vadd.f32 %v269, %v282
      %v309 = vadd.f32 %v270, %v282
      %v310 = vadd.f32 %v271, %v282
      %v311 = vadd.f32 %v272, %v282
      %v312 = vadd.f32 %v273, %v282
      %v313 = vadd.f32 %v274, %v282
      %v314 = vadd.f32 %v275, %v282
      %v315 = vadd.f32 %v276, %v282
      %v316 = vmax.f32 %v284, 0.0
      %v317 = vmax.f32 %v285, 0.0
      %v318 = vmax.f32 %v286, 0.0
      %v319 = vmax.f32 %v287, 0.0
      %v320 = vmax.f32 %v288, 0.0
      %v321 = vmax.f32 %v289, 0.0
      %v322 = vmax.f32 %v290, 0.0
      %v323 = vmax.f32 %v291, 0.0
      %v324 = vmax.f32 %v292, 0.0
      %v325 = vmax.f32 %v293, 0.0
      %v326 = vmax.f32 %v294, 0.0
      %v327 = vmax.f32 %v295, 0.0
      %v328 = vmax.f32 %v296, 0.0
      %v329 = vmax.f32 %v297, 0.0
      %v330 = vmax.f32 %v298, 0.0
      %v331 = vmax.f32 %v299, 0.0
      %v332 = vmax.f32 %v300, 0.0
      %v333 = vmax.f32 %v301, 0.0
      %v334 = vmax.f32 %v302, 0.0
      %v335 = vmax.f32 %v303, 0.0
      %v336 = vmax.f32 %v304, 0.0
      %v337 = vmax.f32 %v305, 0.0
      %v338 = vmax.f32 %v306, 0.0
      %v339 = vmax.f32 %v307, 0.0
      %v340 = vmax.f32 %v308, 0.0
      %v341 = vmax.f32 %v309, 0.0
      %v342 = vmax.f32 %v310, 0.0
      %v343 = vmax.f32 %v311, 0.0
      %v344 = vmax.f32 %v312, 0.0
      %v345 = vmax.f32 %v313, 0.0
      %v346 = vmax.f32 %v314, 0.0
      %v347 = vmax.f32 %v315, 0.0
      %v348 = vpack.c.bf16 %v317, %v316
      %v349 = vpack.c.bf16 %v319, %v318
      %v350 = vpack.c.bf16 %v321, %v320
      %v351 = vpack.c.bf16 %v323, %v322
      %v352 = vpack.c.bf16 %v325, %v324
      %v353 = vpack.c.bf16 %v327, %v326
      %v354 = vpack.c.bf16 %v329, %v328
      %v355 = vpack.c.bf16 %v331, %v330
      %v356 = vpack.c.bf16 %v333, %v332
      %v357 = vpack.c.bf16 %v335, %v334
      %v358 = vpack.c.bf16 %v337, %v336
      %v359 = vpack.c.bf16 %v339, %v338
      %v360 = vpack.c.bf16 %v341, %v340
      %v361 = vpack.c.bf16 %v343, %v342
      %v362 = vpack.c.bf16 %v345, %v344
      %v363 = vpack.c.bf16 %v347, %v346
      %v380 = vunpack.c.l.b16 %v348
      %v381 = vunpack.c.h.b16 %v348
      %v382 = vunpack.c.l.b16 %v349
      %v383 = vunpack.c.h.b16 %v349
      %v384 = vunpack.c.l.b16 %v350
      %v385 = vunpack.c.h.b16 %v350
      %v386 = vunpack.c.l.b16 %v351
      %v387 = vunpack.c.h.b16 %v351
      %v388 = vunpack.c.l.b16 %v352
      %v389 = vunpack.c.h.b16 %v352
      %v390 = vunpack.c.l.b16 %v353
      %v391 = vunpack.c.h.b16 %v353
      %v392 = vunpack.c.l.b16 %v354
      %v393 = vunpack.c.h.b16 %v354
      %v394 = vunpack.c.l.b16 %v355
      %v395 = vunpack.c.h.b16 %v355
      %v396 = vunpack.c.l.b16 %v356
      %v397 = vunpack.c.h.b16 %v356
      %v398 = vunpack.c.l.b16 %v357
      %v399 = vunpack.c.h.b16 %v357
      %v400 = vunpack.c.l.b16 %v358
      %v401 = vunpack.c.h.b16 %v358
      %v402 = vunpack.c.l.b16 %v359
      %v403 = vunpack.c.h.b16 %v359
      %v404 = vunpack.c.l.b16 %v360
      %v405 = vunpack.c.h.b16 %v360
      %v406 = vunpack.c.l.b16 %v361
      %v407 = vunpack.c.h.b16 %v361
      %v408 = vunpack.c.l.b16 %v362
      %v409 = vunpack.c.h.b16 %v362
      %v410 = vunpack.c.l.b16 %v363
      %v411 = vunpack.c.h.b16 %v363
      %v412 = vpack.c.b16 %v380, %v380
      %v413 = vpack.c.b16 %v381, %v381
      %v414 = vpack.c.b16 %v382, %v382
      %v415 = vpack.c.b16 %v383, %v383
      %v416 = vpack.c.b16 %v384, %v384
      %v417 = vpack.c.b16 %v385, %v385
      %v418 = vpack.c.b16 %v386, %v386
      %v419 = vpack.c.b16 %v387, %v387
      %v420 = vpack.c.b16 %v388, %v388
      %v421 = vpack.c.b16 %v389, %v389
      %v422 = vpack.c.b16 %v390, %v390
      %v423 = vpack.c.b16 %v391, %v391
      %v424 = vpack.c.b16 %v392, %v392
      %v425 = vpack.c.b16 %v393, %v393
      %v426 = vpack.c.b16 %v394, %v394
      %v427 = vpack.c.b16 %v395, %v395
      %v428 = vpack.c.b16 %v396, %v396
      %v429 = vpack.c.b16 %v397, %v397
      %v430 = vpack.c.b16 %v398, %v398
      %v431 = vpack.c.b16 %v399, %v399
      %v432 = vpack.c.b16 %v400, %v400
      %v433 = vpack.c.b16 %v401, %v401
      %v434 = vpack.c.b16 %v402, %v402
      %v435 = vpack.c.b16 %v403, %v403
      %v436 = vpack.c.b16 %v404, %v404
      %v437 = vpack.c.b16 %v405, %v405
      %v438 = vpack.c.b16 %v406, %v406
      %v439 = vpack.c.b16 %v407, %v407
      %v440 = vpack.c.b16 %v408, %v408
      %v441 = vpack.c.b16 %v409, %v409
      %v442 = vpack.c.b16 %v410, %v410
      %v443 = vpack.c.b16 %v411, %v411
      %476 = vst [vmem:[%s172] sm:$0xf] %v412
      %477 = vst [vmem:[%s172 + $0x4] sm:$0xf] %v413
      %478 = vst [vmem:[%s172 + $0x8] sm:$0xf] %v414
      %479 = vst [vmem:[%s172 + $0xc] sm:$0xf] %v415
      %480 = vst [vmem:[%s172 + $0x10] sm:$0xf] %v416
      %481 = vst [vmem:[%s172 + $0x14] sm:$0xf] %v417
      %482 = vst [vmem:[%s172 + $0x18] sm:$0xf] %v418
      %483 = vst [vmem:[%s172 + $0x1c] sm:$0xf] %v419
      %484 = vst [vmem:[%s172 + $0x20] sm:$0xf] %v420
      %485 = vst [vmem:[%s172 + $0x24] sm:$0xf] %v421
      %486 = vst [vmem:[%s172 + $0x28] sm:$0xf] %v422
      %487 = vst [vmem:[%s172 + $0x2c] sm:$0xf] %v423
      %488 = vst [vmem:[%s172 + $0x30] sm:$0xf] %v424
      %489 = vst [vmem:[%s172 + $0x34] sm:$0xf] %v425
      %490 = vst [vmem:[%s172 + $0x38] sm:$0xf] %v426
      %491 = vst [vmem:[%s172 + $0x3c] sm:$0xf] %v427
      %492 = vst [vmem:[%s172 + $0x40] sm:$0xf] %v428
      %493 = vst [vmem:[%s172 + $0x44] sm:$0xf] %v429
      %494 = vst [vmem:[%s172 + $0x48] sm:$0xf] %v430
      %495 = vst [vmem:[%s172 + $0x4c] sm:$0xf] %v431
      %496 = vst [vmem:[%s172 + $0x50] sm:$0xf] %v432
      %497 = vst [vmem:[%s172 + $0x54] sm:$0xf] %v433
      %498 = vst [vmem:[%s172 + $0x58] sm:$0xf] %v434
      %499 = vst [vmem:[%s172 + $0x5c] sm:$0xf] %v435
      %500 = vst [vmem:[%s172 + $0x60] sm:$0xf] %v436
      %501 = vst [vmem:[%s172 + $0x64] sm:$0xf] %v437
      %502 = vst [vmem:[%s172 + $0x68] sm:$0xf] %v438
      %503 = vst [vmem:[%s172 + $0x6c] sm:$0xf] %v439
      %504 = vst [vmem:[%s172 + $0x70] sm:$0xf] %v440
      %505 = vst [vmem:[%s172 + $0x74] sm:$0xf] %v441
      %506 = vst [vmem:[%s172 + $0x78] sm:$0xf] %v442
      %507 = vst [vmem:[%s172 + $0x7c] sm:$0xf] %v443
      %s508 = smul.u32 32, %s14
      %p509 = scmp.lt.s32.totalorder %s508, 63
      %s510 = scalar_select %p509, %s508, 63
      %s511 = smul.addr %s510, 4
      %s512 = scalar_lea.vmem %s3, %s511
      // Predicated region
      $region33: #{basic_block_forward.5} parent=31 // pred_check
        %p513 = pneg %p100
      $region34: #{basic_block_forward.5} parent=31 // pred_check_branch
        %515 = sbr.rel (%p513) target = $region36
      $region35: #{basic_block_forward.5} parent=31 // pred_region
        %s516 = smul.u32 32, %s14
      $region36: #{basic_block_forward.5} parent=31 // pred_fallthru
        _
    $region32: #{basic_block_forward.5} parent=5 // pred_fallthru
      _
    %p517 = scmp.le.s32.totalorder 2, %s9
    // Predicated region
    $region37: #{basic_block_forward.5} parent=5 // pred_check
      %p518 = pneg %p517
    $region38: #{basic_block_forward.5} parent=5 // pred_check_branch
      %520 = sbr.rel (%p518) target = $region40
    $region39: #{basic_block_forward.5} parent=5 // pred_region
      %s521 = ssub.s32 %s9, 2
      // Predicated region
      $region41: #{basic_block_forward.5} parent=39 // pred_check
        %p522 = pneg %p106
      $region42: #{basic_block_forward.5} parent=39 // pred_check_branch
        %524 = sbr.rel (%p522) target = $region44
      $region43: #{basic_block_forward.5} parent=39 // pred_region
        %s525 = smul.u32 32, %s15
        %p526 = scmp.lt.s32.totalorder %s525, 63
        %s527 = scalar_select %p526, %s525, 63
        %s528 = smul.addr %s527, 4
        %s529 = scalar_lea.vmem %s3, %s528
      $region44: #{basic_block_forward.5} parent=39 // pred_fallthru
        _
    $region40: #{basic_block_forward.5} parent=5 // pred_fallthru
      _
  $region6: #{basic_block_forward.5} parent=0 // loop_footer
    %s13 = sadd.s32 1, %s9
  $region7: #{basic_block_forward.5} parent=0 // loop_footer_branch
    %8 = sbr.rel target = $region3
  $region8: #{basic_block_forward.5} parent=0 // loop_exit
    _

// kernel: basic_block_forward.7
$region0: #{basic_block_forward.7}
  #allocation0 [shape = 'u32[]', space=smem, size = 0x4, offset = 0x4, fixed_abs, tag = 'smem constant byte address 0x4 - core index']
  #allocation1 [shape = 'u32[144,128]{1,0:T(1,128)}', space=vmem, size = 0x12000, scoped, tag = 'internal scratch']
  %s0 = inlined_call_operand.vmem [shape: bf16[512,128], index: 0, kind: input, shape index: {}]
  %s1 = inlined_call_operand.vmem [shape: f32[1,128], index: 1, kind: input, shape index: {}]
  %s2 = inlined_call_operand.vmem [shape: f32[1,128], index: 2, kind: input, shape index: {}]
  %s3 = inlined_call_operand.vmem [shape: bf16[512,128], index: 3, kind: input, shape index: {}]
  %s4 = inlined_call_operand.vmem [shape: f32[512,128], index: 4, kind: output, shape index: {}]
  %s5 = sld [smem:[#allocation0]]
  $region49: #{basic_block_forward.7} parent=0
    _
  %s7 = ssub.s32 1, %s5
  %s8 = scalar_select 0, %s7, %s5
  loop: start=0, step=1, limit=4
  $region2: #{basic_block_forward.7} parent=0 // loop_pre_header
    _
  $region3: #{basic_block_forward.7} parent=0 // loop_header
    %s10 = sphi 0, %s14
    %p11 = scmp.ge.s32.totalorder %s10, 4
    %s20 = sphi 0, %s22
    %s23 = sphi 0, %s20
    %s24 = sphi 0, %s23
    %s40 = sphi 0, %s24
    %s44 = sphi 0, %s44
    %s46 = sphi 0, %s44
    %s47 = sphi 0, %s46
    %s61 = sphi 0, %s47
    %s65 = sphi 0, %s65
    %s67 = sphi 0, %s65
    %s68 = sphi 0, %s67
    %s82 = sphi 0, %s68
    %s88 = sphi 0, %s90
    %s91 = sphi 0, %s88
    %s92 = sphi 0, %s91
    %s108 = sphi 0, %s92
    %s114 = sphi 0, %s116
    %s117 = sphi 0, %s114
    %s118 = sphi 0, %s117
    %s134 = sphi 0, %s118
  $region4: #{basic_block_forward.7} parent=0 // loop_header_branch
    %13 = sbr.rel (%p11) target = $region8
  $region5: #{basic_block_forward.7} parent=0 // loop_body
    %s15 = ssub.s32 %s10, 1
    %s16 = ssub.s32 %s10, 2
    %s17 = sadd.s32 %s10, 1
    %s18 = ssub.s32 %s10, %s17
    %p19 = scmp.eq.s32.totalorder %s18, 0
    %s21 = sadd.s32 %s20, 1
    %s22 = scalar_select %p19, %s20, %s21
    %p25 = pneg %p19
    %p26 = scmp.eq.s32.totalorder %s10, 1
    %p27 = por %p25, %p26
    %p28 = scmp.ne.s32.totalorder %s20, %s23
    %p29 = scmp.eq.s32.totalorder %s10, 0
    %p30 = por %p28, %p29
    %p31 = scmp.ne.s32.totalorder %s20, %s23
    %p32 = scmp.eq.s32.totalorder %s15, 1
    %p33 = por %p31, %p32
    %p34 = scmp.ne.s32.totalorder %s23, %s24
    %p35 = scmp.eq.s32.totalorder %s15, 0
    %p36 = por %p34, %p35
    %p37 = scmp.ne.s32.totalorder %s23, %s24
    %p38 = scmp.eq.s32.totalorder %s16, 1
    %p39 = por %p37, %p38
    %p41 = scmp.ne.s32.totalorder %s24, %s40
    %p42 = scmp.eq.s32.totalorder %s16, 0
    %p43 = por %p41, %p42
    %s45 = sadd.s32 %s44, 1
    %p48 = scmp.eq.s32.totalorder %s10, 1
    %p49 = scmp.ne.s32.totalorder %s44, %s46
    %p50 = scmp.eq.s32.totalorder %s10, 0
    %p51 = por %p49, %p50
    %p52 = scmp.ne.s32.totalorder %s44, %s46
    %p53 = scmp.eq.s32.totalorder %s15, 1
    %p54 = por %p52, %p53
    %p55 = scmp.ne.s32.totalorder %s46, %s47
    %p56 = scmp.eq.s32.totalorder %s15, 0
    %p57 = por %p55, %p56
    %p58 = scmp.ne.s32.totalorder %s46, %s47
    %p59 = scmp.eq.s32.totalorder %s16, 1
    %p60 = por %p58, %p59
    %p62 = scmp.ne.s32.totalorder %s47, %s61
    %p63 = scmp.eq.s32.totalorder %s16, 0
    %p64 = por %p62, %p63
    %s66 = sadd.s32 %s65, 1
    %p69 = scmp.eq.s32.totalorder %s10, 1
    %p70 = scmp.ne.s32.totalorder %s65, %s67
    %p71 = scmp.eq.s32.totalorder %s10, 0
    %p72 = por %p70, %p71
    %p73 = scmp.ne.s32.totalorder %s65, %s67
    %p74 = scmp.eq.s32.totalorder %s15, 1
    %p75 = por %p73, %p74
    %p76 = scmp.ne.s32.totalorder %s67, %s68
    %p77 = scmp.eq.s32.totalorder %s15, 0
    %p78 = por %p76, %p77
    %p79 = scmp.ne.s32.totalorder %s67, %s68
    %p80 = scmp.eq.s32.totalorder %s16, 1
    %p81 = por %p79, %p80
    %p83 = scmp.ne.s32.totalorder %s68, %s82
    %p84 = scmp.eq.s32.totalorder %s16, 0
    %p85 = por %p83, %p84
    %s86 = ssub.s32 %s10, %s17
    %p87 = scmp.eq.s32.totalorder %s86, 0
    %s89 = sadd.s32 %s88, 1
    %s90 = scalar_select %p87, %s88, %s89
    %p93 = pneg %p87
    %p94 = scmp.eq.s32.totalorder %s10, 1
    %p95 = por %p93, %p94
    %p96 = scmp.ne.s32.totalorder %s88, %s91
    %p97 = scmp.eq.s32.totalorder %s10, 0
    %p98 = por %p96, %p97
    %p99 = scmp.ne.s32.totalorder %s88, %s91
    %p100 = scmp.eq.s32.totalorder %s15, 1
    %p101 = por %p99, %p100
    %p102 = scmp.ne.s32.totalorder %s91, %s92
    %p103 = scmp.eq.s32.totalorder %s15, 0
    %p104 = por %p102, %p103
    %p105 = scmp.ne.s32.totalorder %s91, %s92
    %p106 = scmp.eq.s32.totalorder %s16, 1
    %p107 = por %p105, %p106
    %p109 = scmp.ne.s32.totalorder %s92, %s108
    %p110 = scmp.eq.s32.totalorder %s16, 0
    %p111 = por %p109, %p110
    %s112 = ssub.s32 %s10, %s17
    %p113 = scmp.eq.s32.totalorder %s112, 0
    %s115 = sadd.s32 %s114, 1
    %s116 = scalar_select %p113, %s114, %s115
    %p119 = pneg %p113
    %p120 = scmp.eq.s32.totalorder %s10, 1
    %p121 = por %p119, %p120
    %p122 = scmp.ne.s32.totalorder %s114, %s117
    %p123 = scmp.eq.s32.totalorder %s10, 0
    %p124 = por %p122, %p123
    %p125 = scmp.ne.s32.totalorder %s114, %s117
    %p126 = scmp.eq.s32.totalorder %s15, 1
    %p127 = por %p125, %p126
    %p128 = scmp.ne.s32.totalorder %s117, %s118
    %p129 = scmp.eq.s32.totalorder %s15, 0
    %p130 = por %p128, %p129
    %p131 = scmp.ne.s32.totalorder %s117, %s118
    %p132 = scmp.eq.s32.totalorder %s16, 1
    %p133 = por %p131, %p132
    %p135 = scmp.ne.s32.totalorder %s118, %s134
    %p136 = scmp.eq.s32.totalorder %s16, 0
    %p137 = por %p135, %p136
    %p138 = scmp.le.s32.totalorder 1, %s10
    %p139 = scmp.lt.s32.totalorder %s10, 3
    %p140 = pnand %p138, %p139
    %p141 = pneg %p140
    // Predicated region
    $region9: #{basic_block_forward.7} parent=5 // pred_check
      _
    $region10: #{basic_block_forward.7} parent=5 // pred_check_branch
      %143 = sbr.rel (%p140) target = $region12
    $region11: #{basic_block_forward.7} parent=5 // pred_region
      %s144 = ssub.s32 %s10, 1
      // Predicated region
      $region13: #{basic_block_forward.7} parent=11 // pred_check
        %p145 = pneg %p57
      $region14: #{basic_block_forward.7} parent=11 // pred_check_branch
        %147 = sbr.rel (%p145) target = $region16
      $region15: #{basic_block_forward.7} parent=11 // pred_region
        _
      $region16: #{basic_block_forward.7} parent=11 // pred_fallthru
        _
      // Predicated region
      $region17: #{basic_block_forward.7} parent=11 // pred_check
        %p148 = pneg %p78
      $region18: #{basic_block_forward.7} parent=11 // pred_check_branch
        %150 = sbr.rel (%p148) target = $region20
      $region19: #{basic_block_forward.7} parent=11 // pred_region
        _
      $region20: #{basic_block_forward.7} parent=11 // pred_fallthru
        _
    $region12: #{basic_block_forward.7} parent=5 // pred_fallthru
      _
    %p151 = scmp.lt.s32.totalorder %s10, 2
    // Predicated region
    $region21: #{basic_block_forward.7} parent=5 // pred_check
      %p152 = pneg %p151
    $region22: #{basic_block_forward.7} parent=5 // pred_check_branch
      %154 = sbr.rel (%p152) target = $region24
    $region23: #{basic_block_forward.7} parent=5 // pred_region
      // Predicated region
      $region25: #{basic_block_forward.7} parent=23 // pred_check
        %p155 = pneg %p30
      $region26: #{basic_block_forward.7} parent=23 // pred_check_branch
        %157 = sbr.rel (%p155) target = $region28
      $region27: #{basic_block_forward.7} parent=23 // pred_region
        %s158 = smul.u32 32, %s10
        %p159 = scmp.lt.s32.totalorder %s158, 63
        %s160 = scalar_select %p159, %s158, 63
        %s161 = smul.addr %s160, 4
        %s162 = scalar_lea.vmem %s0, %s161
        %s163 = smul.u32 32, %s10
      $region28: #{basic_block_forward.7} parent=23 // pred_fallthru
        _
      // Predicated region
      $region29: #{basic_block_forward.7} parent=23 // pred_check
        %p164 = pneg %p98
      $region30: #{basic_block_forward.7} parent=23 // pred_check_branch
        %166 = sbr.rel (%p164) target = $region32
      $region31: #{basic_block_forward.7} parent=23 // pred_region
        %s167 = smul.u32 32, %s10
        %p168 = scmp.lt.s32.totalorder %s167, 63
        %s169 = scalar_select %p168, %s167, 63
        %s170 = smul.addr %s169, 4
        %s171 = scalar_lea.vmem %s3, %s170
        %s172 = smul.u32 32, %s10
      $region32: #{basic_block_forward.7} parent=23 // pred_fallthru
        _
    $region24: #{basic_block_forward.7} parent=5 // pred_fallthru
      _
    %p173 = scmp.le.s32.totalorder 1, %s10
    %p174 = scmp.lt.s32.totalorder %s10, 3
    %p175 = pnand %p173, %p174
    %p176 = pneg %p175
    // Predicated region
    $region33: #{basic_block_forward.7} parent=5 // pred_check
      _
    $region34: #{basic_block_forward.7} parent=5 // pred_check_branch
      %178 = sbr.rel (%p175) target = $region36
    $region35: #{basic_block_forward.7} parent=5 // pred_region
      %s179 = ssub.s32 %s10, 1
      %s180 = smul.u32 32, %s15
      %p181 = scmp.lt.s32.totalorder %s180, 63
      %s182 = scalar_select %p181, %s180, 63
      %s183 = smul.addr %s182, 4
      %s184 = scalar_lea.vmem %s0, %s183
      %p185 = pneg %p36
      %p186 = pneg %p33
      %p187 = pneg %p57
      %p188 = pneg %p54
      %p189 = pneg %p78
      %p190 = pneg %p75
      %s191 = smul.u32 32, %s15
      %p192 = scmp.lt.s32.totalorder %s191, 63
      %s193 = scalar_select %p192, %s191, 63
      %s194 = smul.addr %s193, 4
      %s195 = scalar_lea.vmem %s3, %s194
      %p196 = pneg %p104
      %p197 = pneg %p101
      %p198 = pneg %p130
      %p199 = pneg %p127
      %s200 = smul.u32 32, %s15
      %p201 = scmp.lt.s32.totalorder %s200, 63
      %s202 = scalar_select %p201, %s200, 63
      %s203 = smul.addr %s202, 8
      %s204 = scalar_lea.vmem %s4, %s203
      %s205 = smul.u32 32, %s15
      %p206 = scmp.lt.s32.totalorder %s205, 63
      %s207 = scalar_select %p206, %s205, 63
      %s208 = smul.addr %s207, 4
      %s209 = scalar_lea.vmem %s0, %s208
      %s210 = smul.u32 32, %s15
      %s211 = smul.u32 32, %s15
      %p212 = scmp.lt.s32.totalorder %s211, 63
      %s213 = scalar_select %p212, %s211, 63
      %s214 = smul.addr %s213, 4
      %s215 = scalar_lea.vmem %s3, %s214
      %s216 = smul.u32 32, %s15
      %s217 = smul.u32 32, %s15
      %p218 = scmp.lt.s32.totalorder %s217, 63
      %s219 = scalar_select %p218, %s217, 63
      %s220 = smul.addr %s219, 8
      %s221 = scalar_lea.vmem %s4, %s220
      %s222 = smul.u32 32, %s15
      %v223 = vld [vmem:[%s209] sm:$0xf]
      %v224 = vld [vmem:[%s209 + $0x4] sm:$0xf]
      %v225 = vld [vmem:[%s209 + $0x8] sm:$0xf]
      %v226 = vld [vmem:[%s209 + $0xc] sm:$0xf]
      %v227 = vld [vmem:[%s209 + $0x10] sm:$0xf]
      %v228 = vld [vmem:[%s209 + $0x14] sm:$0xf]
      %v229 = vld [vmem:[%s209 + $0x18] sm:$0xf]
      %v230 = vld [vmem:[%s209 + $0x1c] sm:$0xf]
      %v231 = vld [vmem:[%s209 + $0x20] sm:$0xf]
      %v232 = vld [vmem:[%s209 + $0x24] sm:$0xf]
      %v233 = vld [vmem:[%s209 + $0x28] sm:$0xf]
      %v234 = vld [vmem:[%s209 + $0x2c] sm:$0xf]
      %v235 = vld [vmem:[%s209 + $0x30] sm:$0xf]
      %v236 = vld [vmem:[%s209 + $0x34] sm:$0xf]
      %v237 = vld [vmem:[%s209 + $0x38] sm:$0xf]
      %v238 = vld [vmem:[%s209 + $0x3c] sm:$0xf]
      %v239 = vld [vmem:[%s209 + $0x40] sm:$0xf]
      %v240 = vld [vmem:[%s209 + $0x44] sm:$0xf]
      %v241 = vld [vmem:[%s209 + $0x48] sm:$0xf]
      %v242 = vld [vmem:[%s209 + $0x4c] sm:$0xf]
      %v243 = vld [vmem:[%s209 + $0x50] sm:$0xf]
      %v244 = vld [vmem:[%s209 + $0x54] sm:$0xf]
      %v245 = vld [vmem:[%s209 + $0x58] sm:$0xf]
      %v246 = vld [vmem:[%s209 + $0x5c] sm:$0xf]
      %v247 = vld [vmem:[%s209 + $0x60] sm:$0xf]
      %v248 = vld [vmem:[%s209 + $0x64] sm:$0xf]
      %v249 = vld [vmem:[%s209 + $0x68] sm:$0xf]
      %v250 = vld [vmem:[%s209 + $0x6c] sm:$0xf]
      %v251 = vld [vmem:[%s209 + $0x70] sm:$0xf]
      %v252 = vld [vmem:[%s209 + $0x74] sm:$0xf]
      %v253 = vld [vmem:[%s209 + $0x78] sm:$0xf]
      %v254 = vld [vmem:[%s209 + $0x7c] sm:$0xf]
      %v255 = vunpack.c.l.bf16 %v223
      %v256 = vunpack.c.l.bf16 %v224
      %v257 = vunpack.c.l.bf16 %v225
      %v258 = vunpack.c.l.bf16 %v226
      %v259 = vunpack.c.l.bf16 %v227
      %v260 = vunpack.c.l.bf16 %v228
      %v261 = vunpack.c.l.bf16 %v229
      %v262 = vunpack.c.l.bf16 %v230
      %v263 = vunpack.c.l.bf16 %v231
      %v264 = vunpack.c.l.bf16 %v232
      %v265 = vunpack.c.l.bf16 %v233
      %v266 = vunpack.c.l.bf16 %v234
      %v267 = vunpack.c.l.bf16 %v235
      %v268 = vunpack.c.l.bf16 %v236
      %v269 = vunpack.c.l.bf16 %v237
      %v270 = vunpack.c.l.bf16 %v238
      %v271 = vunpack.c.l.bf16 %v239
      %v272 = vunpack.c.l.bf16 %v240
      %v273 = vunpack.c.l.bf16 %v241
      %v274 = vunpack.c.l.bf16 %v242
      %v275 = vunpack.c.l.bf16 %v243
      %v276 = vunpack.c.l.bf16 %v244
      %v277 = vunpack.c.l.bf16 %v245
      %v278 = vunpack.c.l.bf16 %v246
      %v279 = vunpack.c.l.bf16 %v247
      %v280 = vunpack.c.l.bf16 %v248
      %v281 = vunpack.c.l.bf16 %v249
      %v282 = vunpack.c.l.bf16 %v250
      %v283 = vunpack.c.l.bf16 %v251
      %v284 = vunpack.c.l.bf16 %v252
      %v285 = vunpack.c.l.bf16 %v253
      %v286 = vunpack.c.l.bf16 %v254
      %v287 = vld [vmem:[%s1] sm:$0x1]
      %v289 = vlaneseq
      %v290 = vshrl.u32 %v289, 7
      %v291 = vsub.s32 0, %v290
      %v292 = vrot.slane %v287, %v291
      %v294 = vmul.f32 %v255, %v292
      %v295 = vmul.f32 %v256, %v292
      %v296 = vmul.f32 %v257, %v292
      %v297 = vmul.f32 %v258, %v292
      %v298 = vmul.f32 %v259, %v292
      %v299 = vmul.f32 %v260, %v292
      %v300 = vmul.f32 %v261, %v292
      %v301 = vmul.f32 %v262, %v292
      %v302 = vmul.f32 %v263, %v292
      %v303 = vmul.f32 %v264, %v292
      %v304 = vmul.f32 %v265, %v292
      %v305 = vmul.f32 %v266, %v292
      %v306 = vmul.f32 %v267, %v292
      %v307 = vmul.f32 %v268, %v292
      %v308 = vmul.f32 %v269, %v292
      %v309 = vmul.f32 %v270, %v292
      %v310 = vmul.f32 %v271, %v292
      %v311 = vmul.f32 %v272, %v292
      %v312 = vmul.f32 %v273, %v292
      %v313 = vmul.f32 %v274, %v292
      %v314 = vmul.f32 %v275, %v292
      %v315 = vmul.f32 %v276, %v292
      %v316 = vmul.f32 %v277, %v292
      %v317 = vmul.f32 %v278, %v292
      %v318 = vmul.f32 %v279, %v292
      %v319 = vmul.f32 %v280, %v292
      %v320 = vmul.f32 %v281, %v292
      %v321 = vmul.f32 %v282, %v292
      %v322 = vmul.f32 %v283, %v292
      %v323 = vmul.f32 %v284, %v292
      %v324 = vmul.f32 %v285, %v292
      %v325 = vmul.f32 %v286, %v292
      %v326 = vld [vmem:[%s2] sm:$0x1]
      %v328 = vlaneseq
      %v329 = vshrl.u32 %v328, 7
      %v330 = vsub.s32 0, %v329
      %v331 = vrot.slane %v326, %v330
      %v333 = vadd.f32 %v294, %v331
      %v334 = vadd.f32 %v295, %v331
      %v335 = vadd.f32 %v296, %v331
      %v336 = vadd.f32 %v297, %v331
      %v337 = vadd.f32 %v298, %v331
      %v338 = vadd.f32 %v299, %v331
      %v339 = vadd.f32 %v300, %v331
      %v340 = vadd.f32 %v301, %v331
      %v341 = vadd.f32 %v302, %v331
      %v342 = vadd.f32 %v303, %v331
      %v343 = vadd.f32 %v304, %v331
      %v344 = vadd.f32 %v305, %v331
      %v345 = vadd.f32 %v306, %v331
      %v346 = vadd.f32 %v307, %v331
      %v347 = vadd.f32 %v308, %v331
      %v348 = vadd.f32 %v309, %v331
      %v349 = vadd.f32 %v310, %v331
      %v350 = vadd.f32 %v311, %v331
      %v351 = vadd.f32 %v312, %v331
      %v352 = vadd.f32 %v313, %v331
      %v353 = vadd.f32 %v314, %v331
      %v354 = vadd.f32 %v315, %v331
      %v355 = vadd.f32 %v316, %v331
      %v356 = vadd.f32 %v317, %v331
      %v357 = vadd.f32 %v318, %v331
      %v358 = vadd.f32 %v319, %v331
      %v359 = vadd.f32 %v320, %v331
      %v360 = vadd.f32 %v321, %v331
      %v361 = vadd.f32 %v322, %v331
      %v362 = vadd.f32 %v323, %v331
      %v363 = vadd.f32 %v324, %v331
      %v364 = vadd.f32 %v325, %v331
      %v365 = vld [vmem:[%s215] sm:$0xf]
      %v366 = vld [vmem:[%s215 + $0x4] sm:$0xf]
      %v367 = vld [vmem:[%s215 + $0x8] sm:$0xf]
      %v368 = vld [vmem:[%s215 + $0xc] sm:$0xf]
      %v369 = vld [vmem:[%s215 + $0x10] sm:$0xf]
      %v370 = vld [vmem:[%s215 + $0x14] sm:$0xf]
      %v371 = vld [vmem:[%s215 + $0x18] sm:$0xf]
      %v372 = vld [vmem:[%s215 + $0x1c] sm:$0xf]
      %v373 = vld [vmem:[%s215 + $0x20] sm:$0xf]
      %v374 = vld [vmem:[%s215 + $0x24] sm:$0xf]
      %v375 = vld [vmem:[%s215 + $0x28] sm:$0xf]
      %v376 = vld [vmem:[%s215 + $0x2c] sm:$0xf]
      %v377 = vld [vmem:[%s215 + $0x30] sm:$0xf]
      %v378 = vld [vmem:[%s215 + $0x34] sm:$0xf]
      %v379 = vld [vmem:[%s215 + $0x38] sm:$0xf]
      %v380 = vld [vmem:[%s215 + $0x3c] sm:$0xf]
      %v381 = vld [vmem:[%s215 + $0x40] sm:$0xf]
      %v382 = vld [vmem:[%s215 + $0x44] sm:$0xf]
      %v383 = vld [vmem:[%s215 + $0x48] sm:$0xf]
      %v384 = vld [vmem:[%s215 + $0x4c] sm:$0xf]
      %v385 = vld [vmem:[%s215 + $0x50] sm:$0xf]
      %v386 = vld [vmem:[%s215 + $0x54] sm:$0xf]
      %v387 = vld [vmem:[%s215 + $0x58] sm:$0xf]
      %v388 = vld [vmem:[%s215 + $0x5c] sm:$0xf]
      %v389 = vld [vmem:[%s215 + $0x60] sm:$0xf]
      %v390 = vld [vmem:[%s215 + $0x64] sm:$0xf]
      %v391 = vld [vmem:[%s215 + $0x68] sm:$0xf]
      %v392 = vld [vmem:[%s215 + $0x6c] sm:$0xf]
      %v393 = vld [vmem:[%s215 + $0x70] sm:$0xf]
      %v394 = vld [vmem:[%s215 + $0x74] sm:$0xf]
      %v395 = vld [vmem:[%s215 + $0x78] sm:$0xf]
      %v396 = vld [vmem:[%s215 + $0x7c] sm:$0xf]
      %v397 = vunpack.c.l.bf16 %v365
      %v398 = vunpack.c.l.bf16 %v366
      %v399 = vunpack.c.l.bf16 %v367
      %v400 = vunpack.c.l.bf16 %v368
      %v401 = vunpack.c.l.bf16 %v369
      %v402 = vunpack.c.l.bf16 %v370
      %v403 = vunpack.c.l.bf16 %v371
      %v404 = vunpack.c.l.bf16 %v372
      %v405 = vunpack.c.l.bf16 %v373
      %v406 = vunpack.c.l.bf16 %v374
      %v407 = vunpack.c.l.bf16 %v375
      %v408 = vunpack.c.l.bf16 %v376
      %v409 = vunpack.c.l.bf16 %v377
      %v410 = vunpack.c.l.bf16 %v378
      %v411 = vunpack.c.l.bf16 %v379
      %v412 = vunpack.c.l.bf16 %v380
      %v413 = vunpack.c.l.bf16 %v381
      %v414 = vunpack.c.l.bf16 %v382
      %v415 = vunpack.c.l.bf16 %v383
      %v416 = vunpack.c.l.bf16 %v384
      %v417 = vunpack.c.l.bf16 %v385
      %v418 = vunpack.c.l.bf16 %v386
      %v419 = vunpack.c.l.bf16 %v387
      %v420 = vunpack.c.l.bf16 %v388
      %v421 = vunpack.c.l.bf16 %v389
      %v422 = vunpack.c.l.bf16 %v390
      %v423 = vunpack.c.l.bf16 %v391
      %v424 = vunpack.c.l.bf16 %v392
      %v425 = vunpack.c.l.bf16 %v393
      %v426 = vunpack.c.l.bf16 %v394
      %v427 = vunpack.c.l.bf16 %v395
      %v428 = vunpack.c.l.bf16 %v396
      %v429 = vadd.f32 %v333, %v397
      %v430 = vadd.f32 %v334, %v398
      %v431 = vadd.f32 %v335, %v399
      %v432 = vadd.f32 %v336, %v400
      %v433 = vadd.f32 %v337, %v401
      %v434 = vadd.f32 %v338, %v402
      %v435 = vadd.f32 %v339, %v403
      %v436 = vadd.f32 %v340, %v404
      %v437 = vadd.f32 %v341, %v405
      %v438 = vadd.f32 %v342, %v406
      %v439 = vadd.f32 %v343, %v407
      %v440 = vadd.f32 %v344, %v408
      %v441 = vadd.f32 %v345, %v409
      %v442 = vadd.f32 %v346, %v410
      %v443 = vadd.f32 %v347, %v411
      %v444 = vadd.f32 %v348, %v412
      %v445 = vadd.f32 %v349, %v413
      %v446 = vadd.f32 %v350, %v414
      %v447 = vadd.f32 %v351, %v415
      %v448 = vadd.f32 %v352, %v416
      %v449 = vadd.f32 %v353, %v417
      %v450 = vadd.f32 %v354, %v418
      %v451 = vadd.f32 %v355, %v419
      %v452 = vadd.f32 %v356, %v420
      %v453 = vadd.f32 %v357, %v421
      %v454 = vadd.f32 %v358, %v422
      %v455 = vadd.f32 %v359, %v423
      %v456 = vadd.f32 %v360, %v424
      %v457 = vadd.f32 %v361, %v425
      %v458 = vadd.f32 %v362, %v426
      %v459 = vadd.f32 %v363, %v427
      %v460 = vadd.f32 %v364, %v428
      %v461 = vmax.f32 %v429, 0.0
      %v462 = vmax.f32 %v430, 0.0
      %v463 = vmax.f32 %v431, 0.0
      %v464 = vmax.f32 %v432, 0.0
      %v465 = vmax.f32 %v433, 0.0
      %v466 = vmax.f32 %v434, 0.0
      %v467 = vmax.f32 %v435, 0.0
      %v468 = vmax.f32 %v436, 0.0
      %v469 = vmax.f32 %v437, 0.0
      %v470 = vmax.f32 %v438, 0.0
      %v471 = vmax.f32 %v439, 0.0
      %v472 = vmax.f32 %v440, 0.0
      %v473 = vmax.f32 %v441, 0.0
      %v474 = vmax.f32 %v442, 0.0
      %v475 = vmax.f32 %v443, 0.0
      %v476 = vmax.f32 %v444, 0.0
      %v477 = vmax.f32 %v445, 0.0
      %v478 = vmax.f32 %v446, 0.0
      %v479 = vmax.f32 %v447, 0.0
      %v480 = vmax.f32 %v448, 0.0
      %v481 = vmax.f32 %v449, 0.0
      %v482 = vmax.f32 %v450, 0.0
      %v483 = vmax.f32 %v451, 0.0
      %v484 = vmax.f32 %v452, 0.0
      %v485 = vmax.f32 %v453, 0.0
      %v486 = vmax.f32 %v454, 0.0
      %v487 = vmax.f32 %v455, 0.0
      %v488 = vmax.f32 %v456, 0.0
      %v489 = vmax.f32 %v457, 0.0
      %v490 = vmax.f32 %v458, 0.0
      %v491 = vmax.f32 %v459, 0.0
      %v492 = vmax.f32 %v460, 0.0
      %493 = vst [vmem:[%s221] sm:$0xff] %v461
      %494 = vst [vmem:[%s221 + $0x8] sm:$0xff] %v462
      %495 = vst [vmem:[%s221 + $0x10] sm:$0xff] %v463
      %496 = vst [vmem:[%s221 + $0x18] sm:$0xff] %v464
      %497 = vst [vmem:[%s221 + $0x20] sm:$0xff] %v465
      %498 = vst [vmem:[%s221 + $0x28] sm:$0xff] %v466
      %499 = vst [vmem:[%s221 + $0x30] sm:$0xff] %v467
      %500 = vst [vmem:[%s221 + $0x38] sm:$0xff] %v468
      %501 = vst [vmem:[%s221 + $0x40] sm:$0xff] %v469
      %502 = vst [vmem:[%s221 + $0x48] sm:$0xff] %v470
      %503 = vst [vmem:[%s221 + $0x50] sm:$0xff] %v471
      %504 = vst [vmem:[%s221 + $0x58] sm:$0xff] %v472
      %505 = vst [vmem:[%s221 + $0x60] sm:$0xff] %v473
      %506 = vst [vmem:[%s221 + $0x68] sm:$0xff] %v474
      %507 = vst [vmem:[%s221 + $0x70] sm:$0xff] %v475
      %508 = vst [vmem:[%s221 + $0x78] sm:$0xff] %v476
      %509 = vst [vmem:[%s221 + $0x80] sm:$0xff] %v477
      %510 = vst [vmem:[%s221 + $0x88] sm:$0xff] %v478
      %511 = vst [vmem:[%s221 + $0x90] sm:$0xff] %v479
      %512 = vst [vmem:[%s221 + $0x98] sm:$0xff] %v480
      %513 = vst [vmem:[%s221 + $0xa0] sm:$0xff] %v481
      %514 = vst [vmem:[%s221 + $0xa8] sm:$0xff] %v482
      %515 = vst [vmem:[%s221 + $0xb0] sm:$0xff] %v483
      %516 = vst [vmem:[%s221 + $0xb8] sm:$0xff] %v484
      %517 = vst [vmem:[%s221 + $0xc0] sm:$0xff] %v485
      %518 = vst [vmem:[%s221 + $0xc8] sm:$0xff] %v486
      %519 = vst [vmem:[%s221 + $0xd0] sm:$0xff] %v487
      %520 = vst [vmem:[%s221 + $0xd8] sm:$0xff] %v488
      %521 = vst [vmem:[%s221 + $0xe0] sm:$0xff] %v489
      %522 = vst [vmem:[%s221 + $0xe8] sm:$0xff] %v490
      %523 = vst [vmem:[%s221 + $0xf0] sm:$0xff] %v491
      %524 = vst [vmem:[%s221 + $0xf8] sm:$0xff] %v492
      %s525 = smul.u32 32, %s15
      %p526 = scmp.lt.s32.totalorder %s525, 63
      %s527 = scalar_select %p526, %s525, 63
      %s528 = smul.addr %s527, 8
      %s529 = scalar_lea.vmem %s4, %s528
      // Predicated region
      $region37: #{basic_block_forward.7} parent=35 // pred_check
        %p530 = pneg %p127
      $region38: #{basic_block_forward.7} parent=35 // pred_check_branch
        %532 = sbr.rel (%p530) target = $region40
      $region39: #{basic_block_forward.7} parent=35 // pred_region
        %s533 = smul.u32 32, %s15
      $region40: #{basic_block_forward.7} parent=35 // pred_fallthru
        _
    $region36: #{basic_block_forward.7} parent=5 // pred_fallthru
      _
    %p534 = scmp.le.s32.totalorder 2, %s10
    // Predicated region
    $region41: #{basic_block_forward.7} parent=5 // pred_check
      %p535 = pneg %p534
    $region42: #{basic_block_forward.7} parent=5 // pred_check_branch
      %537 = sbr.rel (%p535) target = $region44
    $region43: #{basic_block_forward.7} parent=5 // pred_region
      %s538 = ssub.s32 %s10, 2
      // Predicated region
      $region45: #{basic_block_forward.7} parent=43 // pred_check
        %p539 = pneg %p133
      $region46: #{basic_block_forward.7} parent=43 // pred_check_branch
        %541 = sbr.rel (%p539) target = $region48
      $region47: #{basic_block_forward.7} parent=43 // pred_region
        %s542 = smul.u32 32, %s16
        %p543 = scmp.lt.s32.totalorder %s542, 63
        %s544 = scalar_select %p543, %s542, 63
        %s545 = smul.addr %s544, 8
        %s546 = scalar_lea.vmem %s4, %s545
      $region48: #{basic_block_forward.7} parent=43 // pred_fallthru
        _
    $region44: #{basic_block_forward.7} parent=5 // pred_fallthru
      _
  $region6: #{basic_block_forward.7} parent=0 // loop_footer
    %s14 = sadd.s32 1, %s10
  $region7: #{basic_block_forward.7} parent=0 // loop_footer_branch
    %9 = sbr.rel target = $region3
  $region8: #{basic_block_forward.7} parent=0 // loop_exit
    _

// kernel: basic_block_forward.4
$region0: #{basic_block_forward.4}
  #allocation0 [shape = 'u32[]', space=smem, size = 0x4, offset = 0x4, fixed_abs, tag = 'smem constant byte address 0x4 - core index']
  #allocation1 [shape = 'u32[144,128]{1,0:T(1,128)}', space=vmem, size = 0x12000, scoped, tag = 'internal scratch']
  %s0 = inlined_call_operand.vmem [shape: bf16[1,2,18,18,8], index: 0, kind: input, shape index: {}]
  %s1 = inlined_call_operand.vmem [shape: bf16[9,8,128], index: 1, kind: input, shape index: {}]
  %s2 = inlined_call_operand.vmem [shape: bf16[512,128], index: 2, kind: output, shape index: {0}]
  %s3 = inlined_call_operand.vmem [shape: f32[2,2,128], index: 3, kind: output, shape index: {1}]
  %4 = xla_tuple %s2, %s3
  %s5 = sld [smem:[#allocation0]]
  $region49: #{basic_block_forward.4} parent=0
    _
  %s7 = ssub.s32 1, %s5
  %s8 = scalar_select 0, %s7, %s5
  loop: start=0, step=1, limit=4
  $region2: #{basic_block_forward.4} parent=0 // loop_pre_header
    _
  $region3: #{basic_block_forward.4} parent=0 // loop_header
    %s10 = sphi 0, %s14
    %p11 = scmp.ge.s32.totalorder %s10, 4
    %s20 = sphi 0, %s22
    %s23 = sphi 0, %s20
    %s24 = sphi 0, %s23
    %s40 = sphi 0, %s24
    %s44 = sphi 0, %s44
    %s46 = sphi 0, %s44
    %s47 = sphi 0, %s46
    %s61 = sphi 0, %s47
    %s67 = sphi 0, %s69
    %s70 = sphi 0, %s67
    %s71 = sphi 0, %s70
    %s87 = sphi 0, %s71
    %s93 = sphi 0, %s95
    %s96 = sphi 0, %s93
    %s97 = sphi 0, %s96
    %s113 = sphi 0, %s97
  $region4: #{basic_block_forward.4} parent=0 // loop_header_branch
    %13 = sbr.rel (%p11) target = $region8
  $region5: #{basic_block_forward.4} parent=0 // loop_body
    %s15 = ssub.s32 %s10, 1
    %s16 = ssub.s32 %s10, 2
    %s17 = sadd.s32 %s10, 1
    %s18 = ssub.s32 %s10, %s17
    %p19 = scmp.eq.s32.totalorder %s18, 0
    %s21 = sadd.s32 %s20, 1
    %s22 = scalar_select %p19, %s20, %s21
    %p25 = pneg %p19
    %p26 = scmp.eq.s32.totalorder %s10, 1
    %p27 = por %p25, %p26
    %p28 = scmp.ne.s32.totalorder %s20, %s23
    %p29 = scmp.eq.s32.totalorder %s10, 0
    %p30 = por %p28, %p29
    %p31 = scmp.ne.s32.totalorder %s20, %s23
    %p32 = scmp.eq.s32.totalorder %s15, 1
    %p33 = por %p31, %p32
    %p34 = scmp.ne.s32.totalorder %s23, %s24
    %p35 = scmp.eq.s32.totalorder %s15, 0
    %p36 = por %p34, %p35
    %p37 = scmp.ne.s32.totalorder %s23, %s24
    %p38 = scmp.eq.s32.totalorder %s16, 1
    %p39 = por %p37, %p38
    %p41 = scmp.ne.s32.totalorder %s24, %s40
    %p42 = scmp.eq.s32.totalorder %s16, 0
    %p43 = por %p41, %p42
    %s45 = sadd.s32 %s44, 1
    %p48 = scmp.eq.s32.totalorder %s10, 1
    %p49 = scmp.ne.s32.totalorder %s44, %s46
    %p50 = scmp.eq.s32.totalorder %s10, 0
    %p51 = por %p49, %p50
    %p52 = scmp.ne.s32.totalorder %s44, %s46
    %p53 = scmp.eq.s32.totalorder %s15, 1
    %p54 = por %p52, %p53
    %p55 = scmp.ne.s32.totalorder %s46, %s47
    %p56 = scmp.eq.s32.totalorder %s15, 0
    %p57 = por %p55, %p56
    %p58 = scmp.ne.s32.totalorder %s46, %s47
    %p59 = scmp.eq.s32.totalorder %s16, 1
    %p60 = por %p58, %p59
    %p62 = scmp.ne.s32.totalorder %s47, %s61
    %p63 = scmp.eq.s32.totalorder %s16, 0
    %p64 = por %p62, %p63
    %s65 = ssub.s32 %s10, %s17
    %p66 = scmp.eq.s32.totalorder %s65, 0
    %s68 = sadd.s32 %s67, 1
    %s69 = scalar_select %p66, %s67, %s68
    %p72 = pneg %p66
    %p73 = scmp.eq.s32.totalorder %s10, 1
    %p74 = por %p72, %p73
    %p75 = scmp.ne.s32.totalorder %s67, %s70
    %p76 = scmp.eq.s32.totalorder %s10, 0
    %p77 = por %p75, %p76
    %p78 = scmp.ne.s32.totalorder %s67, %s70
    %p79 = scmp.eq.s32.totalorder %s15, 1
    %p80 = por %p78, %p79
    %p81 = scmp.ne.s32.totalorder %s70, %s71
    %p82 = scmp.eq.s32.totalorder %s15, 0
    %p83 = por %p81, %p82
    %p84 = scmp.ne.s32.totalorder %s70, %s71
    %p85 = scmp.eq.s32.totalorder %s16, 1
    %p86 = por %p84, %p85
    %p88 = scmp.ne.s32.totalorder %s71, %s87
    %p89 = scmp.eq.s32.totalorder %s16, 0
    %p90 = por %p88, %p89
    %s91 = ssub.s32 %s10, %s17
    %p92 = scmp.eq.s32.totalorder %s91, 0
    %s94 = sadd.s32 %s93, 1
    %s95 = scalar_select %p92, %s93, %s94
    %p98 = pneg %p92
    %p99 = scmp.eq.s32.totalorder %s10, 1
    %p100 = por %p98, %p99
    %p101 = scmp.ne.s32.totalorder %s93, %s96
    %p102 = scmp.eq.s32.totalorder %s10, 0
    %p103 = por %p101, %p102
    %p104 = scmp.ne.s32.totalorder %s93, %s96
    %p105 = scmp.eq.s32.totalorder %s15, 1
    %p106 = por %p104, %p105
    %p107 = scmp.ne.s32.totalorder %s96, %s97
    %p108 = scmp.eq.s32.totalorder %s15, 0
    %p109 = por %p107, %p108
    %p110 = scmp.ne.s32.totalorder %s96, %s97
    %p111 = scmp.eq.s32.totalorder %s16, 1
    %p112 = por %p110, %p111
    %p114 = scmp.ne.s32.totalorder %s97, %s113
    %p115 = scmp.eq.s32.totalorder %s16, 0
    %p116 = por %p114, %p115
    %p117 = scmp.le.s32.totalorder 1, %s10
    %p118 = scmp.lt.s32.totalorder %s10, 3
    %p119 = pnand %p117, %p118
    %p120 = pneg %p119
    // Predicated region
    $region9: #{basic_block_forward.4} parent=5 // pred_check
      _
    $region10: #{basic_block_forward.4} parent=5 // pred_check_branch
      %122 = sbr.rel (%p119) target = $region12
    $region11: #{basic_block_forward.4} parent=5 // pred_region
      %s123 = ssub.s32 %s10, 1
      // Predicated region
      $region13: #{basic_block_forward.4} parent=11 // pred_check
        %p124 = pneg %p57
      $region14: #{basic_block_forward.4} parent=11 // pred_check_branch
        %126 = sbr.rel (%p124) target = $region16
      $region15: #{basic_block_forward.4} parent=11 // pred_region
        _
      $region16: #{basic_block_forward.4} parent=11 // pred_fallthru
        _
    $region12: #{basic_block_forward.4} parent=5 // pred_fallthru
      _
    %p127 = scmp.lt.s32.totalorder %s10, 2
    // Predicated region
    $region17: #{basic_block_forward.4} parent=5 // pred_check
      %p128 = pneg %p127
    $region18: #{basic_block_forward.4} parent=5 // pred_check_branch
      %130 = sbr.rel (%p128) target = $region20
    $region19: #{basic_block_forward.4} parent=5 // pred_region
      // Predicated region
      $region21: #{basic_block_forward.4} parent=19 // pred_check
        %p131 = pneg %p30
      $region22: #{basic_block_forward.4} parent=19 // pred_check_branch
        %133 = sbr.rel (%p131) target = $region24
      $region23: #{basic_block_forward.4} parent=19 // pred_region
        %p134 = scmp.lt.s32.totalorder %s10, 1
        %s135 = scalar_select %p134, %s10, 1
        %s136 = smul.addr %s135, 54
        %s137 = smul.addr %s136, 4
        %s138 = scalar_lea.vmem %s0, %s137
      $region24: #{basic_block_forward.4} parent=19 // pred_fallthru
        _
    $region20: #{basic_block_forward.4} parent=5 // pred_fallthru
      _
    %p139 = scmp.le.s32.totalorder 1, %s10
    %p140 = scmp.lt.s32.totalorder %s10, 3
    %p141 = pnand %p139, %p140
    %p142 = pneg %p141
    // Predicated region
    $region25: #{basic_block_forward.4} parent=5 // pred_check
      _
    $region26: #{basic_block_forward.4} parent=5 // pred_check_branch
      %144 = sbr.rel (%p141) target = $region28
    $region27: #{basic_block_forward.4} parent=5 // pred_region
      %s145 = ssub.s32 %s10, 1
      %p146 = scmp.lt.s32.totalorder %s15, 1
      %s147 = scalar_select %p146, %s15, 1
      %s148 = smul.addr %s147, 54
      %s149 = smul.addr %s148, 4
      %s150 = scalar_lea.vmem %s0, %s149
      %p151 = pneg %p36
      %p152 = pneg %p33
      %p153 = pneg %p57
      %p154 = pneg %p54
      %p155 = pneg %p83
      %p156 = pneg %p80
      %s157 = smul.u32 32, %s15
      %p158 = scmp.lt.s32.totalorder %s157, 63
      %s159 = scalar_select %p158, %s157, 63
      %s160 = smul.addr %s159, 4
      %s161 = scalar_lea.vmem %s2, %s160
      %p162 = pneg %p109
      %p163 = pneg %p106
      %p164 = scmp.lt.s32.totalorder %s15, 1
      %s165 = scalar_select %p164, %s15, 1
      %s166 = smul.addr %s165, 2
      %s167 = scalar_lea.vmem %s3, %s166
      %p168 = scmp.lt.s32.totalorder %s15, 1
      %s169 = scalar_select %p168, %s15, 1
      %s170 = smul.addr %s169, 54
      %s171 = smul.addr %s170, 4
      %s172 = scalar_lea.vmem %s0, %s171
      %s173 = smul.u32 32, %s15
      %p174 = scmp.lt.s32.totalorder %s173, 63
      %s175 = scalar_select %p174, %s173, 63
      %s176 = smul.addr %s175, 4
      %s177 = scalar_lea.vmem %s2, %s176
      %s178 = smul.u32 32, %s15
      %p179 = scmp.lt.s32.totalorder %s15, 1
      %s180 = scalar_select %p179, %s15, 1
      %s181 = smul.addr %s180, 2
      %s182 = scalar_lea.vmem %s3, %s181
      %v184 = vld [vmem:[%s172] sm:$0xf]
      %v185 = vld [vmem:[%s172 + $0x4] sm:$0xf]
      %v186 = vld [vmem:[%s172 + $0xc] sm:$0xf]
      %v187 = vld [vmem:[%s172 + $0x10] sm:$0xf]
      %v188 = vld [vmem:[%s172 + $0x18] sm:$0xf]
      %v189 = vld [vmem:[%s172 + $0x1c] sm:$0xf]
      %v190 = vld [vmem:[%s172 + $0x24] sm:$0xf]
      %v191 = vld [vmem:[%s172 + $0x28] sm:$0xf]
      %v192 = vld [vmem:[%s172 + $0x30] sm:$0xf]
      %v193 = vld [vmem:[%s172 + $0x34] sm:$0xf]
      %v194 = vld [vmem:[%s172 + $0x3c] sm:$0xf]
      %v195 = vld [vmem:[%s172 + $0x40] sm:$0xf]
      %v196 = vld [vmem:[%s172 + $0x48] sm:$0xf]
      %v197 = vld [vmem:[%s172 + $0x4c] sm:$0xf]
      %v198 = vld [vmem:[%s172 + $0x54] sm:$0xf]
      %v199 = vld [vmem:[%s172 + $0x58] sm:$0xf]
      %v200 = vld [vmem:[%s172 + $0x60] sm:$0xf]
      %v201 = vld [vmem:[%s172 + $0x64] sm:$0xf]
      %v202 = vld [vmem:[%s172 + $0x6c] sm:$0xf]
      %v203 = vld [vmem:[%s172 + $0x70] sm:$0xf]
      %v204 = vld [vmem:[%s172 + $0x78] sm:$0xf]
      %v205 = vld [vmem:[%s172 + $0x7c] sm:$0xf]
      %v206 = vld [vmem:[%s172 + $0x84] sm:$0xf]
      %v207 = vld [vmem:[%s172 + $0x88] sm:$0xf]
      %v208 = vld [vmem:[%s172 + $0x90] sm:$0xf]
      %v209 = vld [vmem:[%s172 + $0x94] sm:$0xf]
      %v210 = vld [vmem:[%s172 + $0x9c] sm:$0xf]
      %v211 = vld [vmem:[%s172 + $0xa0] sm:$0xf]
      %v212 = vld [vmem:[%s172 + $0xa8] sm:$0xf]
      %v213 = vld [vmem:[%s172 + $0xac] sm:$0xf]
      %v214 = vld [vmem:[%s172 + $0xb4] sm:$0xf]
      %v215 = vld [vmem:[%s172 + $0xb8] sm:$0xf]
      %v216 = vld [vmem:[%s1] sm:$0xf]
      %v217 = vld [vmem:[%s172 + $0x8] sm:$0x1]
      %v218 = vld [vmem:[%s172 + $0x14] sm:$0x1]
      %v219 = vld [vmem:[%s172 + $0x20] sm:$0x1]
      %v220 = vld [vmem:[%s172 + $0x2c] sm:$0x1]
      %v221 = vld [vmem:[%s172 + $0x38] sm:$0x1]
      %v222 = vld [vmem:[%s172 + $0x44] sm:$0x1]
      %v223 = vld [vmem:[%s172 + $0x50] sm:$0x1]
      %v224 = vld [vmem:[%s172 + $0x5c] sm:$0x1]
      %v225 = vld [vmem:[%s172 + $0x68] sm:$0x1]
      %v226 = vld [vmem:[%s172 + $0x74] sm:$0x1]
      %v227 = vld [vmem:[%s172 + $0x80] sm:$0x1]
      %v228 = vld [vmem:[%s172 + $0x8c] sm:$0x1]
      %v229 = vld [vmem:[%s172 + $0x98] sm:$0x1]
      %v230 = vld [vmem:[%s172 + $0xa4] sm:$0x1]
      %v231 = vld [vmem:[%s172 + $0xb0] sm:$0x1]
      %v232 = vld [vmem:[%s172 + $0xbc] sm:$0x1]
      %vm233 = vsmask.f32 3328
      %vm234 = vsmask.f32 7440
      %vm235 = vmor %vm233, %vm234
      %v237 = vshrl.u32 %v184, 16
      %v239 = vrot.slane %v237, 4
      %v240 = vshll.u32 %v184, 16
      %v242 = vrot.slane %v240, 5
      %v243 = vor.u32 %v239, %v242
      %v244 = vrot.slane %v243, 4
      %v246 = vshll.u32 %v185, 16
      %v248 = vrot.slane %v246, 5
      %v249 = vsel %vm235, %v244, %v248
      %v250 = vshrl.u32 %v185, 16
      %v252 = vrot.slane %v250, 4
      %v253 = vor.u32 %v252, %v248
      %v254 = vrot.slane %v253, 4
      %v256 = vshll.u32 %v217, 16
      %v258 = vrot.slane %v256, 5
      %v259 = vsel %vm235, %v254, %v258
      %v261 = vshrl.u32 %v186, 16
      %v263 = vrot.slane %v261, 4
      %v264 = vshll.u32 %v186, 16
      %v266 = vrot.slane %v264, 5
      %v267 = vor.u32 %v263, %v266
      %v268 = vrot.slane %v267, 4
      %v270 = vshll.u32 %v187, 16
      %v272 = vrot.slane %v270, 5
      %v273 = vsel %vm235, %v268, %v272
      %v274 = vshrl.u32 %v187, 16
      %v276 = vrot.slane %v274, 4
      %v277 = vor.u32 %v276, %v272
      %v278 = vrot.slane %v277, 4
      %v280 = vshll.u32 %v218, 16
      %v282 = vrot.slane %v280, 5
      %v283 = vsel %vm235, %v278, %v282
      %v285 = vshrl.u32 %v188, 16
      %v287 = vrot.slane %v285, 4
      %v288 = vshll.u32 %v188, 16
      %v290 = vrot.slane %v288, 5
      %v291 = vor.u32 %v287, %v290
      %v292 = vrot.slane %v291, 4
      %v294 = vshll.u32 %v189, 16
      %v296 = vrot.slane %v294, 5
      %v297 = vsel %vm235, %v292, %v296
      %v298 = vshrl.u32 %v189, 16
      %v300 = vrot.slane %v298, 4
      %v301 = vor.u32 %v300, %v296
      %v302 = vrot.slane %v301, 4
      %v304 = vshll.u32 %v219, 16
      %v306 = vrot.slane %v304, 5
      %v307 = vsel %vm235, %v302, %v306
      %v309 = vshrl.u32 %v190, 16
      %v311 = vrot.slane %v309, 4
      %v312 = vshll.u32 %v190, 16
      %v314 = vrot.slane %v312, 5
      %v315 = vor.u32 %v311, %v314
      %v316 = vrot.slane %v315, 4
      %v318 = vshll.u32 %v191, 16
      %v320 = vrot.slane %v318, 5
      %v321 = vsel %vm235, %v316, %v320
      %v322 = vshrl.u32 %v191, 16
      %v324 = vrot.slane %v322, 4
      %v325 = vor.u32 %v324, %v320
      %v326 = vrot.slane %v325, 4
      %v328 = vshll.u32 %v220, 16
      %v330 = vrot.slane %v328, 5
      %v331 = vsel %vm235, %v326, %v330
      %v333 = vshrl.u32 %v192, 16
      %v335 = vrot.slane %v333, 4
      %v336 = vshll.u32 %v192, 16
      %v338 = vrot.slane %v336, 5
      %v339 = vor.u32 %v335, %v338
      %v340 = vrot.slane %v339, 4
      %v342 = vshll.u32 %v193, 16
      %v344 = vrot.slane %v342, 5
      %v345 = vsel %vm235, %v340, %v344
      %v346 = vshrl.u32 %v193, 16
      %v348 = vrot.slane %v346, 4
      %v349 = vor.u32 %v348, %v344
      %v350 = vrot.slane %v349, 4
      %v352 = vshll.u32 %v221, 16
      %v354 = vrot.slane %v352, 5
      %v355 = vsel %vm235, %v350, %v354
      %v357 = vshrl.u32 %v194, 16
      %v359 = vrot.slane %v357, 4
      %v360 = vshll.u32 %v194, 16
      %v362 = vrot.slane %v360, 5
      %v363 = vor.u32 %v359, %v362
      %v364 = vrot.slane %v363, 4
      %v366 = vshll.u32 %v195, 16
      %v368 = vrot.slane %v366, 5
      %v369 = vsel %vm235, %v364, %v368
      %v370 = vshrl.u32 %v195, 16
      %v372 = vrot.slane %v370, 4
      %v373 = vor.u32 %v372, %v368
      %v374 = vrot.slane %v373, 4
      %v376 = vshll.u32 %v222, 16
      %v378 = vrot.slane %v376, 5
      %v379 = vsel %vm235, %v374, %v378
      %v381 = vshrl.u32 %v196, 16
      %v383 = vrot.slane %v381, 4
      %v384 = vshll.u32 %v196, 16
      %v386 = vrot.slane %v384, 5
      %v387 = vor.u32 %v383, %v386
      %v388 = vrot.slane %v387, 4
      %v390 = vshll.u32 %v197, 16
      %v392 = vrot.slane %v390, 5
      %v393 = vsel %vm235, %v388, %v392
      %v394 = vshrl.u32 %v197, 16
      %v396 = vrot.slane %v394, 4
      %v397 = vor.u32 %v396, %v392
      %v398 = vrot.slane %v397, 4
      %v400 = vshll.u32 %v223, 16
      %v402 = vrot.slane %v400, 5
      %v403 = vsel %vm235, %v398, %v402
      %v405 = vshrl.u32 %v198, 16
      %v407 = vrot.slane %v405, 4
      %v408 = vshll.u32 %v198, 16
      %v410 = vrot.slane %v408, 5
      %v411 = vor.u32 %v407, %v410
      %v412 = vrot.slane %v411, 4
      %v414 = vshll.u32 %v199, 16
      %v416 = vrot.slane %v414, 5
      %v417 = vsel %vm235, %v412, %v416
      %v418 = vshrl.u32 %v199, 16
      %v420 = vrot.slane %v418, 4
      %v421 = vor.u32 %v420, %v416
      %v422 = vrot.slane %v421, 4
      %v424 = vshll.u32 %v224, 16
      %v426 = vrot.slane %v424, 5
      %v427 = vsel %vm235, %v422, %v426
      %v429 = vshrl.u32 %v200, 16
      %v431 = vrot.slane %v429, 4
      %v432 = vshll.u32 %v200, 16
      %v434 = vrot.slane %v432, 5
      %v435 = vor.u32 %v431, %v434
      %v436 = vrot.slane %v435, 4
      %v438 = vshll.u32 %v201, 16
      %v440 = vrot.slane %v438, 5
      %v441 = vsel %vm235, %v436, %v440
      %v442 = vshrl.u32 %v201, 16
      %v444 = vrot.slane %v442, 4
      %v445 = vor.u32 %v444, %v440
      %v446 = vrot.slane %v445, 4
      %v448 = vshll.u32 %v225, 16
      %v450 = vrot.slane %v448, 5
      %v451 = vsel %vm235, %v446, %v450
      %v453 = vshrl.u32 %v202, 16
      %v455 = vrot.slane %v453, 4
      %v456 = vshll.u32 %v202, 16
      %v458 = vrot.slane %v456, 5
      %v459 = vor.u32 %v455, %v458
      %v460 = vrot.slane %v459, 4
      %v462 = vshll.u32 %v203, 16
      %v464 = vrot.slane %v462, 5
      %v465 = vsel %vm235, %v460, %v464
      %v466 = vshrl.u32 %v203, 16
      %v468 = vrot.slane %v466, 4
      %v469 = vor.u32 %v468, %v464
      %v470 = vrot.slane %v469, 4
      %v472 = vshll.u32 %v226, 16
      %v474 = vrot.slane %v472, 5
      %v475 = vsel %vm235, %v470, %v474
      %v477 = vshrl.u32 %v204, 16
      %v479 = vrot.slane %v477, 4
      %v480 = vshll.u32 %v204, 16
      %v482 = vrot.slane %v480, 5
      %v483 = vor.u32 %v479, %v482
      %v484 = vrot.slane %v483, 4
      %v486 = vshll.u32 %v205, 16
      %v488 = vrot.slane %v486, 5
      %v489 = vsel %vm235, %v484, %v488
      %v490 = vshrl.u32 %v205, 16
      %v492 = vrot.slane %v490, 4
      %v493 = vor.u32 %v492, %v488
      %v494 = vrot.slane %v493, 4
      %v496 = vshll.u32 %v227, 16
      %v498 = vrot.slane %v496, 5
      %v499 = vsel %vm235, %v494, %v498
      %v501 = vshrl.u32 %v206, 16
      %v503 = vrot.slane %v501, 4
      %v504 = vshll.u32 %v206, 16
      %v506 = vrot.slane %v504, 5
      %v507 = vor.u32 %v503, %v506
      %v508 = vrot.slane %v507, 4
      %v510 = vshll.u32 %v207, 16
      %v512 = vrot.slane %v510, 5
      %v513 = vsel %vm235, %v508, %v512
      %v514 = vshrl.u32 %v207, 16
      %v516 = vrot.slane %v514, 4
      %v517 = vor.u32 %v516, %v512
      %v518 = vrot.slane %v517, 4
      %v520 = vshll.u32 %v228, 16
      %v522 = vrot.slane %v520, 5
      %v523 = vsel %vm235, %v518, %v522
      %v525 = vshrl.u32 %v208, 16
      %v527 = vrot.slane %v525, 4
      %v528 = vshll.u32 %v208, 16
      %v530 = vrot.slane %v528, 5
      %v531 = vor.u32 %v527, %v530
      %v532 = vrot.slane %v531, 4
      %v534 = vshll.u32 %v209, 16
      %v536 = vrot.slane %v534, 5
      %v537 = vsel %vm235, %v532, %v536
      %v538 = vshrl.u32 %v209, 16
      %v540 = vrot.slane %v538, 4
      %v541 = vor.u32 %v540, %v536
      %v542 = vrot.slane %v541, 4
      %v544 = vshll.u32 %v229, 16
      %v546 = vrot.slane %v544, 5
      %v547 = vsel %vm235, %v542, %v546
      %v549 = vshrl.u32 %v210, 16
      %v551 = vrot.slane %v549, 4
      %v552 = vshll.u32 %v210, 16
      %v554 = vrot.slane %v552, 5
      %v555 = vor.u32 %v551, %v554
      %v556 = vrot.slane %v555, 4
      %v558 = vshll.u32 %v211, 16
      %v560 = vrot.slane %v558, 5
      %v561 = vsel %vm235, %v556, %v560
      %v562 = vshrl.u32 %v211, 16
      %v564 = vrot.slane %v562, 4
      %v565 = vor.u32 %v564, %v560
      %v566 = vrot.slane %v565, 4
      %v568 = vshll.u32 %v230, 16
      %v570 = vrot.slane %v568, 5
      %v571 = vsel %vm235, %v566, %v570
      %v573 = vshrl.u32 %v212, 16
      %v575 = vrot.slane %v573, 4
      %v576 = vshll.u32 %v212, 16
      %v578 = vrot.slane %v576, 5
      %v579 = vor.u32 %v575, %v578
      %v580 = vrot.slane %v579, 4
      %v582 = vshll.u32 %v213, 16
      %v584 = vrot.slane %v582, 5
      %v585 = vsel %vm235, %v580, %v584
      %v586 = vshrl.u32 %v213, 16
      %v588 = vrot.slane %v586, 4
      %v589 = vor.u32 %v588, %v584
      %v590 = vrot.slane %v589, 4
      %v592 = vshll.u32 %v231, 16
      %v594 = vrot.slane %v592, 5
      %v595 = vsel %vm235, %v590, %v594
      %v597 = vshrl.u32 %v214, 16
      %v599 = vrot.slane %v597, 4
      %v600 = vshll.u32 %v214, 16
      %v602 = vrot.slane %v600, 5
      %v603 = vor.u32 %v599, %v602
      %v604 = vrot.slane %v603, 4
      %v606 = vshll.u32 %v215, 16
      %v608 = vrot.slane %v606, 5
      %v609 = vsel %vm235, %v604, %v608
      %v610 = vshrl.u32 %v215, 16
      %v612 = vrot.slane %v610, 4
      %v613 = vor.u32 %v612, %v608
      %v614 = vrot.slane %v613, 4
      %v616 = vshll.u32 %v232, 16
      %v618 = vrot.slane %v616, 5
      %v619 = vsel %vm235, %v614, %v618
      %s620 = scalar_lea.vmem %s1, 4
      %v621 = vld [vmem:[%s620] sm:$0xf]
      %v622 = vunpack.c.l.b16 %v249
      %v623 = vunpack.c.l.b16 %v259
      %v624 = vunpack.c.l.b16 %v273
      %v625 = vunpack.c.l.b16 %v283
      %v626 = vunpack.c.l.b16 %v297
      %v627 = vunpack.c.l.b16 %v307
      %v628 = vunpack.c.l.b16 %v321
      %v629 = vunpack.c.l.b16 %v331
      %v630 = vunpack.c.l.b16 %v345
      %v631 = vunpack.c.l.b16 %v355
      %v632 = vunpack.c.l.b16 %v369
      %v633 = vunpack.c.l.b16 %v379
      %v634 = vunpack.c.l.b16 %v393
      %v635 = vunpack.c.l.b16 %v403
      %v636 = vunpack.c.l.b16 %v417
      %v637 = vunpack.c.l.b16 %v427
      %v638 = vunpack.c.l.b16 %v441
      %v639 = vunpack.c.l.b16 %v451
      %v640 = vunpack.c.l.b16 %v465
      %v641 = vunpack.c.l.b16 %v475
      %v642 = vunpack.c.l.b16 %v489
      %v643 = vunpack.c.l.b16 %v499
      %v644 = vunpack.c.l.b16 %v513
      %v645 = vunpack.c.l.b16 %v523
      %v646 = vunpack.c.l.b16 %v537
      %v647 = vunpack.c.l.b16 %v547
      %v648 = vunpack.c.l.b16 %v561
      %v649 = vunpack.c.l.b16 %v571
      %v650 = vunpack.c.l.b16 %v585
      %v651 = vunpack.c.l.b16 %v595
      %v652 = vunpack.c.l.b16 %v609
      %v653 = vunpack.c.l.b16 %v619
      %v654 = vpack.c.b16 %v623, %v622
      %v655 = vpack.c.b16 %v625, %v624
      %v656 = vpack.c.b16 %v627, %v626
      %v657 = vpack.c.b16 %v629, %v628
      %v658 = vpack.c.b16 %v631, %v630
      %v659 = vpack.c.b16 %v633, %v632
      %v660 = vpack.c.b16 %v635, %v634
      %v661 = vpack.c.b16 %v637, %v636
      %v662 = vpack.c.b16 %v639, %v638
      %v663 = vpack.c.b16 %v641, %v640
      %v664 = vpack.c.b16 %v643, %v642
      %v665 = vpack.c.b16 %v645, %v644
      %v666 = vpack.c.b16 %v647, %v646
      %v667 = vpack.c.b16 %v649, %v648
      %v668 = vpack.c.b16 %v651, %v650
      %v669 = vpack.c.b16 %v653, %v652
      %vm670 = vcmask 64512
      %v672 = vsel %vm670, %v654, 0
      %v675 = vsel %vm670, %v655, 0
      %v678 = vsel %vm670, %v656, 0
      %v681 = vsel %vm670, %v657, 0
      %v684 = vsel %vm670, %v658, 0
      %v687 = vsel %vm670, %v659, 0
      %v690 = vsel %vm670, %v660, 0
      %v693 = vsel %vm670, %v661, 0
      %v696 = vsel %vm670, %v662, 0
      %v699 = vsel %vm670, %v663, 0
      %v702 = vsel %vm670, %v664, 0
      %v705 = vsel %vm670, %v665, 0
      %v708 = vsel %vm670, %v666, 0
      %v711 = vsel %vm670, %v667, 0
      %v714 = vsel %vm670, %v668, 0
      %v717 = vsel %vm670, %v669, 0
      %vm719 = vcmask 1043456
      %v721 = vsel %vm719, %v621, 0
      %723 = vmatprep.subr.bf16.mxu0 0
      %724 = vmatpush1.bf16.msra.mxu0 %v721
      %725 = vmatprep.subr.bf16.mxu0 0
      %726 = vmatpush1.bf16.msra.mxu0 0
      %727 = vmatprep.subr.bf16.mxu0 0
      %728 = vmatpush1.bf16.msra.mxu0 0
      %729 = vmatprep.subr.bf16.mxu0 0
      %730 = vmatpush1.bf16.msra.mxu0 0
      %731 = vmatprep.subr.bf16.mxu0 0
      %732 = vmatpush1.bf16.msra.mxu0 0
      %733 = vmatprep.subr.bf16.mxu0 0
      %734 = vmatpush1.bf16.msra.mxu0 0
      %735 = vmatprep.subr.bf16.mxu0 0
      %736 = vmatpush1.bf16.msra.mxu0 0
      %737 = vmatprep.subr.bf16.mxu0 0
      %738 = vmatpush1.bf16.msra.mxu0 0
      %739 = vmatprep.subr.bf16.mxu0 0
      %740 = vmatpush1.bf16.msra.mxu0 0
      %741 = vmatprep.subr.bf16.mxu0 0
      %742 = vmatpush1.bf16.msra.mxu0 0
      %743 = vmatprep.subr.bf16.mxu0 0
      %744 = vmatpush1.bf16.msra.mxu0 0
      %745 = vmatprep.subr.bf16.mxu0 0
      %746 = vmatpush1.bf16.msra.mxu0 0
      %747 = vmatprep.subr.bf16.mxu0 0
      %748 = vmatpush1.bf16.msra.mxu0 0
      %749 = vmatprep.subr.bf16.mxu0 0
      %750 = vmatpush1.bf16.msra.mxu0 0
      %751 = vmatprep.subr.bf16.mxu0 0
      %752 = vmatpush1.bf16.msra.mxu0 0
      %753 = vmatprep.subr.bf16.mxu0 0
      %754 = vmatpush1.bf16.msra.mxu0 0
      %755 = vmatprep.mubr.bf16.mxu0 0
      %756 = vmatmul.mubr.bf16.gmra.mrb[0].mxu0 %v672
      %v757 = vpop.f32.mrb[0].mxu0
      %v758 = vadd.f32 0.0, %v757
      %v759 = vpop.f32.mrb[0].mxu0
      %v760 = vpop.f32.mrb[0].mxu0
      %v761 = vadd.f32 0.0, %v760
      %v762 = vpop.f32.mrb[0].mxu0
      %763 = vmatprep.mubr.bf16.mxu0 0
      %764 = vmatmul.mubr.bf16.gmra.mrb[0].mxu0 %v675
      %v765 = vpop.f32.mrb[0].mxu0
      %v766 = vadd.f32 0.0, %v765
      %v767 = vpop.f32.mrb[0].mxu0
      %v768 = vpop.f32.mrb[0].mxu0
      %v769 = vadd.f32 0.0, %v768
      %v770 = vpop.f32.mrb[0].mxu0
      %771 = vmatprep.mubr.bf16.mxu0 0
      %772 = vmatmul.mubr.bf16.gmra.mrb[0].mxu0 %v678
      %v773 = vpop.f32.mrb[0].mxu0
      %v774 = vadd.f32 0.0, %v773
      %v775 = vpop.f32.mrb[0].mxu0
      %v776 = vpop.f32.mrb[0].mxu0
      %v777 = vadd.f32 0.0, %v776
      %v778 = vpop.f32.mrb[0].mxu0
      %779 = vmatprep.mubr.bf16.mxu0 0
      %780 = vmatmul.mubr.bf16.gmra.mrb[0].mxu0 %v681
      %v781 = vpop.f32.mrb[0].mxu0
      %v782 = vadd.f32 0.0, %v781
      %v783 = vpop.f32.mrb[0].mxu0
      %v784 = vpop.f32.mrb[0].mxu0
      %v785 = vadd.f32 0.0, %v784
      %v786 = vpop.f32.mrb[0].mxu0
      %787 = vmatprep.mubr.bf16.mxu0 0
      %788 = vmatmul.mubr.bf16.gmra.mrb[0].mxu0 %v684
      %v789 = vpop.f32.mrb[0].mxu0
      %v790 = vadd.f32 0.0, %v789
      %v791 = vpop.f32.mrb[0].mxu0
      %v792 = vpop.f32.mrb[0].mxu0
      %v793 = vadd.f32 0.0, %v792
      %v794 = vpop.f32.mrb[0].mxu0
      %795 = vmatprep.mubr.bf16.mxu0 0
      %796 = vmatmul.mubr.bf16.gmra.mrb[0].mxu0 %v687
      %v797 = vpop.f32.mrb[0].mxu0
      %v798 = vadd.f32 0.0, %v797
      %v799 = vpop.f32.mrb[0].mxu0
      %v800 = vpop.f32.mrb[0].mxu0
      %v801 = vadd.f32 0.0, %v800
      %v802 = vpop.f32.mrb[0].mxu0
      %803 = vmatprep.mubr.bf16.mxu0 0
      %804 = vmatmul.mubr.bf16.gmra.mrb[0].mxu0 %v690
      %v805 = vpop.f32.mrb[0].mxu0
      %v806 = vadd.f32 0.0, %v805
      %v807 = vpop.f32.mrb[0].mxu0
      %v808 = vpop.f32.mrb[0].mxu0
      %v809 = vadd.f32 0.0, %v808
      %v810 = vpop.f32.mrb[0].mxu0
      %811 = vmatprep.mubr.bf16.mxu0 0
      %812 = vmatmul.mubr.bf16.gmra.mrb[0].mxu0 %v693
      %v813 = vpop.f32.mrb[0].mxu0
      %v814 = vadd.f32 0.0, %v813
      %v815 = vpop.f32.mrb[0].mxu0
      %v816 = vpop.f32.mrb[0].mxu0
      %v817 = vadd.f32 0.0, %v816
      %v818 = vpop.f32.mrb[0].mxu0
      %819 = vmatprep.mubr.bf16.mxu0 0
      %820 = vmatmul.mubr.bf16.gmra.mrb[0].mxu0 %v696
      %v821 = vpop.f32.mrb[0].mxu0
      %v822 = vadd.f32 0.0, %v821
      %v823 = vpop.f32.mrb[0].mxu0
      %v824 = vpop.f32.mrb[0].mxu0
      %v825 = vadd.f32 0.0, %v824
      %v826 = vpop.f32.mrb[0].mxu0
      %827 = vmatprep.mubr.bf16.mxu0 0
      %828 = vmatmul.mubr.bf16.gmra.mrb[0].mxu0 %v699
      %v829 = vpop.f32.mrb[0].mxu0
      %v830 = vadd.f32 0.0, %v829
      %v831 = vpop.f32.mrb[0].mxu0
      %v832 = vpop.f32.mrb[0].mxu0
      %v833 = vadd.f32 0.0, %v832
      %v834 = vpop.f32.mrb[0].mxu0
      %835 = vmatprep.mubr.bf16.mxu0 0
      %836 = vmatmul.mubr.bf16.gmra.mrb[0].mxu0 %v702
      %v837 = vpop.f32.mrb[0].mxu0
      %v838 = vadd.f32 0.0, %v837
      %v839 = vpop.f32.mrb[0].mxu0
      %v840 = vpop.f32.mrb[0].mxu0
      %v841 = vadd.f32 0.0, %v840
      %v842 = vpop.f32.mrb[0].mxu0
      %843 = vmatprep.mubr.bf16.mxu0 0
      %844 = vmatmul.mubr.bf16.gmra.mrb[0].mxu0 %v705
      %v845 = vpop.f32.mrb[0].mxu0
      %v846 = vadd.f32 0.0, %v845
      %v847 = vpop.f32.mrb[0].mxu0
      %v848 = vpop.f32.mrb[0].mxu0
      %v849 = vadd.f32 0.0, %v848
      %v850 = vpop.f32.mrb[0].mxu0
      %851 = vmatprep.mubr.bf16.mxu0 0
      %852 = vmatmul.mubr.bf16.gmra.mrb[0].mxu0 %v708
      %v853 = vpop.f32.mrb[0].mxu0
      %v854 = vadd.f32 0.0, %v853
      %v855 = vpop.f32.mrb[0].mxu0
      %v856 = vpop.f32.mrb[0].mxu0
      %v857 = vadd.f32 0.0, %v856
      %v858 = vpop.f32.mrb[0].mxu0
      %859 = vmatprep.mubr.bf16.mxu0 0
      %860 = vmatmul.mubr.bf16.gmra.mrb[0].mxu0 %v711
      %v861 = vpop.f32.mrb[0].mxu0
      %v862 = vadd.f32 0.0, %v861
      %v863 = vpop.f32.mrb[0].mxu0
      %v864 = vpop.f32.mrb[0].mxu0
      %v865 = vadd.f32 0.0, %v864
      %v866 = vpop.f32.mrb[0].mxu0
      %867 = vmatprep.mubr.bf16.mxu0 0
      %868 = vmatmul.mubr.bf16.gmra.mrb[0].mxu0 %v714
      %v869 = vpop.f32.mrb[0].mxu0
      %v870 = vadd.f32 0.0, %v869
      %v871 = vpop.f32.mrb[0].mxu0
      %v872 = vpop.f32.mrb[0].mxu0
      %v873 = vadd.f32 0.0, %v872
      %v874 = vpop.f32.mrb[0].mxu0
      %875 = vmatprep.mubr.bf16.mxu0 0
      %876 = vmatmul.mubr.bf16.gmra.mrb[0].mxu0 %v717
      %v877 = vpop.f32.mrb[0].mxu0
      %v878 = vadd.f32 0.0, %v877
      %v879 = vpop.f32.mrb[0].mxu0
      %v880 = vpop.f32.mrb[0].mxu0
      %v881 = vadd.f32 0.0, %v880
      %v882 = vpop.f32.mrb[0].mxu0
      %883 = vdwg.mxu0
      %v916 = vunpack.c.l.b16 %v184
      %v917 = vunpack.c.l.b16 %v185
      %v918 = vunpack.c.l.b16 %v186
      %v919 = vunpack.c.l.b16 %v187
      %v920 = vunpack.c.l.b16 %v188
      %v921 = vunpack.c.l.b16 %v189
      %v922 = vunpack.c.l.b16 %v190
      %v923 = vunpack.c.l.b16 %v191
      %v924 = vunpack.c.l.b16 %v192
      %v925 = vunpack.c.l.b16 %v193
      %v926 = vunpack.c.l.b16 %v194
      %v927 = vunpack.c.l.b16 %v195
      %v928 = vunpack.c.l.b16 %v196
      %v929 = vunpack.c.l.b16 %v197
      %v930 = vunpack.c.l.b16 %v198
      %v931 = vunpack.c.l.b16 %v199
      %v932 = vunpack.c.l.b16 %v200
      %v933 = vunpack.c.l.b16 %v201
      %v934 = vunpack.c.l.b16 %v202
      %v935 = vunpack.c.l.b16 %v203
      %v936 = vunpack.c.l.b16 %v204
      %v937 = vunpack.c.l.b16 %v205
      %v938 = vunpack.c.l.b16 %v206
      %v939 = vunpack.c.l.b16 %v207
      %v940 = vunpack.c.l.b16 %v208
      %v941 = vunpack.c.l.b16 %v209
      %v942 = vunpack.c.l.b16 %v210
      %v943 = vunpack.c.l.b16 %v211
      %v944 = vunpack.c.l.b16 %v212
      %v945 = vunpack.c.l.b16 %v213
      %v946 = vunpack.c.l.b16 %v214
      %v947 = vunpack.c.l.b16 %v215
      %v948 = vpack.c.b16 %v917, %v916
      %v949 = vpack.c.b16 %v919, %v918
      %v950 = vpack.c.b16 %v921, %v920
      %v951 = vpack.c.b16 %v923, %v922
      %v952 = vpack.c.b16 %v925, %v924
      %v953 = vpack.c.b16 %v927, %v926
      %v954 = vpack.c.b16 %v929, %v928
      %v955 = vpack.c.b16 %v931, %v930
      %v956 = vpack.c.b16 %v933, %v932
      %v957 = vpack.c.b16 %v935, %v934
      %v958 = vpack.c.b16 %v937, %v936
      %v959 = vpack.c.b16 %v939, %v938
      %v960 = vpack.c.b16 %v941, %v940
      %v961 = vpack.c.b16 %v943, %v942
      %v962 = vpack.c.b16 %v945, %v944
      %v963 = vpack.c.b16 %v947, %v946
      %v965 = vsel %vm670, %v948, 0
      %v968 = vsel %vm670, %v949, 0
      %v971 = vsel %vm670, %v950, 0
      %v974 = vsel %vm670, %v951, 0
      %v977 = vsel %vm670, %v952, 0
      %v980 = vsel %vm670, %v953, 0
      %v983 = vsel %vm670, %v954, 0
      %v986 = vsel %vm670, %v955, 0
      %v989 = vsel %vm670, %v956, 0
      %v992 = vsel %vm670, %v957, 0
      %v995 = vsel %vm670, %v958, 0
      %v998 = vsel %vm670, %v959, 0
      %v1001 = vsel %vm670, %v960, 0
      %v1004 = vsel %vm670, %v961, 0
      %v1007 = vsel %vm670, %v962, 0
      %v1010 = vsel %vm670, %v963, 0
      %v1013 = vsel %vm719, %v216, 0
      %1015 = vmatprep.subr.bf16.mxu0 0
      %1016 = vmatpush1.bf16.msra.mxu0 %v1013
      %1017 = vmatprep.subr.bf16.mxu0 0
      %1018 = vmatpush1.bf16.msra.mxu0 0
      %1019 = vmatprep.subr.bf16.mxu0 0
      %1020 = vmatpush1.bf16.msra.mxu0 0
      %1021 = vmatprep.subr.bf16.mxu0 0
      %1022 = vmatpush1.bf16.msra.mxu0 0
      %1023 = vmatprep.subr.bf16.mxu0 0
      %1024 = vmatpush1.bf16.msra.mxu0 0
      %1025 = vmatprep.subr.bf16.mxu0 0
      %1026 = vmatpush1.bf16.msra.mxu0 0
      %1027 = vmatprep.subr.bf16.mxu0 0
      %1028 = vmatpush1.bf16.msra.mxu0 0
      %1029 = vmatprep.subr.bf16.mxu0 0
      %1030 = vmatpush1.bf16.msra.mxu0 0
      %1031 = vmatprep.subr.bf16.mxu0 0
      %1032 = vmatpush1.bf16.msra.mxu0 0
      %1033 = vmatprep.subr.bf16.mxu0 0
      %1034 = vmatpush1.bf16.msra.mxu0 0
      %1035 = vmatprep.subr.bf16.mxu0 0
      %1036 = vmatpush1.bf16.msra.mxu0 0
      %1037 = vmatprep.subr.bf16.mxu0 0
      %1038 = vmatpush1.bf16.msra.mxu0 0
      %1039 = vmatprep.subr.bf16.mxu0 0
      %1040 = vmatpush1.bf16.msra.mxu0 0
      %1041 = vmatprep.subr.bf16.mxu0 0
      %1042 = vmatpush1.bf16.msra.mxu0 0
      %1043 = vmatprep.subr.bf16.mxu0 0
      %1044 = vmatpush1.bf16.msra.mxu0 0
      %1045 = vmatprep.subr.bf16.mxu0 0
      %1046 = vmatpush1.bf16.msra.mxu0 0
      %1047 = vmatprep.mubr.bf16.mxu0 0
      %1048 = vmatmul.mubr.bf16.gmra.mrb[0].mxu0 %v965
      %v1049 = vpop.f32.mrb[0].mxu0
      %v1050 = vadd.f32 %v758, %v1049
      %v1051 = vpop.f32.mrb[0].mxu0
      %v1052 = vpop.f32.mrb[0].mxu0
      %v1053 = vadd.f32 %v761, %v1052
      %v1054 = vpop.f32.mrb[0].mxu0
      %1055 = vmatprep.mubr.bf16.mxu0 0
      %1056 = vmatmul.mubr.bf16.gmra.mrb[0].mxu0 %v968
      %v1057 = vpop.f32.mrb[0].mxu0
      %v1058 = vadd.f32 %v766, %v1057
      %v1059 = vpop.f32.mrb[0].mxu0
      %v1060 = vpop.f32.mrb[0].mxu0
      %v1061 = vadd.f32 %v769, %v1060
      %v1062 = vpop.f32.mrb[0].mxu0
      %1063 = vmatprep.mubr.bf16.mxu0 0
      %1064 = vmatmul.mubr.bf16.gmra.mrb[0].mxu0 %v971
      %v1065 = vpop.f32.mrb[0].mxu0
      %v1066 = vadd.f32 %v774, %v1065
      %v1067 = vpop.f32.mrb[0].mxu0
      %v1068 = vpop.f32.mrb[0].mxu0
      %v1069 = vadd.f32 %v777, %v1068
      %v1070 = vpop.f32.mrb[0].mxu0
      %1071 = vmatprep.mubr.bf16.mxu0 0
      %1072 = vmatmul.mubr.bf16.gmra.mrb[0].mxu0 %v974
      %v1073 = vpop.f32.mrb[0].mxu0
      %v1074 = vadd.f32 %v782, %v1073
      %v1075 = vpop.f32.mrb[0].mxu0
      %v1076 = vpop.f32.mrb[0].mxu0
      %v1077 = vadd.f32 %v785, %v1076
      %v1078 = vpop.f32.mrb[0].mxu0
      %1079 = vmatprep.mubr.bf16.mxu0 0
      %1080 = vmatmul.mubr.bf16.gmra.mrb[0].mxu0 %v977
      %v1081 = vpop.f32.mrb[0].mxu0
      %v1082 = vadd.f32 %v790, %v1081
      %v1083 = vpop.f32.mrb[0].mxu0
      %v1084 = vpop.f32.mrb[0].mxu0
      %v1085 = vadd.f32 %v793, %v1084
      %v1086 = vpop.f32.mrb[0].mxu0
      %1087 = vmatprep.mubr.bf16.mxu0 0
      %1088 = vmatmul.mubr.bf16.gmra.mrb[0].mxu0 %v980
      %v1089 = vpop.f32.mrb[0].mxu0
      %v1090 = vadd.f32 %v798, %v1089
      %v1091 = vpop.f32.mrb[0].mxu0
      %v1092 = vpop.f32.mrb[0].mxu0
      %v1093 = vadd.f32 %v801, %v1092
      %v1094 = vpop.f32.mrb[0].mxu0
      %1095 = vmatprep.mubr.bf16.mxu0 0
      %1096 = vmatmul.mubr.bf16.gmra.mrb[0].mxu0 %v983
      %v1097 = vpop.f32.mrb[0].mxu0
      %v1098 = vadd.f32 %v806, %v1097
      %v1099 = vpop.f32.mrb[0].mxu0
      %v1100 = vpop.f32.mrb[0].mxu0
      %v1101 = vadd.f32 %v809, %v1100
      %v1102 = vpop.f32.mrb[0].mxu0
      %1103 = vmatprep.mubr.bf16.mxu0 0
      %1104 = vmatmul.mubr.bf16.gmra.mrb[0].mxu0 %v986
      %v1105 = vpop.f32.mrb[0].mxu0
      %v1106 = vadd.f32 %v814, %v1105
      %v1107 = vpop.f32.mrb[0].mxu0
      %v1108 = vpop.f32.mrb[0].mxu0
      %v1109 = vadd.f32 %v817, %v1108
      %v1110 = vpop.f32.mrb[0].mxu0
      %1111 = vmatprep.mubr.bf16.mxu0 0
      %1112 = vmatmul.mubr.bf16.gmra.mrb[0].mxu0 %v989
      %v1113 = vpop.f32.mrb[0].mxu0
      %v1114 = vadd.f32 %v822, %v1113
      %v1115 = vpop.f32.mrb[0].mxu0
      %v1116 = vpop.f32.mrb[0].mxu0
      %v1117 = vadd.f32 %v825, %v1116
      %v1118 = vpop.f32.mrb[0].mxu0
      %1119 = vmatprep.mubr.bf16.mxu0 0
      %1120 = vmatmul.mubr.bf16.gmra.mrb[0].mxu0 %v992
      %v1121 = vpop.f32.mrb[0].mxu0
      %v1122 = vadd.f32 %v830, %v1121
      %v1123 = vpop.f32.mrb[0].mxu0
      %v1124 = vpop.f32.mrb[0].mxu0
      %v1125 = vadd.f32 %v833, %v1124
      %v1126 = vpop.f32.mrb[0].mxu0
      %1127 = vmatprep.mubr.bf16.mxu0 0
      %1128 = vmatmul.mubr.bf16.gmra.mrb[0].mxu0 %v995
      %v1129 = vpop.f32.mrb[0].mxu0
      %v1130 = vadd.f32 %v838, %v1129
      %v1131 = vpop.f32.mrb[0].mxu0
      %v1132 = vpop.f32.mrb[0].mxu0
      %v1133 = vadd.f32 %v841, %v1132
      %v1134 = vpop.f32.mrb[0].mxu0
      %1135 = vmatprep.mubr.bf16.mxu0 0
      %1136 = vmatmul.mubr.bf16.gmra.mrb[0].mxu0 %v998
      %v1137 = vpop.f32.mrb[0].mxu0
      %v1138 = vadd.f32 %v846, %v1137
      %v1139 = vpop.f32.mrb[0].mxu0
      %v1140 = vpop.f32.mrb[0].mxu0
      %v1141 = vadd.f32 %v849, %v1140
      %v1142 = vpop.f32.mrb[0].mxu0
      %1143 = vmatprep.mubr.bf16.mxu0 0
      %1144 = vmatmul.mubr.bf16.gmra.mrb[0].mxu0 %v1001
      %v1145 = vpop.f32.mrb[0].mxu0
      %v1146 = vadd.f32 %v854, %v1145
      %v1147 = vpop.f32.mrb[0].mxu0
      %v1148 = vpop.f32.mrb[0].mxu0
      %v1149 = vadd.f32 %v857, %v1148
      %v1150 = vpop.f32.mrb[0].mxu0
      %1151 = vmatprep.mubr.bf16.mxu0 0
      %1152 = vmatmul.mubr.bf16.gmra.mrb[0].mxu0 %v1004
      %v1153 = vpop.f32.mrb[0].mxu0
      %v1154 = vadd.f32 %v862, %v1153
      %v1155 = vpop.f32.mrb[0].mxu0
      %v1156 = vpop.f32.mrb[0].mxu0
      %v1157 = vadd.f32 %v865, %v1156
      %v1158 = vpop.f32.mrb[0].mxu0
      %1159 = vmatprep.mubr.bf16.mxu0 0
      %1160 = vmatmul.mubr.bf16.gmra.mrb[0].mxu0 %v1007
      %v1161 = vpop.f32.mrb[0].mxu0
      %v1162 = vadd.f32 %v870, %v1161
      %v1163 = vpop.f32.mrb[0].mxu0
      %v1164 = vpop.f32.mrb[0].mxu0
      %v1165 = vadd.f32 %v873, %v1164
      %v1166 = vpop.f32.mrb[0].mxu0
      %1167 = vmatprep.mubr.bf16.mxu0 0
      %1168 = vmatmul.mubr.bf16.gmra.mrb[0].mxu0 %v1010
      %v1169 = vpop.f32.mrb[0].mxu0
      %v1170 = vadd.f32 %v878, %v1169
      %v1171 = vpop.f32.mrb[0].mxu0
      %v1172 = vpop.f32.mrb[0].mxu0
      %v1173 = vadd.f32 %v881, %v1172
      %v1174 = vpop.f32.mrb[0].mxu0
      %1175 = vdwg.mxu0
      %v1176 = vld [vmem:[%s172] sm:$0xe]
      %v1177 = vld [vmem:[%s172 + $0xc] sm:$0xe]
      %v1178 = vld [vmem:[%s172 + $0x18] sm:$0xe]
      %v1179 = vld [vmem:[%s172 + $0x24] sm:$0xe]
      %v1180 = vld [vmem:[%s172 + $0x30] sm:$0xe]
      %v1181 = vld [vmem:[%s172 + $0x3c] sm:$0xe]
      %v1182 = vld [vmem:[%s172 + $0x48] sm:$0xe]
      %v1183 = vld [vmem:[%s172 + $0x54] sm:$0xe]
      %v1184 = vld [vmem:[%s172 + $0x60] sm:$0xe]
      %v1185 = vld [vmem:[%s172 + $0x6c] sm:$0xe]
      %v1186 = vld [vmem:[%s172 + $0x78] sm:$0xe]
      %v1187 = vld [vmem:[%s172 + $0x84] sm:$0xe]
      %v1188 = vld [vmem:[%s172 + $0x90] sm:$0xe]
      %v1189 = vld [vmem:[%s172 + $0x9c] sm:$0xe]
      %v1190 = vld [vmem:[%s172 + $0xa8] sm:$0xe]
      %v1191 = vld [vmem:[%s172 + $0xb4] sm:$0xe]
      %vm1224 = vcmask 1042432
      %vm1225 = vcmask 1046532
      %vm1226 = vmor %vm1224, %vm1225
      %v1227 = vrot.slane %v1176, 5
      %v1228 = vrot.slane %v1227, 4
      %v1229 = vrot.slane %v185, 5
      %v1230 = vsel %vm1226, %v1228, %v1229
      %v1231 = vrot.slane %v1229, 4
      %v1232 = vrot.slane %v217, 5
      %v1233 = vsel %vm1226, %v1231, %v1232
      %v1234 = vrot.slane %v1177, 5
      %v1235 = vrot.slane %v1234, 4
      %v1236 = vrot.slane %v187, 5
      %v1237 = vsel %vm1226, %v1235, %v1236
      %v1238 = vrot.slane %v1236, 4
      %v1239 = vrot.slane %v218, 5
      %v1240 = vsel %vm1226, %v1238, %v1239
      %v1241 = vrot.slane %v1178, 5
      %v1242 = vrot.slane %v1241, 4
      %v1243 = vrot.slane %v189, 5
      %v1244 = vsel %vm1226, %v1242, %v1243
      %v1245 = vrot.slane %v1243, 4
      %v1246 = vrot.slane %v219, 5
      %v1247 = vsel %vm1226, %v1245, %v1246
      %v1248 = vrot.slane %v1179, 5
      %v1249 = vrot.slane %v1248, 4
      %v1250 = vrot.slane %v191, 5
      %v1251 = vsel %vm1226, %v1249, %v1250
      %v1252 = vrot.slane %v1250, 4
      %v1253 = vrot.slane %v220, 5
      %v1254 = vsel %vm1226, %v1252, %v1253
      %v1255 = vrot.slane %v1180, 5
      %v1256 = vrot.slane %v1255, 4
      %v1257 = vrot.slane %v193, 5
      %v1258 = vsel %vm1226, %v1256, %v1257
      %v1259 = vrot.slane %v1257, 4
      %v1260 = vrot.slane %v221, 5
      %v1261 = vsel %vm1226, %v1259, %v1260
      %v1262 = vrot.slane %v1181, 5
      %v1263 = vrot.slane %v1262, 4
      %v1264 = vrot.slane %v195, 5
      %v1265 = vsel %vm1226, %v1263, %v1264
      %v1266 = vrot.slane %v1264, 4
      %v1267 = vrot.slane %v222, 5
      %v1268 = vsel %vm1226, %v1266, %v1267
      %v1269 = vrot.slane %v1182, 5
      %v1270 = vrot.slane %v1269, 4
      %v1271 = vrot.slane %v197, 5
      %v1272 = vsel %vm1226, %v1270, %v1271
      %v1273 = vrot.slane %v1271, 4
      %v1274 = vrot.slane %v223, 5
      %v1275 = vsel %vm1226, %v1273, %v1274
      %v1276 = vrot.slane %v1183, 5
      %v1277 = vrot.slane %v1276, 4
      %v1278 = vrot.slane %v199, 5
      %v1279 = vsel %vm1226, %v1277, %v1278
      %v1280 = vrot.slane %v1278, 4
      %v1281 = vrot.slane %v224, 5
      %v1282 = vsel %vm1226, %v1280, %v1281
      %v1283 = vrot.slane %v1184, 5
      %v1284 = vrot.slane %v1283, 4
      %v1285 = vrot.slane %v201, 5
      %v1286 = vsel %vm1226, %v1284, %v1285
      %v1287 = vrot.slane %v1285, 4
      %v1288 = vrot.slane %v225, 5
      %v1289 = vsel %vm1226, %v1287, %v1288
      %v1290 = vrot.slane %v1185, 5
      %v1291 = vrot.slane %v1290, 4
      %v1292 = vrot.slane %v203, 5
      %v1293 = vsel %vm1226, %v1291, %v1292
      %v1294 = vrot.slane %v1292, 4
      %v1295 = vrot.slane %v226, 5
      %v1296 = vsel %vm1226, %v1294, %v1295
      %v1297 = vrot.slane %v1186, 5
      %v1298 = vrot.slane %v1297, 4
      %v1299 = vrot.slane %v205, 5
      %v1300 = vsel %vm1226, %v1298, %v1299
      %v1301 = vrot.slane %v1299, 4
      %v1302 = vrot.slane %v227, 5
      %v1303 = vsel %vm1226, %v1301, %v1302
      %v1304 = vrot.slane %v1187, 5
      %v1305 = vrot.slane %v1304, 4
      %v1306 = vrot.slane %v207, 5
      %v1307 = vsel %vm1226, %v1305, %v1306
      %v1308 = vrot.slane %v1306, 4
      %v1309 = vrot.slane %v228, 5
      %v1310 = vsel %vm1226, %v1308, %v1309
      %v1311 = vrot.slane %v1188, 5
      %v1312 = vrot.slane %v1311, 4
      %v1313 = vrot.slane %v209, 5
      %v1314 = vsel %vm1226, %v1312, %v1313
      %v1315 = vrot.slane %v1313, 4
      %v1316 = vrot.slane %v229, 5
      %v1317 = vsel %vm1226, %v1315, %v1316
      %v1318 = vrot.slane %v1189, 5
      %v1319 = vrot.slane %v1318, 4
      %v1320 = vrot.slane %v211, 5
      %v1321 = vsel %vm1226, %v1319, %v1320
      %v1322 = vrot.slane %v1320, 4
      %v1323 = vrot.slane %v230, 5
      %v1324 = vsel %vm1226, %v1322, %v1323
      %v1325 = vrot.slane %v1190, 5
      %v1326 = vrot.slane %v1325, 4
      %v1327 = vrot.slane %v213, 5
      %v1328 = vsel %vm1226, %v1326, %v1327
      %v1329 = vrot.slane %v1327, 4
      %v1330 = vrot.slane %v231, 5
      %v1331 = vsel %vm1226, %v1329, %v1330
      %v1332 = vrot.slane %v1191, 5
      %v1333 = vrot.slane %v1332, 4
      %v1334 = vrot.slane %v215, 5
      %v1335 = vsel %vm1226, %v1333, %v1334
      %v1336 = vrot.slane %v1334, 4
      %v1337 = vrot.slane %v232, 5
      %v1338 = vsel %vm1226, %v1336, %v1337
      %s1339 = scalar_lea.vmem %s1, 8
      %v1340 = vld [vmem:[%s1339] sm:$0xf]
      %v1341 = vunpack.c.l.b16 %v1230
      %v1342 = vunpack.c.l.b16 %v1233
      %v1343 = vunpack.c.l.b16 %v1237
      %v1344 = vunpack.c.l.b16 %v1240
      %v1345 = vunpack.c.l.b16 %v1244
      %v1346 = vunpack.c.l.b16 %v1247
      %v1347 = vunpack.c.l.b16 %v1251
      %v1348 = vunpack.c.l.b16 %v1254
      %v1349 = vunpack.c.l.b16 %v1258
      %v1350 = vunpack.c.l.b16 %v1261
      %v1351 = vunpack.c.l.b16 %v1265
      %v1352 = vunpack.c.l.b16 %v1268
      %v1353 = vunpack.c.l.b16 %v1272
      %v1354 = vunpack.c.l.b16 %v1275
      %v1355 = vunpack.c.l.b16 %v1279
      %v1356 = vunpack.c.l.b16 %v1282
      %v1357 = vunpack.c.l.b16 %v1286
      %v1358 = vunpack.c.l.b16 %v1289
      %v1359 = vunpack.c.l.b16 %v1293
      %v1360 = vunpack.c.l.b16 %v1296
      %v1361 = vunpack.c.l.b16 %v1300
      %v1362 = vunpack.c.l.b16 %v1303
      %v1363 = vunpack.c.l.b16 %v1307
      %v1364 = vunpack.c.l.b16 %v1310
      %v1365 = vunpack.c.l.b16 %v1314
      %v1366 = vunpack.c.l.b16 %v1317
      %v1367 = vunpack.c.l.b16 %v1321
      %v1368 = vunpack.c.l.b16 %v1324
      %v1369 = vunpack.c.l.b16 %v1328
      %v1370 = vunpack.c.l.b16 %v1331
      %v1371 = vunpack.c.l.b16 %v1335
      %v1372 = vunpack.c.l.b16 %v1338
      %v1373 = vpack.c.b16 %v1342, %v1341
      %v1374 = vpack.c.b16 %v1344, %v1343
      %v1375 = vpack.c.b16 %v1346, %v1345
      %v1376 = vpack.c.b16 %v1348, %v1347
      %v1377 = vpack.c.b16 %v1350, %v1349
      %v1378 = vpack.c.b16 %v1352, %v1351
      %v1379 = vpack.c.b16 %v1354, %v1353
      %v1380 = vpack.c.b16 %v1356, %v1355
      %v1381 = vpack.c.b16 %v1358, %v1357
      %v1382 = vpack.c.b16 %v1360, %v1359
      %v1383 = vpack.c.b16 %v1362, %v1361
      %v1384 = vpack.c.b16 %v1364, %v1363
      %v1385 = vpack.c.b16 %v1366, %v1365
      %v1386 = vpack.c.b16 %v1368, %v1367
      %v1387 = vpack.c.b16 %v1370, %v1369
      %v1388 = vpack.c.b16 %v1372, %v1371
      %v1390 = vsel %vm670, %v1373, 0
      %v1393 = vsel %vm670, %v1374, 0
      %v1396 = vsel %vm670, %v1375, 0
      %v1399 = vsel %vm670, %v1376, 0
      %v1402 = vsel %vm670, %v1377, 0
      %v1405 = vsel %vm670, %v1378, 0
      %v1408 = vsel %vm670, %v1379, 0
      %v1411 = vsel %vm670, %v1380, 0
      %v1414 = vsel %vm670, %v1381, 0
      %v1417 = vsel %vm670, %v1382, 0
      %v1420 = vsel %vm670, %v1383, 0
      %v1423 = vsel %vm670, %v1384, 0
      %v1426 = vsel %vm670, %v1385, 0
      %v1429 = vsel %vm670, %v1386, 0
      %v1432 = vsel %vm670, %v1387, 0
      %v1435 = vsel %vm670, %v1388, 0
      %v1438 = vsel %vm719, %v1340, 0
      %1440 = vmatprep.subr.bf16.mxu0 0
      %1441 = vmatpush1.bf16.msra.mxu0 %v1438
      %1442 = vmatprep.subr.bf16.mxu0 0
      %1443 = vmatpush1.bf16.msra.mxu0 0
      %1444 = vmatprep.subr.bf16.mxu0 0
      %1445 = vmatpush1.bf16.msra.mxu0 0
      %1446 = vmatprep.subr.bf16.mxu0 0
      %1447 = vmatpush1.bf16.msra.mxu0 0
      %1448 = vmatprep.subr.bf16.mxu0 0
      %1449 = vmatpush1.bf16.msra.mxu0 0
      %1450 = vmatprep.subr.bf16.mxu0 0
      %1451 = vmatpush1.bf16.msra.mxu0 0
      %1452 = vmatprep.subr.bf16.mxu0 0
      %1453 = vmatpush1.bf16.msra.mxu0 0
      %1454 = vmatprep.subr.bf16.mxu0 0
      %1455 = vmatpush1.bf16.msra.mxu0 0
      %1456 = vmatprep.subr.bf16.mxu0 0
      %1457 = vmatpush1.bf16.msra.mxu0 0
      %1458 = vmatprep.subr.bf16.mxu0 0
      %1459 = vmatpush1.bf16.msra.mxu0 0
      %1460 = vmatprep.subr.bf16.mxu0 0
      %1461 = vmatpush1.bf16.msra.mxu0 0
      %1462 = vmatprep.subr.bf16.mxu0 0
      %1463 = vmatpush1.bf16.msra.mxu0 0
      %1464 = vmatprep.subr.bf16.mxu0 0
      %1465 = vmatpush1.bf16.msra.mxu0 0
      %1466 = vmatprep.subr.bf16.mxu0 0
      %1467 = vmatpush1.bf16.msra.mxu0 0
      %1468 = vmatprep.subr.bf16.mxu0 0
      %1469 = vmatpush1.bf16.msra.mxu0 0
      %1470 = vmatprep.subr.bf16.mxu0 0
      %1471 = vmatpush1.bf16.msra.mxu0 0
      %1472 = vmatprep.mubr.bf16.mxu0 0
      %1473 = vmatmul.mubr.bf16.gmra.mrb[0].mxu0 %v1390
      %v1474 = vpop.f32.mrb[0].mxu0
      %v1475 = vadd.f32 0.0, %v1474
      %v1476 = vpop.f32.mrb[0].mxu0
      %v1477 = vpop.f32.mrb[0].mxu0
      %v1478 = vadd.f32 0.0, %v1477
      %v1479 = vpop.f32.mrb[0].mxu0
      %1480 = vmatprep.mubr.bf16.mxu0 0
      %1481 = vmatmul.mubr.bf16.gmra.mrb[0].mxu0 %v1393
      %v1482 = vpop.f32.mrb[0].mxu0
      %v1483 = vadd.f32 0.0, %v1482
      %v1484 = vpop.f32.mrb[0].mxu0
      %v1485 = vpop.f32.mrb[0].mxu0
      %v1486 = vadd.f32 0.0, %v1485
      %v1487 = vpop.f32.mrb[0].mxu0
      %1488 = vmatprep.mubr.bf16.mxu0 0
      %1489 = vmatmul.mubr.bf16.gmra.mrb[0].mxu0 %v1396
      %v1490 = vpop.f32.mrb[0].mxu0
      %v1491 = vadd.f32 0.0, %v1490
      %v1492 = vpop.f32.mrb[0].mxu0
      %v1493 = vpop.f32.mrb[0].mxu0
      %v1494 = vadd.f32 0.0, %v1493
      %v1495 = vpop.f32.mrb[0].mxu0
      %1496 = vmatprep.mubr.bf16.mxu0 0
      %1497 = vmatmul.mubr.bf16.gmra.mrb[0].mxu0 %v1399
      %v1498 = vpop.f32.mrb[0].mxu0
      %v1499 = vadd.f32 0.0, %v1498
      %v1500 = vpop.f32.mrb[0].mxu0
      %v1501 = vpop.f32.mrb[0].mxu0
      %v1502 = vadd.f32 0.0, %v1501
      %v1503 = vpop.f32.mrb[0].mxu0
      %1504 = vmatprep.mubr.bf16.mxu0 0
      %1505 = vmatmul.mubr.bf16.gmra.mrb[0].mxu0 %v1402
      %v1506 = vpop.f32.mrb[0].mxu0
      %v1507 = vadd.f32 0.0, %v1506
      %v1508 = vpop.f32.mrb[0].mxu0
      %v1509 = vpop.f32.mrb[0].mxu0
      %v1510 = vadd.f32 0.0, %v1509
      %v1511 = vpop.f32.mrb[0].mxu0
      %1512 = vmatprep.mubr.bf16.mxu0 0
      %1513 = vmatmul.mubr.bf16.gmra.mrb[0].mxu0 %v1405
      %v1514 = vpop.f32.mrb[0].mxu0
      %v1515 = vadd.f32 0.0, %v1514
      %v1516 = vpop.f32.mrb[0].mxu0
      %v1517 = vpop.f32.mrb[0].mxu0
      %v1518 = vadd.f32 0.0, %v1517
      %v1519 = vpop.f32.mrb[0].mxu0
      %1520 = vmatprep.mubr.bf16.mxu0 0
      %1521 = vmatmul.mubr.bf16.gmra.mrb[0].mxu0 %v1408
      %v1522 = vpop.f32.mrb[0].mxu0
      %v1523 = vadd.f32 0.0, %v1522
      %v1524 = vpop.f32.mrb[0].mxu0
      %v1525 = vpop.f32.mrb[0].mxu0
      %v1526 = vadd.f32 0.0, %v1525
      %v1527 = vpop.f32.mrb[0].mxu0
      %1528 = vmatprep.mubr.bf16.mxu0 0
      %1529 = vmatmul.mubr.bf16.gmra.mrb[0].mxu0 %v1411
      %v1530 = vpop.f32.mrb[0].mxu0
      %v1531 = vadd.f32 0.0, %v1530
      %v1532 = vpop.f32.mrb[0].mxu0
      %v1533 = vpop.f32.mrb[0].mxu0
      %v1534 = vadd.f32 0.0, %v1533
      %v1535 = vpop.f32.mrb[0].mxu0
      %1536 = vmatprep.mubr.bf16.mxu0 0
      %1537 = vmatmul.mubr.bf16.gmra.mrb[0].mxu0 %v1414
      %v1538 = vpop.f32.mrb[0].mxu0
      %v1539 = vadd.f32 0.0, %v1538
      %v1540 = vpop.f32.mrb[0].mxu0
      %v1541 = vpop.f32.mrb[0].mxu0
      %v1542 = vadd.f32 0.0, %v1541
      %v1543 = vpop.f32.mrb[0].mxu0
      %1544 = vmatprep.mubr.bf16.mxu0 0
      %1545 = vmatmul.mubr.bf16.gmra.mrb[0].mxu0 %v1417
      %v1546 = vpop.f32.mrb[0].mxu0
      %v1547 = vadd.f32 0.0, %v1546
      %v1548 = vpop.f32.mrb[0].mxu0
      %v1549 = vpop.f32.mrb[0].mxu0
      %v1550 = vadd.f32 0.0, %v1549
      %v1551 = vpop.f32.mrb[0].mxu0
      %1552 = vmatprep.mubr.bf16.mxu0 0
      %1553 = vmatmul.mubr.bf16.gmra.mrb[0].mxu0 %v1420
      %v1554 = vpop.f32.mrb[0].mxu0
      %v1555 = vadd.f32 0.0, %v1554
      %v1556 = vpop.f32.mrb[0].mxu0
      %v1557 = vpop.f32.mrb[0].mxu0
      %v1558 = vadd.f32 0.0, %v1557
      %v1559 = vpop.f32.mrb[0].mxu0
      %1560 = vmatprep.mubr.bf16.mxu0 0
      %1561 = vmatmul.mubr.bf16.gmra.mrb[0].mxu0 %v1423
      %v1562 = vpop.f32.mrb[0].mxu0
      %v1563 = vadd.f32 0.0, %v1562
      %v1564 = vpop.f32.mrb[0].mxu0
      %v1565 = vpop.f32.mrb[0].mxu0
      %v1566 = vadd.f32 0.0, %v1565
      %v1567 = vpop.f32.mrb[0].mxu0
      %1568 = vmatprep.mubr.bf16.mxu0 0
      %1569 = vmatmul.mubr.bf16.gmra.mrb[0].mxu0 %v1426
      %v1570 = vpop.f32.mrb[0].mxu0
      %v1571 = vadd.f32 0.0, %v1570
      %v1572 = vpop.f32.mrb[0].mxu0
      %v1573 = vpop.f32.mrb[0].mxu0
      %v1574 = vadd.f32 0.0, %v1573
      %v1575 = vpop.f32.mrb[0].mxu0
      %1576 = vmatprep.mubr.bf16.mxu0 0
      %1577 = vmatmul.mubr.bf16.gmra.mrb[0].mxu0 %v1429
      %v1578 = vpop.f32.mrb[0].mxu0
      %v1579 = vadd.f32 0.0, %v1578
      %v1580 = vpop.f32.mrb[0].mxu0
      %v1581 = vpop.f32.mrb[0].mxu0
      %v1582 = vadd.f32 0.0, %v1581
      %v1583 = vpop.f32.mrb[0].mxu0
      %1584 = vmatprep.mubr.bf16.mxu0 0
      %1585 = vmatmul.mubr.bf16.gmra.mrb[0].mxu0 %v1432
      %v1586 = vpop.f32.mrb[0].mxu0
      %v1587 = vadd.f32 0.0, %v1586
      %v1588 = vpop.f32.mrb[0].mxu0
      %v1589 = vpop.f32.mrb[0].mxu0
      %v1590 = vadd.f32 0.0, %v1589
      %v1591 = vpop.f32.mrb[0].mxu0
      %1592 = vmatprep.mubr.bf16.mxu0 0
      %1593 = vmatmul.mubr.bf16.gmra.mrb[0].mxu0 %v1435
      %v1594 = vpop.f32.mrb[0].mxu0
      %v1595 = vadd.f32 0.0, %v1594
      %v1596 = vpop.f32.mrb[0].mxu0
      %v1597 = vpop.f32.mrb[0].mxu0
      %v1598 = vadd.f32 0.0, %v1597
      %v1599 = vpop.f32.mrb[0].mxu0
      %1600 = vdwg.mxu0
      %v1601 = vadd.f32 %v1050, %v1475
      %v1602 = vadd.f32 %v1053, %v1478
      %v1603 = vadd.f32 %v1058, %v1483
      %v1604 = vadd.f32 %v1061, %v1486
      %v1605 = vadd.f32 %v1066, %v1491
      %v1606 = vadd.f32 %v1069, %v1494
      %v1607 = vadd.f32 %v1074, %v1499
      %v1608 = vadd.f32 %v1077, %v1502
      %v1609 = vadd.f32 %v1082, %v1507
      %v1610 = vadd.f32 %v1085, %v1510
      %v1611 = vadd.f32 %v1090, %v1515
      %v1612 = vadd.f32 %v1093, %v1518
      %v1613 = vadd.f32 %v1098, %v1523
      %v1614 = vadd.f32 %v1101, %v1526
      %v1615 = vadd.f32 %v1106, %v1531
      %v1616 = vadd.f32 %v1109, %v1534
      %v1617 = vadd.f32 %v1114, %v1539
      %v1618 = vadd.f32 %v1117, %v1542
      %v1619 = vadd.f32 %v1122, %v1547
      %v1620 = vadd.f32 %v1125, %v1550
      %v1621 = vadd.f32 %v1130, %v1555
      %v1622 = vadd.f32 %v1133, %v1558
      %v1623 = vadd.f32 %v1138, %v1563
      %v1624 = vadd.f32 %v1141, %v1566
      %v1625 = vadd.f32 %v1146, %v1571
      %v1626 = vadd.f32 %v1149, %v1574
      %v1627 = vadd.f32 %v1154, %v1579
      %v1628 = vadd.f32 %v1157, %v1582
      %v1629 = vadd.f32 %v1162, %v1587
      %v1630 = vadd.f32 %v1165, %v1590
      %v1631 = vadd.f32 %v1170, %v1595
      %v1632 = vadd.f32 %v1173, %v1598
      %s1633 = scalar_lea.vmem %s172, 12
      %v1634 = vld [vmem:[%s1633] sm:$0xf]
      %v1635 = vld [vmem:[%s1633 + $0x4] sm:$0xf]
      %v1636 = vld [vmem:[%s1633 + $0xc] sm:$0xf]
      %v1637 = vld [vmem:[%s1633 + $0x10] sm:$0xf]
      %v1638 = vld [vmem:[%s1633 + $0x18] sm:$0xf]
      %v1639 = vld [vmem:[%s1633 + $0x1c] sm:$0xf]
      %v1640 = vld [vmem:[%s1633 + $0x24] sm:$0xf]
      %v1641 = vld [vmem:[%s1633 + $0x28] sm:$0xf]
      %v1642 = vld [vmem:[%s1633 + $0x30] sm:$0xf]
      %v1643 = vld [vmem:[%s1633 + $0x34] sm:$0xf]
      %v1644 = vld [vmem:[%s1633 + $0x3c] sm:$0xf]
      %v1645 = vld [vmem:[%s1633 + $0x40] sm:$0xf]
      %v1646 = vld [vmem:[%s1633 + $0x48] sm:$0xf]
      %v1647 = vld [vmem:[%s1633 + $0x4c] sm:$0xf]
      %v1648 = vld [vmem:[%s1633 + $0x54] sm:$0xf]
      %v1649 = vld [vmem:[%s1633 + $0x58] sm:$0xf]
      %v1650 = vld [vmem:[%s1633 + $0x60] sm:$0xf]
      %v1651 = vld [vmem:[%s1633 + $0x64] sm:$0xf]
      %v1652 = vld [vmem:[%s1633 + $0x6c] sm:$0xf]
      %v1653 = vld [vmem:[%s1633 + $0x70] sm:$0xf]
      %v1654 = vld [vmem:[%s1633 + $0x78] sm:$0xf]
      %v1655 = vld [vmem:[%s1633 + $0x7c] sm:$0xf]
      %v1656 = vld [vmem:[%s1633 + $0x84] sm:$0xf]
      %v1657 = vld [vmem:[%s1633 + $0x88] sm:$0xf]
      %v1658 = vld [vmem:[%s1633 + $0x90] sm:$0xf]
      %v1659 = vld [vmem:[%s1633 + $0x94] sm:$0xf]
      %v1660 = vld [vmem:[%s1633 + $0x9c] sm:$0xf]
      %v1661 = vld [vmem:[%s1633 + $0xa0] sm:$0xf]
      %v1662 = vld [vmem:[%s1633 + $0xa8] sm:$0xf]
      %v1663 = vld [vmem:[%s1633 + $0xac] sm:$0xf]
      %v1664 = vld [vmem:[%s1633 + $0xb4] sm:$0xf]
      %v1665 = vld [vmem:[%s1633 + $0xb8] sm:$0xf]
      %s1666 = scalar_lea.vmem %s1, 12
      %v1667 = vld [vmem:[%s1666] sm:$0xf]
      %v1700 = vunpack.c.l.b16 %v1634
      %v1701 = vunpack.c.l.b16 %v1635
      %v1702 = vunpack.c.l.b16 %v1636
      %v1703 = vunpack.c.l.b16 %v1637
      %v1704 = vunpack.c.l.b16 %v1638
      %v1705 = vunpack.c.l.b16 %v1639
      %v1706 = vunpack.c.l.b16 %v1640
      %v1707 = vunpack.c.l.b16 %v1641
      %v1708 = vunpack.c.l.b16 %v1642
      %v1709 = vunpack.c.l.b16 %v1643
      %v1710 = vunpack.c.l.b16 %v1644
      %v1711 = vunpack.c.l.b16 %v1645
      %v1712 = vunpack.c.l.b16 %v1646
      %v1713 = vunpack.c.l.b16 %v1647
      %v1714 = vunpack.c.l.b16 %v1648
      %v1715 = vunpack.c.l.b16 %v1649
      %v1716 = vunpack.c.l.b16 %v1650
      %v1717 = vunpack.c.l.b16 %v1651
      %v1718 = vunpack.c.l.b16 %v1652
      %v1719 = vunpack.c.l.b16 %v1653
      %v1720 = vunpack.c.l.b16 %v1654
      %v1721 = vunpack.c.l.b16 %v1655
      %v1722 = vunpack.c.l.b16 %v1656
      %v1723 = vunpack.c.l.b16 %v1657
      %v1724 = vunpack.c.l.b16 %v1658
      %v1725 = vunpack.c.l.b16 %v1659
      %v1726 = vunpack.c.l.b16 %v1660
      %v1727 = vunpack.c.l.b16 %v1661
      %v1728 = vunpack.c.l.b16 %v1662
      %v1729 = vunpack.c.l.b16 %v1663
      %v1730 = vunpack.c.l.b16 %v1664
      %v1731 = vunpack.c.l.b16 %v1665
      %v1732 = vpack.c.b16 %v1701, %v1700
      %v1733 = vpack.c.b16 %v1703, %v1702
      %v1734 = vpack.c.b16 %v1705, %v1704
      %v1735 = vpack.c.b16 %v1707, %v1706
      %v1736 = vpack.c.b16 %v1709, %v1708
      %v1737 = vpack.c.b16 %v1711, %v1710
      %v1738 = vpack.c.b16 %v1713, %v1712
      %v1739 = vpack.c.b16 %v1715, %v1714
      %v1740 = vpack.c.b16 %v1717, %v1716
      %v1741 = vpack.c.b16 %v1719, %v1718
      %v1742 = vpack.c.b16 %v1721, %v1720
      %v1743 = vpack.c.b16 %v1723, %v1722
      %v1744 = vpack.c.b16 %v1725, %v1724
      %v1745 = vpack.c.b16 %v1727, %v1726
      %v1746 = vpack.c.b16 %v1729, %v1728
      %v1747 = vpack.c.b16 %v1731, %v1730
      %v1749 = vsel %vm670, %v1732, 0
      %v1752 = vsel %vm670, %v1733, 0
      %v1755 = vsel %vm670, %v1734, 0
      %v1758 = vsel %vm670, %v1735, 0
      %v1761 = vsel %vm670, %v1736, 0
      %v1764 = vsel %vm670, %v1737, 0
      %v1767 = vsel %vm670, %v1738, 0
      %v1770 = vsel %vm670, %v1739, 0
      %v1773 = vsel %vm670, %v1740, 0
      %v1776 = vsel %vm670, %v1741, 0
      %v1779 = vsel %vm670, %v1742, 0
      %v1782 = vsel %vm670, %v1743, 0
      %v1785 = vsel %vm670, %v1744, 0
      %v1788 = vsel %vm670, %v1745, 0
      %v1791 = vsel %vm670, %v1746, 0
      %v1794 = vsel %vm670, %v1747, 0
      %v1797 = vsel %vm719, %v1667, 0
      %1799 = vmatprep.subr.bf16.mxu0 0
      %1800 = vmatpush1.bf16.msra.mxu0 %v1797
      %1801 = vmatprep.subr.bf16.mxu0 0
      %1802 = vmatpush1.bf16.msra.mxu0 0
      %1803 = vmatprep.subr.bf16.mxu0 0
      %1804 = vmatpush1.bf16.msra.mxu0 0
      %1805 = vmatprep.subr.bf16.mxu0 0
      %1806 = vmatpush1.bf16.msra.mxu0 0
      %1807 = vmatprep.subr.bf16.mxu0 0
      %1808 = vmatpush1.bf16.msra.mxu0 0
      %1809 = vmatprep.subr.bf16.mxu0 0
      %1810 = vmatpush1.bf16.msra.mxu0 0
      %1811 = vmatprep.subr.bf16.mxu0 0
      %1812 = vmatpush1.bf16.msra.mxu0 0
      %1813 = vmatprep.subr.bf16.mxu0 0
      %1814 = vmatpush1.bf16.msra.mxu0 0
      %1815 = vmatprep.subr.bf16.mxu0 0
      %1816 = vmatpush1.bf16.msra.mxu0 0
      %1817 = vmatprep.subr.bf16.mxu0 0
      %1818 = vmatpush1.bf16.msra.mxu0 0
      %1819 = vmatprep.subr.bf16.mxu0 0
      %1820 = vmatpush1.bf16.msra.mxu0 0
      %1821 = vmatprep.subr.bf16.mxu0 0
      %1822 = vmatpush1.bf16.msra.mxu0 0
      %1823 = vmatprep.subr.bf16.mxu0 0
      %1824 = vmatpush1.bf16.msra.mxu0 0
      %1825 = vmatprep.subr.bf16.mxu0 0
      %1826 = vmatpush1.bf16.msra.mxu0 0
      %1827 = vmatprep.subr.bf16.mxu0 0
      %1828 = vmatpush1.bf16.msra.mxu0 0
      %1829 = vmatprep.subr.bf16.mxu0 0
      %1830 = vmatpush1.bf16.msra.mxu0 0
      %1831 = vmatprep.mubr.bf16.mxu0 0
      %1832 = vmatmul.mubr.bf16.gmra.mrb[0].mxu0 %v1749
      %v1833 = vpop.f32.mrb[0].mxu0
      %v1834 = vadd.f32 0.0, %v1833
      %v1835 = vpop.f32.mrb[0].mxu0
      %v1836 = vpop.f32.mrb[0].mxu0
      %v1837 = vadd.f32 0.0, %v1836
      %v1838 = vpop.f32.mrb[0].mxu0
      %1839 = vmatprep.mubr.bf16.mxu0 0
      %1840 = vmatmul.mubr.bf16.gmra.mrb[0].mxu0 %v1752
      %v1841 = vpop.f32.mrb[0].mxu0
      %v1842 = vadd.f32 0.0, %v1841
      %v1843 = vpop.f32.mrb[0].mxu0
      %v1844 = vpop.f32.mrb[0].mxu0
      %v1845 = vadd.f32 0.0, %v1844
      %v1846 = vpop.f32.mrb[0].mxu0
      %1847 = vmatprep.mubr.bf16.mxu0 0
      %1848 = vmatmul.mubr.bf16.gmra.mrb[0].mxu0 %v1755
      %v1849 = vpop.f32.mrb[0].mxu0
      %v1850 = vadd.f32 0.0, %v1849
      %v1851 = vpop.f32.mrb[0].mxu0
      %v1852 = vpop.f32.mrb[0].mxu0
      %v1853 = vadd.f32 0.0, %v1852
      %v1854 = vpop.f32.mrb[0].mxu0
      %1855 = vmatprep.mubr.bf16.mxu0 0
      %1856 = vmatmul.mubr.bf16.gmra.mrb[0].mxu0 %v1758
      %v1857 = vpop.f32.mrb[0].mxu0
      %v1858 = vadd.f32 0.0, %v1857
      %v1859 = vpop.f32.mrb[0].mxu0
      %v1860 = vpop.f32.mrb[0].mxu0
      %v1861 = vadd.f32 0.0, %v1860
      %v1862 = vpop.f32.mrb[0].mxu0
      %1863 = vmatprep.mubr.bf16.mxu0 0
      %1864 = vmatmul.mubr.bf16.gmra.mrb[0].mxu0 %v1761
      %v1865 = vpop.f32.mrb[0].mxu0
      %v1866 = vadd.f32 0.0, %v1865
      %v1867 = vpop.f32.mrb[0].mxu0
      %v1868 = vpop.f32.mrb[0].mxu0
      %v1869 = vadd.f32 0.0, %v1868
      %v1870 = vpop.f32.mrb[0].mxu0
      %1871 = vmatprep.mubr.bf16.mxu0 0
      %1872 = vmatmul.mubr.bf16.gmra.mrb[0].mxu0 %v1764
      %v1873 = vpop.f32.mrb[0].mxu0
      %v1874 = vadd.f32 0.0, %v1873
      %v1875 = vpop.f32.mrb[0].mxu0
      %v1876 = vpop.f32.mrb[0].mxu0
      %v1877 = vadd.f32 0.0, %v1876
      %v1878 = vpop.f32.mrb[0].mxu0
      %1879 = vmatprep.mubr.bf16.mxu0 0
      %1880 = vmatmul.mubr.bf16.gmra.mrb[0].mxu0 %v1767
      %v1881 = vpop.f32.mrb[0].mxu0
      %v1882 = vadd.f32 0.0, %v1881
      %v1883 = vpop.f32.mrb[0].mxu0
      %v1884 = vpop.f32.mrb[0].mxu0
      %v1885 = vadd.f32 0.0, %v1884
      %v1886 = vpop.f32.mrb[0].mxu0
      %1887 = vmatprep.mubr.bf16.mxu0 0
      %1888 = vmatmul.mubr.bf16.gmra.mrb[0].mxu0 %v1770
      %v1889 = vpop.f32.mrb[0].mxu0
      %v1890 = vadd.f32 0.0, %v1889
      %v1891 = vpop.f32.mrb[0].mxu0
      %v1892 = vpop.f32.mrb[0].mxu0
      %v1893 = vadd.f32 0.0, %v1892
      %v1894 = vpop.f32.mrb[0].mxu0
      %1895 = vmatprep.mubr.bf16.mxu0 0
      %1896 = vmatmul.mubr.bf16.gmra.mrb[0].mxu0 %v1773
      %v1897 = vpop.f32.mrb[0].mxu0
      %v1898 = vadd.f32 0.0, %v1897
      %v1899 = vpop.f32.mrb[0].mxu0
      %v1900 = vpop.f32.mrb[0].mxu0
      %v1901 = vadd.f32 0.0, %v1900
      %v1902 = vpop.f32.mrb[0].mxu0
      %1903 = vmatprep.mubr.bf16.mxu0 0
      %1904 = vmatmul.mubr.bf16.gmra.mrb[0].mxu0 %v1776
      %v1905 = vpop.f32.mrb[0].mxu0
      %v1906 = vadd.f32 0.0, %v1905
      %v1907 = vpop.f32.mrb[0].mxu0
      %v1908 = vpop.f32.mrb[0].mxu0
      %v1909 = vadd.f32 0.0, %v1908
      %v1910 = vpop.f32.mrb[0].mxu0
      %1911 = vmatprep.mubr.bf16.mxu0 0
      %1912 = vmatmul.mubr.bf16.gmra.mrb[0].mxu0 %v1779
      %v1913 = vpop.f32.mrb[0].mxu0
      %v1914 = vadd.f32 0.0, %v1913
      %v1915 = vpop.f32.mrb[0].mxu0
      %v1916 = vpop.f32.mrb[0].mxu0
      %v1917 = vadd.f32 0.0, %v1916
      %v1918 = vpop.f32.mrb[0].mxu0
      %1919 = vmatprep.mubr.bf16.mxu0 0
      %1920 = vmatmul.mubr.bf16.gmra.mrb[0].mxu0 %v1782
      %v1921 = vpop.f32.mrb[0].mxu0
      %v1922 = vadd.f32 0.0, %v1921
      %v1923 = vpop.f32.mrb[0].mxu0
      %v1924 = vpop.f32.mrb[0].mxu0
      %v1925 = vadd.f32 0.0, %v1924
      %v1926 = vpop.f32.mrb[0].mxu0
      %1927 = vmatprep.mubr.bf16.mxu0 0
      %1928 = vmatmul.mubr.bf16.gmra.mrb[0].mxu0 %v1785
      %v1929 = vpop.f32.mrb[0].mxu0
      %v1930 = vadd.f32 0.0, %v1929
      %v1931 = vpop.f32.mrb[0].mxu0
      %v1932 = vpop.f32.mrb[0].mxu0
      %v1933 = vadd.f32 0.0, %v1932
      %v1934 = vpop.f32.mrb[0].mxu0
      %1935 = vmatprep.mubr.bf16.mxu0 0
      %1936 = vmatmul.mubr.bf16.gmra.mrb[0].mxu0 %v1788
      %v1937 = vpop.f32.mrb[0].mxu0
      %v1938 = vadd.f32 0.0, %v1937
      %v1939 = vpop.f32.mrb[0].mxu0
      %v1940 = vpop.f32.mrb[0].mxu0
      %v1941 = vadd.f32 0.0, %v1940
      %v1942 = vpop.f32.mrb[0].mxu0
      %1943 = vmatprep.mubr.bf16.mxu0 0
      %1944 = vmatmul.mubr.bf16.gmra.mrb[0].mxu0 %v1791
      %v1945 = vpop.f32.mrb[0].mxu0
      %v1946 = vadd.f32 0.0, %v1945
      %v1947 = vpop.f32.mrb[0].mxu0
      %v1948 = vpop.f32.mrb[0].mxu0
      %v1949 = vadd.f32 0.0, %v1948
      %v1950 = vpop.f32.mrb[0].mxu0
      %1951 = vmatprep.mubr.bf16.mxu0 0
      %1952 = vmatmul.mubr.bf16.gmra.mrb[0].mxu0 %v1794
      %v1953 = vpop.f32.mrb[0].mxu0
      %v1954 = vadd.f32 0.0, %v1953
      %v1955 = vpop.f32.mrb[0].mxu0
      %v1956 = vpop.f32.mrb[0].mxu0
      %v1957 = vadd.f32 0.0, %v1956
      %v1958 = vpop.f32.mrb[0].mxu0
      %1959 = vdwg.mxu0
      %v1960 = vadd.f32 %v1601, %v1834
      %v1961 = vadd.f32 %v1602, %v1837
      %v1962 = vadd.f32 %v1603, %v1842
      %v1963 = vadd.f32 %v1604, %v1845
      %v1964 = vadd.f32 %v1605, %v1850
      %v1965 = vadd.f32 %v1606, %v1853
      %v1966 = vadd.f32 %v1607, %v1858
      %v1967 = vadd.f32 %v1608, %v1861
      %v1968 = vadd.f32 %v1609, %v1866
      %v1969 = vadd.f32 %v1610, %v1869
      %v1970 = vadd.f32 %v1611, %v1874
      %v1971 = vadd.f32 %v1612, %v1877
      %v1972 = vadd.f32 %v1613, %v1882
      %v1973 = vadd.f32 %v1614, %v1885
      %v1974 = vadd.f32 %v1615, %v1890
      %v1975 = vadd.f32 %v1616, %v1893
      %v1976 = vadd.f32 %v1617, %v1898
      %v1977 = vadd.f32 %v1618, %v1901
      %v1978 = vadd.f32 %v1619, %v1906
      %v1979 = vadd.f32 %v1620, %v1909
      %v1980 = vadd.f32 %v1621, %v1914
      %v1981 = vadd.f32 %v1622, %v1917
      %v1982 = vadd.f32 %v1623, %v1922
      %v1983 = vadd.f32 %v1624, %v1925
      %v1984 = vadd.f32 %v1625, %v1930
      %v1985 = vadd.f32 %v1626, %v1933
      %v1986 = vadd.f32 %v1627, %v1938
      %v1987 = vadd.f32 %v1628, %v1941
      %v1988 = vadd.f32 %v1629, %v1946
      %v1989 = vadd.f32 %v1630, %v1949
      %v1990 = vadd.f32 %v1631, %v1954
      %v1991 = vadd.f32 %v1632, %v1957
      %v1992 = vld [vmem:[%s1633] sm:$0xf]
      %v1993 = vld [vmem:[%s1633 + $0x4] sm:$0xf]
      %v1994 = vld [vmem:[%s1633 + $0x8] sm:$0x1]
      %v1995 = vld [vmem:[%s1633 + $0xc] sm:$0xf]
      %v1996 = vld [vmem:[%s1633 + $0x10] sm:$0xf]
      %v1997 = vld [vmem:[%s1633 + $0x14] sm:$0x1]
      %v1998 = vld [vmem:[%s1633 + $0x18] sm:$0xf]
      %v1999 = vld [vmem:[%s1633 + $0x1c] sm:$0xf]
      %v2000 = vld [vmem:[%s1633 + $0x20] sm:$0x1]
      %v2001 = vld [vmem:[%s1633 + $0x24] sm:$0xf]
      %v2002 = vld [vmem:[%s1633 + $0x28] sm:$0xf]
      %v2003 = vld [vmem:[%s1633 + $0x2c] sm:$0x1]
      %v2004 = vld [vmem:[%s1633 + $0x30] sm:$0xf]
      %v2005 = vld [vmem:[%s1633 + $0x34] sm:$0xf]
      %v2006 = vld [vmem:[%s1633 + $0x38] sm:$0x1]
      %v2007 = vld [vmem:[%s1633 + $0x3c] sm:$0xf]
      %v2008 = vld [vmem:[%s1633 + $0x40] sm:$0xf]
      %v2009 = vld [vmem:[%s1633 + $0x44] sm:$0x1]
      %v2010 = vld [vmem:[%s1633 + $0x48] sm:$0xf]
      %v2011 = vld [vmem:[%s1633 + $0x4c] sm:$0xf]
      %v2012 = vld [vmem:[%s1633 + $0x50] sm:$0x1]
      %v2013 = vld [vmem:[%s1633 + $0x54] sm:$0xf]
      %v2014 = vld [vmem:[%s1633 + $0x58] sm:$0xf]
      %v2015 = vld [vmem:[%s1633 + $0x5c] sm:$0x1]
      %v2016 = vld [vmem:[%s1633 + $0x60] sm:$0xf]
      %v2017 = vld [vmem:[%s1633 + $0x64] sm:$0xf]
      %v2018 = vld [vmem:[%s1633 + $0x68] sm:$0x1]
      %v2019 = vld [vmem:[%s1633 + $0x6c] sm:$0xf]
      %v2020 = vld [vmem:[%s1633 + $0x70] sm:$0xf]
      %v2021 = vld [vmem:[%s1633 + $0x74] sm:$0x1]
      %v2022 = vld [vmem:[%s1633 + $0x78] sm:$0xf]
      %v2023 = vld [vmem:[%s1633 + $0x7c] sm:$0xf]
      %v2024 = vld [vmem:[%s1633 + $0x80] sm:$0x1]
      %v2025 = vld [vmem:[%s1633 + $0x84] sm:$0xf]
      %v2026 = vld [vmem:[%s1633 + $0x88] sm:$0xf]
      %v2027 = vld [vmem:[%s1633 + $0x8c] sm:$0x1]
      %v2028 = vld [vmem:[%s1633 + $0x90] sm:$0xf]
      %v2029 = vld [vmem:[%s1633 + $0x94] sm:$0xf]
      %v2030 = vld [vmem:[%s1633 + $0x98] sm:$0x1]
      %v2031 = vld [vmem:[%s1633 + $0x9c] sm:$0xf]
      %v2032 = vld [vmem:[%s1633 + $0xa0] sm:$0xf]
      %v2033 = vld [vmem:[%s1633 + $0xa4] sm:$0x1]
      %v2034 = vld [vmem:[%s1633 + $0xa8] sm:$0xf]
      %v2035 = vld [vmem:[%s1633 + $0xac] sm:$0xf]
      %v2036 = vld [vmem:[%s1633 + $0xb0] sm:$0x1]
      %v2037 = vld [vmem:[%s1633 + $0xb4] sm:$0xf]
      %v2038 = vld [vmem:[%s1633 + $0xb8] sm:$0xf]
      %v2039 = vld [vmem:[%s1633 + $0xbc] sm:$0x1]
      %v2041 = vshrl.u32 %v1992, 16
      %v2043 = vrot.slane %v2041, 4
      %v2044 = vshll.u32 %v1992, 16
      %v2046 = vrot.slane %v2044, 5
      %v2047 = vor.u32 %v2043, %v2046
      %v2048 = vrot.slane %v2047, 4
      %v2050 = vshll.u32 %v1993, 16
      %v2052 = vrot.slane %v2050, 5
      %v2053 = vsel %vm235, %v2048, %v2052
      %v2054 = vshrl.u32 %v1993, 16
      %v2056 = vrot.slane %v2054, 4
      %v2057 = vor.u32 %v2056, %v2052
      %v2058 = vrot.slane %v2057, 4
      %v2060 = vshll.u32 %v1994, 16
      %v2062 = vrot.slane %v2060, 5
      %v2063 = vsel %vm235, %v2058, %v2062
      %v2065 = vshrl.u32 %v1995, 16
      %v2067 = vrot.slane %v2065, 4
      %v2068 = vshll.u32 %v1995, 16
      %v2070 = vrot.slane %v2068, 5
      %v2071 = vor.u32 %v2067, %v2070
      %v2072 = vrot.slane %v2071, 4
      %v2074 = vshll.u32 %v1996, 16
      %v2076 = vrot.slane %v2074, 5
      %v2077 = vsel %vm235, %v2072, %v2076
      %v2078 = vshrl.u32 %v1996, 16
      %v2080 = vrot.slane %v2078, 4
      %v2081 = vor.u32 %v2080, %v2076
      %v2082 = vrot.slane %v2081, 4
      %v2084 = vshll.u32 %v1997, 16
      %v2086 = vrot.slane %v2084, 5
      %v2087 = vsel %vm235, %v2082, %v2086
      %v2089 = vshrl.u32 %v1998, 16
      %v2091 = vrot.slane %v2089, 4
      %v2092 = vshll.u32 %v1998, 16
      %v2094 = vrot.slane %v2092, 5
      %v2095 = vor.u32 %v2091, %v2094
      %v2096 = vrot.slane %v2095, 4
      %v2098 = vshll.u32 %v1999, 16
      %v2100 = vrot.slane %v2098, 5
      %v2101 = vsel %vm235, %v2096, %v2100
      %v2102 = vshrl.u32 %v1999, 16
      %v2104 = vrot.slane %v2102, 4
      %v2105 = vor.u32 %v2104, %v2100
      %v2106 = vrot.slane %v2105, 4
      %v2108 = vshll.u32 %v2000, 16
      %v2110 = vrot.slane %v2108, 5
      %v2111 = vsel %vm235, %v2106, %v2110
      %v2113 = vshrl.u32 %v2001, 16
      %v2115 = vrot.slane %v2113, 4
      %v2116 = vshll.u32 %v2001, 16
      %v2118 = vrot.slane %v2116, 5
      %v2119 = vor.u32 %v2115, %v2118
      %v2120 = vrot.slane %v2119, 4
      %v2122 = vshll.u32 %v2002, 16
      %v2124 = vrot.slane %v2122, 5
      %v2125 = vsel %vm235, %v2120, %v2124
      %v2126 = vshrl.u32 %v2002, 16
      %v2128 = vrot.slane %v2126, 4
      %v2129 = vor.u32 %v2128, %v2124
      %v2130 = vrot.slane %v2129, 4
      %v2132 = vshll.u32 %v2003, 16
      %v2134 = vrot.slane %v2132, 5
      %v2135 = vsel %vm235, %v2130, %v2134
      %v2137 = vshrl.u32 %v2004, 16
      %v2139 = vrot.slane %v2137, 4
      %v2140 = vshll.u32 %v2004, 16
      %v2142 = vrot.slane %v2140, 5
      %v2143 = vor.u32 %v2139, %v2142
      %v2144 = vrot.slane %v2143, 4
      %v2146 = vshll.u32 %v2005, 16
      %v2148 = vrot.slane %v2146, 5
      %v2149 = vsel %vm235, %v2144, %v2148
      %v2150 = vshrl.u32 %v2005, 16
      %v2152 = vrot.slane %v2150, 4
      %v2153 = vor.u32 %v2152, %v2148
      %v2154 = vrot.slane %v2153, 4
      %v2156 = vshll.u32 %v2006, 16
      %v2158 = vrot.slane %v2156, 5
      %v2159 = vsel %vm235, %v2154, %v2158
      %v2161 = vshrl.u32 %v2007, 16
      %v2163 = vrot.slane %v2161, 4
      %v2164 = vshll.u32 %v2007, 16
      %v2166 = vrot.slane %v2164, 5
      %v2167 = vor.u32 %v2163, %v2166
      %v2168 = vrot.slane %v2167, 4
      %v2170 = vshll.u32 %v2008, 16
      %v2172 = vrot.slane %v2170, 5
      %v2173 = vsel %vm235, %v2168, %v2172
      %v2174 = vshrl.u32 %v2008, 16
      %v2176 = vrot.slane %v2174, 4
      %v2177 = vor.u32 %v2176, %v2172
      %v2178 = vrot.slane %v2177, 4
      %v2180 = vshll.u32 %v2009, 16
      %v2182 = vrot.slane %v2180, 5
      %v2183 = vsel %vm235, %v2178, %v2182
      %v2185 = vshrl.u32 %v2010, 16
      %v2187 = vrot.slane %v2185, 4
      %v2188 = vshll.u32 %v2010, 16
      %v2190 = vrot.slane %v2188, 5
      %v2191 = vor.u32 %v2187, %v2190
      %v2192 = vrot.slane %v2191, 4
      %v2194 = vshll.u32 %v2011, 16
      %v2196 = vrot.slane %v2194, 5
      %v2197 = vsel %vm235, %v2192, %v2196
      %v2198 = vshrl.u32 %v2011, 16
      %v2200 = vrot.slane %v2198, 4
      %v2201 = vor.u32 %v2200, %v2196
      %v2202 = vrot.slane %v2201, 4
      %v2204 = vshll.u32 %v2012, 16
      %v2206 = vrot.slane %v2204, 5
      %v2207 = vsel %vm235, %v2202, %v2206
      %v2209 = vshrl.u32 %v2013, 16
      %v2211 = vrot.slane %v2209, 4
      %v2212 = vshll.u32 %v2013, 16
      %v2214 = vrot.slane %v2212, 5
      %v2215 = vor.u32 %v2211, %v2214
      %v2216 = vrot.slane %v2215, 4
      %v2218 = vshll.u32 %v2014, 16
      %v2220 = vrot.slane %v2218, 5
      %v2221 = vsel %vm235, %v2216, %v2220
      %v2222 = vshrl.u32 %v2014, 16
      %v2224 = vrot.slane %v2222, 4
      %v2225 = vor.u32 %v2224, %v2220
      %v2226 = vrot.slane %v2225, 4
      %v2228 = vshll.u32 %v2015, 16
      %v2230 = vrot.slane %v2228, 5
      %v2231 = vsel %vm235, %v2226, %v2230
      %v2233 = vshrl.u32 %v2016, 16
      %v2235 = vrot.slane %v2233, 4
      %v2236 = vshll.u32 %v2016, 16
      %v2238 = vrot.slane %v2236, 5
      %v2239 = vor.u32 %v2235, %v2238
      %v2240 = vrot.slane %v2239, 4
      %v2242 = vshll.u32 %v2017, 16
      %v2244 = vrot.slane %v2242, 5
      %v2245 = vsel %vm235, %v2240, %v2244
      %v2246 = vshrl.u32 %v2017, 16
      %v2248 = vrot.slane %v2246, 4
      %v2249 = vor.u32 %v2248, %v2244
      %v2250 = vrot.slane %v2249, 4
      %v2252 = vshll.u32 %v2018, 16
      %v2254 = vrot.slane %v2252, 5
      %v2255 = vsel %vm235, %v2250, %v2254
      %v2257 = vshrl.u32 %v2019, 16
      %v2259 = vrot.slane %v2257, 4
      %v2260 = vshll.u32 %v2019, 16
      %v2262 = vrot.slane %v2260, 5
      %v2263 = vor.u32 %v2259, %v2262
      %v2264 = vrot.slane %v2263, 4
      %v2266 = vshll.u32 %v2020, 16
      %v2268 = vrot.slane %v2266, 5
      %v2269 = vsel %vm235, %v2264, %v2268
      %v2270 = vshrl.u32 %v2020, 16
      %v2272 = vrot.slane %v2270, 4
      %v2273 = vor.u32 %v2272, %v2268
      %v2274 = vrot.slane %v2273, 4
      %v2276 = vshll.u32 %v2021, 16
      %v2278 = vrot.slane %v2276, 5
      %v2279 = vsel %vm235, %v2274, %v2278
      %v2281 = vshrl.u32 %v2022, 16
      %v2283 = vrot.slane %v2281, 4
      %v2284 = vshll.u32 %v2022, 16
      %v2286 = vrot.slane %v2284, 5
      %v2287 = vor.u32 %v2283, %v2286
      %v2288 = vrot.slane %v2287, 4
      %v2290 = vshll.u32 %v2023, 16
      %v2292 = vrot.slane %v2290, 5
      %v2293 = vsel %vm235, %v2288, %v2292
      %v2294 = vshrl.u32 %v2023, 16
      %v2296 = vrot.slane %v2294, 4
      %v2297 = vor.u32 %v2296, %v2292
      %v2298 = vrot.slane %v2297, 4
      %v2300 = vshll.u32 %v2024, 16
      %v2302 = vrot.slane %v2300, 5
      %v2303 = vsel %vm235, %v2298, %v2302
      %v2305 = vshrl.u32 %v2025, 16
      %v2307 = vrot.slane %v2305, 4
      %v2308 = vshll.u32 %v2025, 16
      %v2310 = vrot.slane %v2308, 5
      %v2311 = vor.u32 %v2307, %v2310
      %v2312 = vrot.slane %v2311, 4
      %v2314 = vshll.u32 %v2026, 16
      %v2316 = vrot.slane %v2314, 5
      %v2317 = vsel %vm235, %v2312, %v2316
      %v2318 = vshrl.u32 %v2026, 16
      %v2320 = vrot.slane %v2318, 4
      %v2321 = vor.u32 %v2320, %v2316
      %v2322 = vrot.slane %v2321, 4
      %v2324 = vshll.u32 %v2027, 16
      %v2326 = vrot.slane %v2324, 5
      %v2327 = vsel %vm235, %v2322, %v2326
      %v2329 = vshrl.u32 %v2028, 16
      %v2331 = vrot.slane %v2329, 4
      %v2332 = vshll.u32 %v2028, 16
      %v2334 = vrot.slane %v2332, 5
      %v2335 = vor.u32 %v2331, %v2334
      %v2336 = vrot.slane %v2335, 4
      %v2338 = vshll.u32 %v2029, 16
      %v2340 = vrot.slane %v2338, 5
      %v2341 = vsel %vm235, %v2336, %v2340
      %v2342 = vshrl.u32 %v2029, 16
      %v2344 = vrot.slane %v2342, 4
      %v2345 = vor.u32 %v2344, %v2340
      %v2346 = vrot.slane %v2345, 4
      %v2348 = vshll.u32 %v2030, 16
      %v2350 = vrot.slane %v2348, 5
      %v2351 = vsel %vm235, %v2346, %v2350
      %v2353 = vshrl.u32 %v2031, 16
      %v2355 = vrot.slane %v2353, 4
      %v2356 = vshll.u32 %v2031, 16
      %v2358 = vrot.slane %v2356, 5
      %v2359 = vor.u32 %v2355, %v2358
      %v2360 = vrot.slane %v2359, 4
      %v2362 = vshll.u32 %v2032, 16
      %v2364 = vrot.slane %v2362, 5
      %v2365 = vsel %vm235, %v2360, %v2364
      %v2366 = vshrl.u32 %v2032, 16
      %v2368 = vrot.slane %v2366, 4
      %v2369 = vor.u32 %v2368, %v2364
      %v2370 = vrot.slane %v2369, 4
      %v2372 = vshll.u32 %v2033, 16
      %v2374 = vrot.slane %v2372, 5
      %v2375 = vsel %vm235, %v2370, %v2374
      %v2377 = vshrl.u32 %v2034, 16
      %v2379 = vrot.slane %v2377, 4
      %v2380 = vshll.u32 %v2034, 16
      %v2382 = vrot.slane %v2380, 5
      %v2383 = vor.u32 %v2379, %v2382
      %v2384 = vrot.slane %v2383, 4
      %v2386 = vshll.u32 %v2035, 16
      %v2388 = vrot.slane %v2386, 5
      %v2389 = vsel %vm235, %v2384, %v2388
      %v2390 = vshrl.u32 %v2035, 16
      %v2392 = vrot.slane %v2390, 4
      %v2393 = vor.u32 %v2392, %v2388
      %v2394 = vrot.slane %v2393, 4
      %v2396 = vshll.u32 %v2036, 16
      %v2398 = vrot.slane %v2396, 5
      %v2399 = vsel %vm235, %v2394, %v2398
      %v2401 = vshrl.u32 %v2037, 16
      %v2403 = vrot.slane %v2401, 4
      %v2404 = vshll.u32 %v2037, 16
      %v2406 = vrot.slane %v2404, 5
      %v2407 = vor.u32 %v2403, %v2406
      %v2408 = vrot.slane %v2407, 4
      %v2410 = vshll.u32 %v2038, 16
      %v2412 = vrot.slane %v2410, 5
      %v2413 = vsel %vm235, %v2408, %v2412
      %v2414 = vshrl.u32 %v2038, 16
      %v2416 = vrot.slane %v2414, 4
      %v2417 = vor.u32 %v2416, %v2412
      %v2418 = vrot.slane %v2417, 4
      %v2420 = vshll.u32 %v2039, 16
      %v2422 = vrot.slane %v2420, 5
      %v2423 = vsel %vm235, %v2418, %v2422
      %s2424 = scalar_lea.vmem %s1, 16
      %v2425 = vld [vmem:[%s2424] sm:$0xf]
      %v2426 = vunpack.c.l.b16 %v2053
      %v2427 = vunpack.c.l.b16 %v2063
      %v2428 = vunpack.c.l.b16 %v2077
      %v2429 = vunpack.c.l.b16 %v2087
      %v2430 = vunpack.c.l.b16 %v2101
      %v2431 = vunpack.c.l.b16 %v2111
      %v2432 = vunpack.c.l.b16 %v2125
      %v2433 = vunpack.c.l.b16 %v2135
      %v2434 = vunpack.c.l.b16 %v2149
      %v2435 = vunpack.c.l.b16 %v2159
      %v2436 = vunpack.c.l.b16 %v2173
      %v2437 = vunpack.c.l.b16 %v2183
      %v2438 = vunpack.c.l.b16 %v2197
      %v2439 = vunpack.c.l.b16 %v2207
      %v2440 = vunpack.c.l.b16 %v2221
      %v2441 = vunpack.c.l.b16 %v2231
      %v2442 = vunpack.c.l.b16 %v2245
      %v2443 = vunpack.c.l.b16 %v2255
      %v2444 = vunpack.c.l.b16 %v2269
      %v2445 = vunpack.c.l.b16 %v2279
      %v2446 = vunpack.c.l.b16 %v2293
      %v2447 = vunpack.c.l.b16 %v2303
      %v2448 = vunpack.c.l.b16 %v2317
      %v2449 = vunpack.c.l.b16 %v2327
      %v2450 = vunpack.c.l.b16 %v2341
      %v2451 = vunpack.c.l.b16 %v2351
      %v2452 = vunpack.c.l.b16 %v2365
      %v2453 = vunpack.c.l.b16 %v2375
      %v2454 = vunpack.c.l.b16 %v2389
      %v2455 = vunpack.c.l.b16 %v2399
      %v2456 = vunpack.c.l.b16 %v2413
      %v2457 = vunpack.c.l.b16 %v2423
      %v2458 = vpack.c.b16 %v2427, %v2426
      %v2459 = vpack.c.b16 %v2429, %v2428
      %v2460 = vpack.c.b16 %v2431, %v2430
      %v2461 = vpack.c.b16 %v2433, %v2432
      %v2462 = vpack.c.b16 %v2435, %v2434
      %v2463 = vpack.c.b16 %v2437, %v2436
      %v2464 = vpack.c.b16 %v2439, %v2438
      %v2465 = vpack.c.b16 %v2441, %v2440
      %v2466 = vpack.c.b16 %v2443, %v2442
      %v2467 = vpack.c.b16 %v2445, %v2444
      %v2468 = vpack.c.b16 %v2447, %v2446
      %v2469 = vpack.c.b16 %v2449, %v2448
      %v2470 = vpack.c.b16 %v2451, %v2450
      %v2471 = vpack.c.b16 %v2453, %v2452
      %v2472 = vpack.c.b16 %v2455, %v2454
      %v2473 = vpack.c.b16 %v2457, %v2456
      %v2475 = vsel %vm670, %v2458, 0
      %v2478 = vsel %vm670, %v2459, 0
      %v2481 = vsel %vm670, %v2460, 0
      %v2484 = vsel %vm670, %v2461, 0
      %v2487 = vsel %vm670, %v2462, 0
      %v2490 = vsel %vm670, %v2463, 0
      %v2493 = vsel %vm670, %v2464, 0
      %v2496 = vsel %vm670, %v2465, 0
      %v2499 = vsel %vm670, %v2466, 0
      %v2502 = vsel %vm670, %v2467, 0
      %v2505 = vsel %vm670, %v2468, 0
      %v2508 = vsel %vm670, %v2469, 0
      %v2511 = vsel %vm670, %v2470, 0
      %v2514 = vsel %vm670, %v2471, 0
      %v2517 = vsel %vm670, %v2472, 0
      %v2520 = vsel %vm670, %v2473, 0
      %v2523 = vsel %vm719, %v2425, 0
      %2525 = vmatprep.subr.bf16.mxu0 0
      %2526 = vmatpush1.bf16.msra.mxu0 %v2523
      %2527 = vmatprep.subr.bf16.mxu0 0
      %2528 = vmatpush1.bf16.msra.mxu0 0
      %2529 = vmatprep.subr.bf16.mxu0 0
      %2530 = vmatpush1.bf16.msra.mxu0 0
      %2531 = vmatprep.subr.bf16.mxu0 0
      %2532 = vmatpush1.bf16.msra.mxu0 0
      %2533 = vmatprep.subr.bf16.mxu0 0
      %2534 = vmatpush1.bf16.msra.mxu0 0
      %2535 = vmatprep.subr.bf16.mxu0 0
      %2536 = vmatpush1.bf16.msra.mxu0 0
      %2537 = vmatprep.subr.bf16.mxu0 0
      %2538 = vmatpush1.bf16.msra.mxu0 0
      %2539 = vmatprep.subr.bf16.mxu0 0
      %2540 = vmatpush1.bf16.msra.mxu0 0
      %2541 = vmatprep.subr.bf16.mxu0 0
      %2542 = vmatpush1.bf16.msra.mxu0 0
      %2543 = vmatprep.subr.bf16.mxu0 0
      %2544 = vmatpush1.bf16.msra.mxu0 0
      %2545 = vmatprep.subr.bf16.mxu0 0
      %2546 = vmatpush1.bf16.msra.mxu0 0
      %2547 = vmatprep.subr.bf16.mxu0 0
      %2548 = vmatpush1.bf16.msra.mxu0 0
      %2549 = vmatprep.subr.bf16.mxu0 0
      %2550 = vmatpush1.bf16.msra.mxu0 0
      %2551 = vmatprep.subr.bf16.mxu0 0
      %2552 = vmatpush1.bf16.msra.mxu0 0
      %2553 = vmatprep.subr.bf16.mxu0 0
      %2554 = vmatpush1.bf16.msra.mxu0 0
      %2555 = vmatprep.subr.bf16.mxu0 0
      %2556 = vmatpush1.bf16.msra.mxu0 0
      %2557 = vmatprep.mubr.bf16.mxu0 0
      %2558 = vmatmul.mubr.bf16.gmra.mrb[0].mxu0 %v2475
      %v2559 = vpop.f32.mrb[0].mxu0
      %v2560 = vadd.f32 0.0, %v2559
      %v2561 = vpop.f32.mrb[0].mxu0
      %v2562 = vpop.f32.mrb[0].mxu0
      %v2563 = vadd.f32 0.0, %v2562
      %v2564 = vpop.f32.mrb[0].mxu0
      %2565 = vmatprep.mubr.bf16.mxu0 0
      %2566 = vmatmul.mubr.bf16.gmra.mrb[0].mxu0 %v2478
      %v2567 = vpop.f32.mrb[0].mxu0
      %v2568 = vadd.f32 0.0, %v2567
      %v2569 = vpop.f32.mrb[0].mxu0
      %v2570 = vpop.f32.mrb[0].mxu0
      %v2571 = vadd.f32 0.0, %v2570
      %v2572 = vpop.f32.mrb[0].mxu0
      %2573 = vmatprep.mubr.bf16.mxu0 0
      %2574 = vmatmul.mubr.bf16.gmra.mrb[0].mxu0 %v2481
      %v2575 = vpop.f32.mrb[0].mxu0
      %v2576 = vadd.f32 0.0, %v2575
      %v2577 = vpop.f32.mrb[0].mxu0
      %v2578 = vpop.f32.mrb[0].mxu0
      %v2579 = vadd.f32 0.0, %v2578
      %v2580 = vpop.f32.mrb[0].mxu0
      %2581 = vmatprep.mubr.bf16.mxu0 0
      %2582 = vmatmul.mubr.bf16.gmra.mrb[0].mxu0 %v2484
      %v2583 = vpop.f32.mrb[0].mxu0
      %v2584 = vadd.f32 0.0, %v2583
      %v2585 = vpop.f32.mrb[0].mxu0
      %v2586 = vpop.f32.mrb[0].mxu0
      %v2587 = vadd.f32 0.0, %v2586
      %v2588 = vpop.f32.mrb[0].mxu0
      %2589 = vmatprep.mubr.bf16.mxu0 0
      %2590 = vmatmul.mubr.bf16.gmra.mrb[0].mxu0 %v2487
      %v2591 = vpop.f32.mrb[0].mxu0
      %v2592 = vadd.f32 0.0, %v2591
      %v2593 = vpop.f32.mrb[0].mxu0
      %v2594 = vpop.f32.mrb[0].mxu0
      %v2595 = vadd.f32 0.0, %v2594
      %v2596 = vpop.f32.mrb[0].mxu0
      %2597 = vmatprep.mubr.bf16.mxu0 0
      %2598 = vmatmul.mubr.bf16.gmra.mrb[0].mxu0 %v2490
      %v2599 = vpop.f32.mrb[0].mxu0
      %v2600 = vadd.f32 0.0, %v2599
      %v2601 = vpop.f32.mrb[0].mxu0
      %v2602 = vpop.f32.mrb[0].mxu0
      %v2603 = vadd.f32 0.0, %v2602
      %v2604 = vpop.f32.mrb[0].mxu0
      %2605 = vmatprep.mubr.bf16.mxu0 0
      %2606 = vmatmul.mubr.bf16.gmra.mrb[0].mxu0 %v2493
      %v2607 = vpop.f32.mrb[0].mxu0
      %v2608 = vadd.f32 0.0, %v2607
      %v2609 = vpop.f32.mrb[0].mxu0
      %v2610 = vpop.f32.mrb[0].mxu0
      %v2611 = vadd.f32 0.0, %v2610
      %v2612 = vpop.f32.mrb[0].mxu0
      %2613 = vmatprep.mubr.bf16.mxu0 0
      %2614 = vmatmul.mubr.bf16.gmra.mrb[0].mxu0 %v2496
      %v2615 = vpop.f32.mrb[0].mxu0
      %v2616 = vadd.f32 0.0, %v2615
      %v2617 = vpop.f32.mrb[0].mxu0
      %v2618 = vpop.f32.mrb[0].mxu0
      %v2619 = vadd.f32 0.0, %v2618
      %v2620 = vpop.f32.mrb[0].mxu0
      %2621 = vmatprep.mubr.bf16.mxu0 0
      %2622 = vmatmul.mubr.bf16.gmra.mrb[0].mxu0 %v2499
      %v2623 = vpop.f32.mrb[0].mxu0
      %v2624 = vadd.f32 0.0, %v2623
      %v2625 = vpop.f32.mrb[0].mxu0
      %v2626 = vpop.f32.mrb[0].mxu0
      %v2627 = vadd.f32 0.0, %v2626
      %v2628 = vpop.f32.mrb[0].mxu0
      %2629 = vmatprep.mubr.bf16.mxu0 0
      %2630 = vmatmul.mubr.bf16.gmra.mrb[0].mxu0 %v2502
      %v2631 = vpop.f32.mrb[0].mxu0
      %v2632 = vadd.f32 0.0, %v2631
      %v2633 = vpop.f32.mrb[0].mxu0
      %v2634 = vpop.f32.mrb[0].mxu0
      %v2635 = vadd.f32 0.0, %v2634
      %v2636 = vpop.f32.mrb[0].mxu0
      %2637 = vmatprep.mubr.bf16.mxu0 0
      %2638 = vmatmul.mubr.bf16.gmra.mrb[0].mxu0 %v2505
      %v2639 = vpop.f32.mrb[0].mxu0
      %v2640 = vadd.f32 0.0, %v2639
      %v2641 = vpop.f32.mrb[0].mxu0
      %v2642 = vpop.f32.mrb[0].mxu0
      %v2643 = vadd.f32 0.0, %v2642
      %v2644 = vpop.f32.mrb[0].mxu0
      %2645 = vmatprep.mubr.bf16.mxu0 0
      %2646 = vmatmul.mubr.bf16.gmra.mrb[0].mxu0 %v2508
      %v2647 = vpop.f32.mrb[0].mxu0
      %v2648 = vadd.f32 0.0, %v2647
      %v2649 = vpop.f32.mrb[0].mxu0
      %v2650 = vpop.f32.mrb[0].mxu0
      %v2651 = vadd.f32 0.0, %v2650
      %v2652 = vpop.f32.mrb[0].mxu0
      %2653 = vmatprep.mubr.bf16.mxu0 0
      %2654 = vmatmul.mubr.bf16.gmra.mrb[0].mxu0 %v2511
      %v2655 = vpop.f32.mrb[0].mxu0
      %v2656 = vadd.f32 0.0, %v2655
      %v2657 = vpop.f32.mrb[0].mxu0
      %v2658 = vpop.f32.mrb[0].mxu0
      %v2659 = vadd.f32 0.0, %v2658
      %v2660 = vpop.f32.mrb[0].mxu0
      %2661 = vmatprep.mubr.bf16.mxu0 0
      %2662 = vmatmul.mubr.bf16.gmra.mrb[0].mxu0 %v2514
      %v2663 = vpop.f32.mrb[0].mxu0
      %v2664 = vadd.f32 0.0, %v2663
      %v2665 = vpop.f32.mrb[0].mxu0
      %v2666 = vpop.f32.mrb[0].mxu0
      %v2667 = vadd.f32 0.0, %v2666
      %v2668 = vpop.f32.mrb[0].mxu0
      %2669 = vmatprep.mubr.bf16.mxu0 0
      %2670 = vmatmul.mubr.bf16.gmra.mrb[0].mxu0 %v2517
      %v2671 = vpop.f32.mrb[0].mxu0
      %v2672 = vadd.f32 0.0, %v2671
      %v2673 = vpop.f32.mrb[0].mxu0
      %v2674 = vpop.f32.mrb[0].mxu0
      %v2675 = vadd.f32 0.0, %v2674
      %v2676 = vpop.f32.mrb[0].mxu0
      %2677 = vmatprep.mubr.bf16.mxu0 0
      %2678 = vmatmul.mubr.bf16.gmra.mrb[0].mxu0 %v2520
      %v2679 = vpop.f32.mrb[0].mxu0
      %v2680 = vadd.f32 0.0, %v2679
      %v2681 = vpop.f32.mrb[0].mxu0
      %v2682 = vpop.f32.mrb[0].mxu0
      %v2683 = vadd.f32 0.0, %v2682
      %v2684 = vpop.f32.mrb[0].mxu0
      %2685 = vdwg.mxu0
      %v2686 = vadd.f32 %v1960, %v2560
      %v2687 = vadd.f32 %v1961, %v2563
      %v2688 = vadd.f32 %v1962, %v2568
      %v2689 = vadd.f32 %v1963, %v2571
      %v2690 = vadd.f32 %v1964, %v2576
      %v2691 = vadd.f32 %v1965, %v2579
      %v2692 = vadd.f32 %v1966, %v2584
      %v2693 = vadd.f32 %v1967, %v2587
      %v2694 = vadd.f32 %v1968, %v2592
      %v2695 = vadd.f32 %v1969, %v2595
      %v2696 = vadd.f32 %v1970, %v2600
      %v2697 = vadd.f32 %v1971, %v2603
      %v2698 = vadd.f32 %v1972, %v2608
      %v2699 = vadd.f32 %v1973, %v2611
      %v2700 = vadd.f32 %v1974, %v2616
      %v2701 = vadd.f32 %v1975, %v2619
      %v2702 = vadd.f32 %v1976, %v2624
      %v2703 = vadd.f32 %v1977, %v2627
      %v2704 = vadd.f32 %v1978, %v2632
      %v2705 = vadd.f32 %v1979, %v2635
      %v2706 = vadd.f32 %v1980, %v2640
      %v2707 = vadd.f32 %v1981, %v2643
      %v2708 = vadd.f32 %v1982, %v2648
      %v2709 = vadd.f32 %v1983, %v2651
      %v2710 = vadd.f32 %v1984, %v2656
      %v2711 = vadd.f32 %v1985, %v2659
      %v2712 = vadd.f32 %v1986, %v2664
      %v2713 = vadd.f32 %v1987, %v2667
      %v2714 = vadd.f32 %v1988, %v2672
      %v2715 = vadd.f32 %v1989, %v2675
      %v2716 = vadd.f32 %v1990, %v2680
      %v2717 = vadd.f32 %v1991, %v2683
      %v2718 = vld [vmem:[%s1633] sm:$0xe]
      %v2719 = vld [vmem:[%s1633 + $0xc] sm:$0xe]
      %v2720 = vld [vmem:[%s1633 + $0x18] sm:$0xe]
      %v2721 = vld [vmem:[%s1633 + $0x24] sm:$0xe]
      %v2722 = vld [vmem:[%s1633 + $0x30] sm:$0xe]
      %v2723 = vld [vmem:[%s1633 + $0x3c] sm:$0xe]
      %v2724 = vld [vmem:[%s1633 + $0x48] sm:$0xe]
      %v2725 = vld [vmem:[%s1633 + $0x54] sm:$0xe]
      %v2726 = vld [vmem:[%s1633 + $0x60] sm:$0xe]
      %v2727 = vld [vmem:[%s1633 + $0x6c] sm:$0xe]
      %v2728 = vld [vmem:[%s1633 + $0x78] sm:$0xe]
      %v2729 = vld [vmem:[%s1633 + $0x84] sm:$0xe]
      %v2730 = vld [vmem:[%s1633 + $0x90] sm:$0xe]
      %v2731 = vld [vmem:[%s1633 + $0x9c] sm:$0xe]
      %v2732 = vld [vmem:[%s1633 + $0xa8] sm:$0xe]
      %v2733 = vld [vmem:[%s1633 + $0xb4] sm:$0xe]
      %v2782 = vrot.slane %v2718, 5
      %v2783 = vrot.slane %v2782, 4
      %v2784 = vrot.slane %v1993, 5
      %v2785 = vsel %vm1226, %v2783, %v2784
      %v2786 = vrot.slane %v2784, 4
      %v2787 = vrot.slane %v1994, 5
      %v2788 = vsel %vm1226, %v2786, %v2787
      %v2789 = vrot.slane %v2719, 5
      %v2790 = vrot.slane %v2789, 4
      %v2791 = vrot.slane %v1996, 5
      %v2792 = vsel %vm1226, %v2790, %v2791
      %v2793 = vrot.slane %v2791, 4
      %v2794 = vrot.slane %v1997, 5
      %v2795 = vsel %vm1226, %v2793, %v2794
      %v2796 = vrot.slane %v2720, 5
      %v2797 = vrot.slane %v2796, 4
      %v2798 = vrot.slane %v1999, 5
      %v2799 = vsel %vm1226, %v2797, %v2798
      %v2800 = vrot.slane %v2798, 4
      %v2801 = vrot.slane %v2000, 5
      %v2802 = vsel %vm1226, %v2800, %v2801
      %v2803 = vrot.slane %v2721, 5
      %v2804 = vrot.slane %v2803, 4
      %v2805 = vrot.slane %v2002, 5
      %v2806 = vsel %vm1226, %v2804, %v2805
      %v2807 = vrot.slane %v2805, 4
      %v2808 = vrot.slane %v2003, 5
      %v2809 = vsel %vm1226, %v2807, %v2808
      %v2810 = vrot.slane %v2722, 5
      %v2811 = vrot.slane %v2810, 4
      %v2812 = vrot.slane %v2005, 5
      %v2813 = vsel %vm1226, %v2811, %v2812
      %v2814 = vrot.slane %v2812, 4
      %v2815 = vrot.slane %v2006, 5
      %v2816 = vsel %vm1226, %v2814, %v2815
      %v2817 = vrot.slane %v2723, 5
      %v2818 = vrot.slane %v2817, 4
      %v2819 = vrot.slane %v2008, 5
      %v2820 = vsel %vm1226, %v2818, %v2819
      %v2821 = vrot.slane %v2819, 4
      %v2822 = vrot.slane %v2009, 5
      %v2823 = vsel %vm1226, %v2821, %v2822
      %v2824 = vrot.slane %v2724, 5
      %v2825 = vrot.slane %v2824, 4
      %v2826 = vrot.slane %v2011, 5
      %v2827 = vsel %vm1226, %v2825, %v2826
      %v2828 = vrot.slane %v2826, 4
      %v2829 = vrot.slane %v2012, 5
      %v2830 = vsel %vm1226, %v2828, %v2829
      %v2831 = vrot.slane %v2725, 5
      %v2832 = vrot.slane %v2831, 4
      %v2833 = vrot.slane %v2014, 5
      %v2834 = vsel %vm1226, %v2832, %v2833
      %v2835 = vrot.slane %v2833, 4
      %v2836 = vrot.slane %v2015, 5
      %v2837 = vsel %vm1226, %v2835, %v2836
      %v2838 = vrot.slane %v2726, 5
      %v2839 = vrot.slane %v2838, 4
      %v2840 = vrot.slane %v2017, 5
      %v2841 = vsel %vm1226, %v2839, %v2840
      %v2842 = vrot.slane %v2840, 4
      %v2843 = vrot.slane %v2018, 5
      %v2844 = vsel %vm1226, %v2842, %v2843
      %v2845 = vrot.slane %v2727, 5
      %v2846 = vrot.slane %v2845, 4
      %v2847 = vrot.slane %v2020, 5
      %v2848 = vsel %vm1226, %v2846, %v2847
      %v2849 = vrot.slane %v2847, 4
      %v2850 = vrot.slane %v2021, 5
      %v2851 = vsel %vm1226, %v2849, %v2850
      %v2852 = vrot.slane %v2728, 5
      %v2853 = vrot.slane %v2852, 4
      %v2854 = vrot.slane %v2023, 5
      %v2855 = vsel %vm1226, %v2853, %v2854
      %v2856 = vrot.slane %v2854, 4
      %v2857 = vrot.slane %v2024, 5
      %v2858 = vsel %vm1226, %v2856, %v2857
      %v2859 = vrot.slane %v2729, 5
      %v2860 = vrot.slane %v2859, 4
      %v2861 = vrot.slane %v2026, 5
      %v2862 = vsel %vm1226, %v2860, %v2861
      %v2863 = vrot.slane %v2861, 4
      %v2864 = vrot.slane %v2027, 5
      %v2865 = vsel %vm1226, %v2863, %v2864
      %v2866 = vrot.slane %v2730, 5
      %v2867 = vrot.slane %v2866, 4
      %v2868 = vrot.slane %v2029, 5
      %v2869 = vsel %vm1226, %v2867, %v2868
      %v2870 = vrot.slane %v2868, 4
      %v2871 = vrot.slane %v2030, 5
      %v2872 = vsel %vm1226, %v2870, %v2871
      %v2873 = vrot.slane %v2731, 5
      %v2874 = vrot.slane %v2873, 4
      %v2875 = vrot.slane %v2032, 5
      %v2876 = vsel %vm1226, %v2874, %v2875
      %v2877 = vrot.slane %v2875, 4
      %v2878 = vrot.slane %v2033, 5
      %v2879 = vsel %vm1226, %v2877, %v2878
      %v2880 = vrot.slane %v2732, 5
      %v2881 = vrot.slane %v2880, 4
      %v2882 = vrot.slane %v2035, 5
      %v2883 = vsel %vm1226, %v2881, %v2882
      %v2884 = vrot.slane %v2882, 4
      %v2885 = vrot.slane %v2036, 5
      %v2886 = vsel %vm1226, %v2884, %v2885
      %v2887 = vrot.slane %v2733, 5
      %v2888 = vrot.slane %v2887, 4
      %v2889 = vrot.slane %v2038, 5
      %v2890 = vsel %vm1226, %v2888, %v2889
      %v2891 = vrot.slane %v2889, 4
      %v2892 = vrot.slane %v2039, 5
      %v2893 = vsel %vm1226, %v2891, %v2892
      %s2894 = scalar_lea.vmem %s1, 20
      %v2895 = vld [vmem:[%s2894] sm:$0xf]
      %v2896 = vunpack.c.l.b16 %v2785
      %v2897 = vunpack.c.l.b16 %v2788
      %v2898 = vunpack.c.l.b16 %v2792
      %v2899 = vunpack.c.l.b16 %v2795
      %v2900 = vunpack.c.l.b16 %v2799
      %v2901 = vunpack.c.l.b16 %v2802
      %v2902 = vunpack.c.l.b16 %v2806
      %v2903 = vunpack.c.l.b16 %v2809
      %v2904 = vunpack.c.l.b16 %v2813
      %v2905 = vunpack.c.l.b16 %v2816
      %v2906 = vunpack.c.l.b16 %v2820
      %v2907 = vunpack.c.l.b16 %v2823
      %v2908 = vunpack.c.l.b16 %v2827
      %v2909 = vunpack.c.l.b16 %v2830
      %v2910 = vunpack.c.l.b16 %v2834
      %v2911 = vunpack.c.l.b16 %v2837
      %v2912 = vunpack.c.l.b16 %v2841
      %v2913 = vunpack.c.l.b16 %v2844
      %v2914 = vunpack.c.l.b16 %v2848
      %v2915 = vunpack.c.l.b16 %v2851
      %v2916 = vunpack.c.l.b16 %v2855
      %v2917 = vunpack.c.l.b16 %v2858
      %v2918 = vunpack.c.l.b16 %v2862
      %v2919 = vunpack.c.l.b16 %v2865
      %v2920 = vunpack.c.l.b16 %v2869
      %v2921 = vunpack.c.l.b16 %v2872
      %v2922 = vunpack.c.l.b16 %v2876
      %v2923 = vunpack.c.l.b16 %v2879
      %v2924 = vunpack.c.l.b16 %v2883
      %v2925 = vunpack.c.l.b16 %v2886
      %v2926 = vunpack.c.l.b16 %v2890
      %v2927 = vunpack.c.l.b16 %v2893
      %v2928 = vpack.c.b16 %v2897, %v2896
      %v2929 = vpack.c.b16 %v2899, %v2898
      %v2930 = vpack.c.b16 %v2901, %v2900
      %v2931 = vpack.c.b16 %v2903, %v2902
      %v2932 = vpack.c.b16 %v2905, %v2904
      %v2933 = vpack.c.b16 %v2907, %v2906
      %v2934 = vpack.c.b16 %v2909, %v2908
      %v2935 = vpack.c.b16 %v2911, %v2910
      %v2936 = vpack.c.b16 %v2913, %v2912
      %v2937 = vpack.c.b16 %v2915, %v2914
      %v2938 = vpack.c.b16 %v2917, %v2916
      %v2939 = vpack.c.b16 %v2919, %v2918
      %v2940 = vpack.c.b16 %v2921, %v2920
      %v2941 = vpack.c.b16 %v2923, %v2922
      %v2942 = vpack.c.b16 %v2925, %v2924
      %v2943 = vpack.c.b16 %v2927, %v2926
      %v2945 = vsel %vm670, %v2928, 0
      %v2948 = vsel %vm670, %v2929, 0
      %v2951 = vsel %vm670, %v2930, 0
      %v2954 = vsel %vm670, %v2931, 0
      %v2957 = vsel %vm670, %v2932, 0
      %v2960 = vsel %vm670, %v2933, 0
      %v2963 = vsel %vm670, %v2934, 0
      %v2966 = vsel %vm670, %v2935, 0
      %v2969 = vsel %vm670, %v2936, 0
      %v2972 = vsel %vm670, %v2937, 0
      %v2975 = vsel %vm670, %v2938, 0
      %v2978 = vsel %vm670, %v2939, 0
      %v2981 = vsel %vm670, %v2940, 0
      %v2984 = vsel %vm670, %v2941, 0
      %v2987 = vsel %vm670, %v2942, 0
      %v2990 = vsel %vm670, %v2943, 0
      %v2993 = vsel %vm719, %v2895, 0
      %2995 = vmatprep.subr.bf16.mxu0 0
      %2996 = vmatpush1.bf16.msra.mxu0 %v2993
      %2997 = vmatprep.subr.bf16.mxu0 0
      %2998 = vmatpush1.bf16.msra.mxu0 0
      %2999 = vmatprep.subr.bf16.mxu0 0
      %3000 = vmatpush1.bf16.msra.mxu0 0
      %3001 = vmatprep.subr.bf16.mxu0 0
      %3002 = vmatpush1.bf16.msra.mxu0 0
      %3003 = vmatprep.subr.bf16.mxu0 0
      %3004 = vmatpush1.bf16.msra.mxu0 0
      %3005 = vmatprep.subr.bf16.mxu0 0
      %3006 = vmatpush1.bf16.msra.mxu0 0
      %3007 = vmatprep.subr.bf16.mxu0 0
      %3008 = vmatpush1.bf16.msra.mxu0 0
      %3009 = vmatprep.subr.bf16.mxu0 0
      %3010 = vmatpush1.bf16.msra.mxu0 0
      %3011 = vmatprep.subr.bf16.mxu0 0
      %3012 = vmatpush1.bf16.msra.mxu0 0
      %3013 = vmatprep.subr.bf16.mxu0 0
      %3014 = vmatpush1.bf16.msra.mxu0 0
      %3015 = vmatprep.subr.bf16.mxu0 0
      %3016 = vmatpush1.bf16.msra.mxu0 0
      %3017 = vmatprep.subr.bf16.mxu0 0
      %3018 = vmatpush1.bf16.msra.mxu0 0
      %3019 = vmatprep.subr.bf16.mxu0 0
      %3020 = vmatpush1.bf16.msra.mxu0 0
      %3021 = vmatprep.subr.bf16.mxu0 0
      %3022 = vmatpush1.bf16.msra.mxu0 0
      %3023 = vmatprep.subr.bf16.mxu0 0
      %3024 = vmatpush1.bf16.msra.mxu0 0
      %3025 = vmatprep.subr.bf16.mxu0 0
      %3026 = vmatpush1.bf16.msra.mxu0 0
      %3027 = vmatprep.mubr.bf16.mxu0 0
      %3028 = vmatmul.mubr.bf16.gmra.mrb[0].mxu0 %v2945
      %v3029 = vpop.f32.mrb[0].mxu0
      %v3030 = vadd.f32 0.0, %v3029
      %v3031 = vpop.f32.mrb[0].mxu0
      %v3032 = vpop.f32.mrb[0].mxu0
      %v3033 = vadd.f32 0.0, %v3032
      %v3034 = vpop.f32.mrb[0].mxu0
      %3035 = vmatprep.mubr.bf16.mxu0 0
      %3036 = vmatmul.mubr.bf16.gmra.mrb[0].mxu0 %v2948
      %v3037 = vpop.f32.mrb[0].mxu0
      %v3038 = vadd.f32 0.0, %v3037
      %v3039 = vpop.f32.mrb[0].mxu0
      %v3040 = vpop.f32.mrb[0].mxu0
      %v3041 = vadd.f32 0.0, %v3040
      %v3042 = vpop.f32.mrb[0].mxu0
      %3043 = vmatprep.mubr.bf16.mxu0 0
      %3044 = vmatmul.mubr.bf16.gmra.mrb[0].mxu0 %v2951
      %v3045 = vpop.f32.mrb[0].mxu0
      %v3046 = vadd.f32 0.0, %v3045
      %v3047 = vpop.f32.mrb[0].mxu0
      %v3048 = vpop.f32.mrb[0].mxu0
      %v3049 = vadd.f32 0.0, %v3048
      %v3050 = vpop.f32.mrb[0].mxu0
      %3051 = vmatprep.mubr.bf16.mxu0 0
      %3052 = vmatmul.mubr.bf16.gmra.mrb[0].mxu0 %v2954
      %v3053 = vpop.f32.mrb[0].mxu0
      %v3054 = vadd.f32 0.0, %v3053
      %v3055 = vpop.f32.mrb[0].mxu0
      %v3056 = vpop.f32.mrb[0].mxu0
      %v3057 = vadd.f32 0.0, %v3056
      %v3058 = vpop.f32.mrb[0].mxu0
      %3059 = vmatprep.mubr.bf16.mxu0 0
      %3060 = vmatmul.mubr.bf16.gmra.mrb[0].mxu0 %v2957
      %v3061 = vpop.f32.mrb[0].mxu0
      %v3062 = vadd.f32 0.0, %v3061
      %v3063 = vpop.f32.mrb[0].mxu0
      %v3064 = vpop.f32.mrb[0].mxu0
      %v3065 = vadd.f32 0.0, %v3064
      %v3066 = vpop.f32.mrb[0].mxu0
      %3067 = vmatprep.mubr.bf16.mxu0 0
      %3068 = vmatmul.mubr.bf16.gmra.mrb[0].mxu0 %v2960
      %v3069 = vpop.f32.mrb[0].mxu0
      %v3070 = vadd.f32 0.0, %v3069
      %v3071 = vpop.f32.mrb[0].mxu0
      %v3072 = vpop.f32.mrb[0].mxu0
      %v3073 = vadd.f32 0.0, %v3072
      %v3074 = vpop.f32.mrb[0].mxu0
      %3075 = vmatprep.mubr.bf16.mxu0 0
      %3076 = vmatmul.mubr.bf16.gmra.mrb[0].mxu0 %v2963
      %v3077 = vpop.f32.mrb[0].mxu0
      %v3078 = vadd.f32 0.0, %v3077
      %v3079 = vpop.f32.mrb[0].mxu0
      %v3080 = vpop.f32.mrb[0].mxu0
      %v3081 = vadd.f32 0.0, %v3080
      %v3082 = vpop.f32.mrb[0].mxu0
      %3083 = vmatprep.mubr.bf16.mxu0 0
      %3084 = vmatmul.mubr.bf16.gmra.mrb[0].mxu0 %v2966
      %v3085 = vpop.f32.mrb[0].mxu0
      %v3086 = vadd.f32 0.0, %v3085
      %v3087 = vpop.f32.mrb[0].mxu0
      %v3088 = vpop.f32.mrb[0].mxu0
      %v3089 = vadd.f32 0.0, %v3088
      %v3090 = vpop.f32.mrb[0].mxu0
      %3091 = vmatprep.mubr.bf16.mxu0 0
      %3092 = vmatmul.mubr.bf16.gmra.mrb[0].mxu0 %v2969
      %v3093 = vpop.f32.mrb[0].mxu0
      %v3094 = vadd.f32 0.0, %v3093
      %v3095 = vpop.f32.mrb[0].mxu0
      %v3096 = vpop.f32.mrb[0].mxu0
      %v3097 = vadd.f32 0.0, %v3096
      %v3098 = vpop.f32.mrb[0].mxu0
      %3099 = vmatprep.mubr.bf16.mxu0 0
      %3100 = vmatmul.mubr.bf16.gmra.mrb[0].mxu0 %v2972
      %v3101 = vpop.f32.mrb[0].mxu0
      %v3102 = vadd.f32 0.0, %v3101
      %v3103 = vpop.f32.mrb[0].mxu0
      %v3104 = vpop.f32.mrb[0].mxu0
      %v3105 = vadd.f32 0.0, %v3104
      %v3106 = vpop.f32.mrb[0].mxu0
      %3107 = vmatprep.mubr.bf16.mxu0 0
      %3108 = vmatmul.mubr.bf16.gmra.mrb[0].mxu0 %v2975
      %v3109 = vpop.f32.mrb[0].mxu0
      %v3110 = vadd.f32 0.0, %v3109
      %v3111 = vpop.f32.mrb[0].mxu0
      %v3112 = vpop.f32.mrb[0].mxu0
      %v3113 = vadd.f32 0.0, %v3112
      %v3114 = vpop.f32.mrb[0].mxu0
      %3115 = vmatprep.mubr.bf16.mxu0 0
      %3116 = vmatmul.mubr.bf16.gmra.mrb[0].mxu0 %v2978
      %v3117 = vpop.f32.mrb[0].mxu0
      %v3118 = vadd.f32 0.0, %v3117
      %v3119 = vpop.f32.mrb[0].mxu0
      %v3120 = vpop.f32.mrb[0].mxu0
      %v3121 = vadd.f32 0.0, %v3120
      %v3122 = vpop.f32.mrb[0].mxu0
      %3123 = vmatprep.mubr.bf16.mxu0 0
      %3124 = vmatmul.mubr.bf16.gmra.mrb[0].mxu0 %v2981
      %v3125 = vpop.f32.mrb[0].mxu0
      %v3126 = vadd.f32 0.0, %v3125
      %v3127 = vpop.f32.mrb[0].mxu0
      %v3128 = vpop.f32.mrb[0].mxu0
      %v3129 = vadd.f32 0.0, %v3128
      %v3130 = vpop.f32.mrb[0].mxu0
      %3131 = vmatprep.mubr.bf16.mxu0 0
      %3132 = vmatmul.mubr.bf16.gmra.mrb[0].mxu0 %v2984
      %v3133 = vpop.f32.mrb[0].mxu0
      %v3134 = vadd.f32 0.0, %v3133
      %v3135 = vpop.f32.mrb[0].mxu0
      %v3136 = vpop.f32.mrb[0].mxu0
      %v3137 = vadd.f32 0.0, %v3136
      %v3138 = vpop.f32.mrb[0].mxu0
      %3139 = vmatprep.mubr.bf16.mxu0 0
      %3140 = vmatmul.mubr.bf16.gmra.mrb[0].mxu0 %v2987
      %v3141 = vpop.f32.mrb[0].mxu0
      %v3142 = vadd.f32 0.0, %v3141
      %v3143 = vpop.f32.mrb[0].mxu0
      %v3144 = vpop.f32.mrb[0].mxu0
      %v3145 = vadd.f32 0.0, %v3144
      %v3146 = vpop.f32.mrb[0].mxu0
      %3147 = vmatprep.mubr.bf16.mxu0 0
      %3148 = vmatmul.mubr.bf16.gmra.mrb[0].mxu0 %v2990
      %v3149 = vpop.f32.mrb[0].mxu0
      %v3150 = vadd.f32 0.0, %v3149
      %v3151 = vpop.f32.mrb[0].mxu0
      %v3152 = vpop.f32.mrb[0].mxu0
      %v3153 = vadd.f32 0.0, %v3152
      %v3154 = vpop.f32.mrb[0].mxu0
      %3155 = vdwg.mxu0
      %v3156 = vadd.f32 %v2686, %v3030
      %v3157 = vadd.f32 %v2687, %v3033
      %v3158 = vadd.f32 %v2688, %v3038
      %v3159 = vadd.f32 %v2689, %v3041
      %v3160 = vadd.f32 %v2690, %v3046
      %v3161 = vadd.f32 %v2691, %v3049
      %v3162 = vadd.f32 %v2692, %v3054
      %v3163 = vadd.f32 %v2693, %v3057
      %v3164 = vadd.f32 %v2694, %v3062
      %v3165 = vadd.f32 %v2695, %v3065
      %v3166 = vadd.f32 %v2696, %v3070
      %v3167 = vadd.f32 %v2697, %v3073
      %v3168 = vadd.f32 %v2698, %v3078
      %v3169 = vadd.f32 %v2699, %v3081
      %v3170 = vadd.f32 %v2700, %v3086
      %v3171 = vadd.f32 %v2701, %v3089
      %v3172 = vadd.f32 %v2702, %v3094
      %v3173 = vadd.f32 %v2703, %v3097
      %v3174 = vadd.f32 %v2704, %v3102
      %v3175 = vadd.f32 %v2705, %v3105
      %v3176 = vadd.f32 %v2706, %v3110
      %v3177 = vadd.f32 %v2707, %v3113
      %v3178 = vadd.f32 %v2708, %v3118
      %v3179 = vadd.f32 %v2709, %v3121
      %v3180 = vadd.f32 %v2710, %v3126
      %v3181 = vadd.f32 %v2711, %v3129
      %v3182 = vadd.f32 %v2712, %v3134
      %v3183 = vadd.f32 %v2713, %v3137
      %v3184 = vadd.f32 %v2714, %v3142
      %v3185 = vadd.f32 %v2715, %v3145
      %v3186 = vadd.f32 %v2716, %v3150
      %v3187 = vadd.f32 %v2717, %v3153
      %s3188 = scalar_lea.vmem %s172, 24
      %v3189 = vld [vmem:[%s3188] sm:$0xf]
      %v3190 = vld [vmem:[%s3188 + $0x4] sm:$0xf]
      %v3191 = vld [vmem:[%s3188 + $0xc] sm:$0xf]
      %v3192 = vld [vmem:[%s3188 + $0x10] sm:$0xf]
      %v3193 = vld [vmem:[%s3188 + $0x18] sm:$0xf]
      %v3194 = vld [vmem:[%s3188 + $0x1c] sm:$0xf]
      %v3195 = vld [vmem:[%s3188 + $0x24] sm:$0xf]
      %v3196 = vld [vmem:[%s3188 + $0x28] sm:$0xf]
      %v3197 = vld [vmem:[%s3188 + $0x30] sm:$0xf]
      %v3198 = vld [vmem:[%s3188 + $0x34] sm:$0xf]
      %v3199 = vld [vmem:[%s3188 + $0x3c] sm:$0xf]
      %v3200 = vld [vmem:[%s3188 + $0x40] sm:$0xf]
      %v3201 = vld [vmem:[%s3188 + $0x48] sm:$0xf]
      %v3202 = vld [vmem:[%s3188 + $0x4c] sm:$0xf]
      %v3203 = vld [vmem:[%s3188 + $0x54] sm:$0xf]
      %v3204 = vld [vmem:[%s3188 + $0x58] sm:$0xf]
      %v3205 = vld [vmem:[%s3188 + $0x60] sm:$0xf]
      %v3206 = vld [vmem:[%s3188 + $0x64] sm:$0xf]
      %v3207 = vld [vmem:[%s3188 + $0x6c] sm:$0xf]
      %v3208 = vld [vmem:[%s3188 + $0x70] sm:$0xf]
      %v3209 = vld [vmem:[%s3188 + $0x78] sm:$0xf]
      %v3210 = vld [vmem:[%s3188 + $0x7c] sm:$0xf]
      %v3211 = vld [vmem:[%s3188 + $0x84] sm:$0xf]
      %v3212 = vld [vmem:[%s3188 + $0x88] sm:$0xf]
      %v3213 = vld [vmem:[%s3188 + $0x90] sm:$0xf]
      %v3214 = vld [vmem:[%s3188 + $0x94] sm:$0xf]
      %v3215 = vld [vmem:[%s3188 + $0x9c] sm:$0xf]
      %v3216 = vld [vmem:[%s3188 + $0xa0] sm:$0xf]
      %v3217 = vld [vmem:[%s3188 + $0xa8] sm:$0xf]
      %v3218 = vld [vmem:[%s3188 + $0xac] sm:$0xf]
      %v3219 = vld [vmem:[%s3188 + $0xb4] sm:$0xf]
      %v3220 = vld [vmem:[%s3188 + $0xb8] sm:$0xf]
      %s3221 = scalar_lea.vmem %s1, 24
      %v3222 = vld [vmem:[%s3221] sm:$0xf]
      %v3255 = vunpack.c.l.b16 %v3189
      %v3256 = vunpack.c.l.b16 %v3190
      %v3257 = vunpack.c.l.b16 %v3191
      %v3258 = vunpack.c.l.b16 %v3192
      %v3259 = vunpack.c.l.b16 %v3193
      %v3260 = vunpack.c.l.b16 %v3194
      %v3261 = vunpack.c.l.b16 %v3195
      %v3262 = vunpack.c.l.b16 %v3196
      %v3263 = vunpack.c.l.b16 %v3197
      %v3264 = vunpack.c.l.b16 %v3198
      %v3265 = vunpack.c.l.b16 %v3199
      %v3266 = vunpack.c.l.b16 %v3200
      %v3267 = vunpack.c.l.b16 %v3201
      %v3268 = vunpack.c.l.b16 %v3202
      %v3269 = vunpack.c.l.b16 %v3203
      %v3270 = vunpack.c.l.b16 %v3204
      %v3271 = vunpack.c.l.b16 %v3205
      %v3272 = vunpack.c.l.b16 %v3206
      %v3273 = vunpack.c.l.b16 %v3207
      %v3274 = vunpack.c.l.b16 %v3208
      %v3275 = vunpack.c.l.b16 %v3209
      %v3276 = vunpack.c.l.b16 %v3210
      %v3277 = vunpack.c.l.b16 %v3211
      %v3278 = vunpack.c.l.b16 %v3212
      %v3279 = vunpack.c.l.b16 %v3213
      %v3280 = vunpack.c.l.b16 %v3214
      %v3281 = vunpack.c.l.b16 %v3215
      %v3282 = vunpack.c.l.b16 %v3216
      %v3283 = vunpack.c.l.b16 %v3217
      %v3284 = vunpack.c.l.b16 %v3218
      %v3285 = vunpack.c.l.b16 %v3219
      %v3286 = vunpack.c.l.b16 %v3220
      %v3287 = vpack.c.b16 %v3256, %v3255
      %v3288 = vpack.c.b16 %v3258, %v3257
      %v3289 = vpack.c.b16 %v3260, %v3259
      %v3290 = vpack.c.b16 %v3262, %v3261
      %v3291 = vpack.c.b16 %v3264, %v3263
      %v3292 = vpack.c.b16 %v3266, %v3265
      %v3293 = vpack.c.b16 %v3268, %v3267
      %v3294 = vpack.c.b16 %v3270, %v3269
      %v3295 = vpack.c.b16 %v3272, %v3271
      %v3296 = vpack.c.b16 %v3274, %v3273
      %v3297 = vpack.c.b16 %v3276, %v3275
      %v3298 = vpack.c.b16 %v3278, %v3277
      %v3299 = vpack.c.b16 %v3280, %v3279
      %v3300 = vpack.c.b16 %v3282, %v3281
      %v3301 = vpack.c.b16 %v3284, %v3283
      %v3302 = vpack.c.b16 %v3286, %v3285
      %v3304 = vsel %vm670, %v3287, 0
      %v3307 = vsel %vm670, %v3288, 0
      %v3310 = vsel %vm670, %v3289, 0
      %v3313 = vsel %vm670, %v3290, 0
      %v3316 = vsel %vm670, %v3291, 0
      %v3319 = vsel %vm670, %v3292, 0
      %v3322 = vsel %vm670, %v3293, 0
      %v3325 = vsel %vm670, %v3294, 0
      %v3328 = vsel %vm670, %v3295, 0
      %v3331 = vsel %vm670, %v3296, 0
      %v3334 = vsel %vm670, %v3297, 0
      %v3337 = vsel %vm670, %v3298, 0
      %v3340 = vsel %vm670, %v3299, 0
      %v3343 = vsel %vm670, %v3300, 0
      %v3346 = vsel %vm670, %v3301, 0
      %v3349 = vsel %vm670, %v3302, 0
      %v3352 = vsel %vm719, %v3222, 0
      %3354 = vmatprep.subr.bf16.mxu0 0
      %3355 = vmatpush1.bf16.msra.mxu0 %v3352
      %3356 = vmatprep.subr.bf16.mxu0 0
      %3357 = vmatpush1.bf16.msra.mxu0 0
      %3358 = vmatprep.subr.bf16.mxu0 0
      %3359 = vmatpush1.bf16.msra.mxu0 0
      %3360 = vmatprep.subr.bf16.mxu0 0
      %3361 = vmatpush1.bf16.msra.mxu0 0
      %3362 = vmatprep.subr.bf16.mxu0 0
      %3363 = vmatpush1.bf16.msra.mxu0 0
      %3364 = vmatprep.subr.bf16.mxu0 0
      %3365 = vmatpush1.bf16.msra.mxu0 0
      %3366 = vmatprep.subr.bf16.mxu0 0
      %3367 = vmatpush1.bf16.msra.mxu0 0
      %3368 = vmatprep.subr.bf16.mxu0 0
      %3369 = vmatpush1.bf16.msra.mxu0 0
      %3370 = vmatprep.subr.bf16.mxu0 0
      %3371 = vmatpush1.bf16.msra.mxu0 0
      %3372 = vmatprep.subr.bf16.mxu0 0
      %3373 = vmatpush1.bf16.msra.mxu0 0
      %3374 = vmatprep.subr.bf16.mxu0 0
      %3375 = vmatpush1.bf16.msra.mxu0 0
      %3376 = vmatprep.subr.bf16.mxu0 0
      %3377 = vmatpush1.bf16.msra.mxu0 0
      %3378 = vmatprep.subr.bf16.mxu0 0
      %3379 = vmatpush1.bf16.msra.mxu0 0
      %3380 = vmatprep.subr.bf16.mxu0 0
      %3381 = vmatpush1.bf16.msra.mxu0 0
      %3382 = vmatprep.subr.bf16.mxu0 0
      %3383 = vmatpush1.bf16.msra.mxu0 0
      %3384 = vmatprep.subr.bf16.mxu0 0
      %3385 = vmatpush1.bf16.msra.mxu0 0
      %3386 = vmatprep.mubr.bf16.mxu0 0
      %3387 = vmatmul.mubr.bf16.gmra.mrb[0].mxu0 %v3304
      %v3388 = vpop.f32.mrb[0].mxu0
      %v3389 = vadd.f32 0.0, %v3388
      %v3390 = vpop.f32.mrb[0].mxu0
      %v3391 = vpop.f32.mrb[0].mxu0
      %v3392 = vadd.f32 0.0, %v3391
      %v3393 = vpop.f32.mrb[0].mxu0
      %3394 = vmatprep.mubr.bf16.mxu0 0
      %3395 = vmatmul.mubr.bf16.gmra.mrb[0].mxu0 %v3307
      %v3396 = vpop.f32.mrb[0].mxu0
      %v3397 = vadd.f32 0.0, %v3396
      %v3398 = vpop.f32.mrb[0].mxu0
      %v3399 = vpop.f32.mrb[0].mxu0
      %v3400 = vadd.f32 0.0, %v3399
      %v3401 = vpop.f32.mrb[0].mxu0
      %3402 = vmatprep.mubr.bf16.mxu0 0
      %3403 = vmatmul.mubr.bf16.gmra.mrb[0].mxu0 %v3310
      %v3404 = vpop.f32.mrb[0].mxu0
      %v3405 = vadd.f32 0.0, %v3404
      %v3406 = vpop.f32.mrb[0].mxu0
      %v3407 = vpop.f32.mrb[0].mxu0
      %v3408 = vadd.f32 0.0, %v3407
      %v3409 = vpop.f32.mrb[0].mxu0
      %3410 = vmatprep.mubr.bf16.mxu0 0
      %3411 = vmatmul.mubr.bf16.gmra.mrb[0].mxu0 %v3313
      %v3412 = vpop.f32.mrb[0].mxu0
      %v3413 = vadd.f32 0.0, %v3412
      %v3414 = vpop.f32.mrb[0].mxu0
      %v3415 = vpop.f32.mrb[0].mxu0
      %v3416 = vadd.f32 0.0, %v3415
      %v3417 = vpop.f32.mrb[0].mxu0
      %3418 = vmatprep.mubr.bf16.mxu0 0
      %3419 = vmatmul.mubr.bf16.gmra.mrb[0].mxu0 %v3316
      %v3420 = vpop.f32.mrb[0].mxu0
      %v3421 = vadd.f32 0.0, %v3420
      %v3422 = vpop.f32.mrb[0].mxu0
      %v3423 = vpop.f32.mrb[0].mxu0
      %v3424 = vadd.f32 0.0, %v3423
      %v3425 = vpop.f32.mrb[0].mxu0
      %3426 = vmatprep.mubr.bf16.mxu0 0
      %3427 = vmatmul.mubr.bf16.gmra.mrb[0].mxu0 %v3319
      %v3428 = vpop.f32.mrb[0].mxu0
      %v3429 = vadd.f32 0.0, %v3428
      %v3430 = vpop.f32.mrb[0].mxu0
      %v3431 = vpop.f32.mrb[0].mxu0
      %v3432 = vadd.f32 0.0, %v3431
      %v3433 = vpop.f32.mrb[0].mxu0
      %3434 = vmatprep.mubr.bf16.mxu0 0
      %3435 = vmatmul.mubr.bf16.gmra.mrb[0].mxu0 %v3322
      %v3436 = vpop.f32.mrb[0].mxu0
      %v3437 = vadd.f32 0.0, %v3436
      %v3438 = vpop.f32.mrb[0].mxu0
      %v3439 = vpop.f32.mrb[0].mxu0
      %v3440 = vadd.f32 0.0, %v3439
      %v3441 = vpop.f32.mrb[0].mxu0
      %3442 = vmatprep.mubr.bf16.mxu0 0
      %3443 = vmatmul.mubr.bf16.gmra.mrb[0].mxu0 %v3325
      %v3444 = vpop.f32.mrb[0].mxu0
      %v3445 = vadd.f32 0.0, %v3444
      %v3446 = vpop.f32.mrb[0].mxu0
      %v3447 = vpop.f32.mrb[0].mxu0
      %v3448 = vadd.f32 0.0, %v3447
      %v3449 = vpop.f32.mrb[0].mxu0
      %3450 = vmatprep.mubr.bf16.mxu0 0
      %3451 = vmatmul.mubr.bf16.gmra.mrb[0].mxu0 %v3328
      %v3452 = vpop.f32.mrb[0].mxu0
      %v3453 = vadd.f32 0.0, %v3452
      %v3454 = vpop.f32.mrb[0].mxu0
      %v3455 = vpop.f32.mrb[0].mxu0
      %v3456 = vadd.f32 0.0, %v3455
      %v3457 = vpop.f32.mrb[0].mxu0
      %3458 = vmatprep.mubr.bf16.mxu0 0
      %3459 = vmatmul.mubr.bf16.gmra.mrb[0].mxu0 %v3331
      %v3460 = vpop.f32.mrb[0].mxu0
      %v3461 = vadd.f32 0.0, %v3460
      %v3462 = vpop.f32.mrb[0].mxu0
      %v3463 = vpop.f32.mrb[0].mxu0
      %v3464 = vadd.f32 0.0, %v3463
      %v3465 = vpop.f32.mrb[0].mxu0
      %3466 = vmatprep.mubr.bf16.mxu0 0
      %3467 = vmatmul.mubr.bf16.gmra.mrb[0].mxu0 %v3334
      %v3468 = vpop.f32.mrb[0].mxu0
      %v3469 = vadd.f32 0.0, %v3468
      %v3470 = vpop.f32.mrb[0].mxu0
      %v3471 = vpop.f32.mrb[0].mxu0
      %v3472 = vadd.f32 0.0, %v3471
      %v3473 = vpop.f32.mrb[0].mxu0
      %3474 = vmatprep.mubr.bf16.mxu0 0
      %3475 = vmatmul.mubr.bf16.gmra.mrb[0].mxu0 %v3337
      %v3476 = vpop.f32.mrb[0].mxu0
      %v3477 = vadd.f32 0.0, %v3476
      %v3478 = vpop.f32.mrb[0].mxu0
      %v3479 = vpop.f32.mrb[0].mxu0
      %v3480 = vadd.f32 0.0, %v3479
      %v3481 = vpop.f32.mrb[0].mxu0
      %3482 = vmatprep.mubr.bf16.mxu0 0
      %3483 = vmatmul.mubr.bf16.gmra.mrb[0].mxu0 %v3340
      %v3484 = vpop.f32.mrb[0].mxu0
      %v3485 = vadd.f32 0.0, %v3484
      %v3486 = vpop.f32.mrb[0].mxu0
      %v3487 = vpop.f32.mrb[0].mxu0
      %v3488 = vadd.f32 0.0, %v3487
      %v3489 = vpop.f32.mrb[0].mxu0
      %3490 = vmatprep.mubr.bf16.mxu0 0
      %3491 = vmatmul.mubr.bf16.gmra.mrb[0].mxu0 %v3343
      %v3492 = vpop.f32.mrb[0].mxu0
      %v3493 = vadd.f32 0.0, %v3492
      %v3494 = vpop.f32.mrb[0].mxu0
      %v3495 = vpop.f32.mrb[0].mxu0
      %v3496 = vadd.f32 0.0, %v3495
      %v3497 = vpop.f32.mrb[0].mxu0
      %3498 = vmatprep.mubr.bf16.mxu0 0
      %3499 = vmatmul.mubr.bf16.gmra.mrb[0].mxu0 %v3346
      %v3500 = vpop.f32.mrb[0].mxu0
      %v3501 = vadd.f32 0.0, %v3500
      %v3502 = vpop.f32.mrb[0].mxu0
      %v3503 = vpop.f32.mrb[0].mxu0
      %v3504 = vadd.f32 0.0, %v3503
      %v3505 = vpop.f32.mrb[0].mxu0
      %3506 = vmatprep.mubr.bf16.mxu0 0
      %3507 = vmatmul.mubr.bf16.gmra.mrb[0].mxu0 %v3349
      %v3508 = vpop.f32.mrb[0].mxu0
      %v3509 = vadd.f32 0.0, %v3508
      %v3510 = vpop.f32.mrb[0].mxu0
      %v3511 = vpop.f32.mrb[0].mxu0
      %v3512 = vadd.f32 0.0, %v3511
      %v3513 = vpop.f32.mrb[0].mxu0
      %3514 = vdwg.mxu0
      %v3515 = vadd.f32 %v3156, %v3389
      %v3516 = vadd.f32 %v3157, %v3392
      %v3517 = vadd.f32 %v3158, %v3397
      %v3518 = vadd.f32 %v3159, %v3400
      %v3519 = vadd.f32 %v3160, %v3405
      %v3520 = vadd.f32 %v3161, %v3408
      %v3521 = vadd.f32 %v3162, %v3413
      %v3522 = vadd.f32 %v3163, %v3416
      %v3523 = vadd.f32 %v3164, %v3421
      %v3524 = vadd.f32 %v3165, %v3424
      %v3525 = vadd.f32 %v3166, %v3429
      %v3526 = vadd.f32 %v3167, %v3432
      %v3527 = vadd.f32 %v3168, %v3437
      %v3528 = vadd.f32 %v3169, %v3440
      %v3529 = vadd.f32 %v3170, %v3445
      %v3530 = vadd.f32 %v3171, %v3448
      %v3531 = vadd.f32 %v3172, %v3453
      %v3532 = vadd.f32 %v3173, %v3456
      %v3533 = vadd.f32 %v3174, %v3461
      %v3534 = vadd.f32 %v3175, %v3464
      %v3535 = vadd.f32 %v3176, %v3469
      %v3536 = vadd.f32 %v3177, %v3472
      %v3537 = vadd.f32 %v3178, %v3477
      %v3538 = vadd.f32 %v3179, %v3480
      %v3539 = vadd.f32 %v3180, %v3485
      %v3540 = vadd.f32 %v3181, %v3488
      %v3541 = vadd.f32 %v3182, %v3493
      %v3542 = vadd.f32 %v3183, %v3496
      %v3543 = vadd.f32 %v3184, %v3501
      %v3544 = vadd.f32 %v3185, %v3504
      %v3545 = vadd.f32 %v3186, %v3509
      %v3546 = vadd.f32 %v3187, %v3512
      %v3547 = vld [vmem:[%s3188] sm:$0xf]
      %v3548 = vld [vmem:[%s3188 + $0x4] sm:$0xf]
      %v3549 = vld [vmem:[%s3188 + $0x8] sm:$0x1]
      %v3550 = vld [vmem:[%s3188 + $0xc] sm:$0xf]
      %v3551 = vld [vmem:[%s3188 + $0x10] sm:$0xf]
      %v3552 = vld [vmem:[%s3188 + $0x14] sm:$0x1]
      %v3553 = vld [vmem:[%s3188 + $0x18] sm:$0xf]
      %v3554 = vld [vmem:[%s3188 + $0x1c] sm:$0xf]
      %v3555 = vld [vmem:[%s3188 + $0x20] sm:$0x1]
      %v3556 = vld [vmem:[%s3188 + $0x24] sm:$0xf]
      %v3557 = vld [vmem:[%s3188 + $0x28] sm:$0xf]
      %v3558 = vld [vmem:[%s3188 + $0x2c] sm:$0x1]
      %v3559 = vld [vmem:[%s3188 + $0x30] sm:$0xf]
      %v3560 = vld [vmem:[%s3188 + $0x34] sm:$0xf]
      %v3561 = vld [vmem:[%s3188 + $0x38] sm:$0x1]
      %v3562 = vld [vmem:[%s3188 + $0x3c] sm:$0xf]
      %v3563 = vld [vmem:[%s3188 + $0x40] sm:$0xf]
      %v3564 = vld [vmem:[%s3188 + $0x44] sm:$0x1]
      %v3565 = vld [vmem:[%s3188 + $0x48] sm:$0xf]
      %v3566 = vld [vmem:[%s3188 + $0x4c] sm:$0xf]
      %v3567 = vld [vmem:[%s3188 + $0x50] sm:$0x1]
      %v3568 = vld [vmem:[%s3188 + $0x54] sm:$0xf]
      %v3569 = vld [vmem:[%s3188 + $0x58] sm:$0xf]
      %v3570 = vld [vmem:[%s3188 + $0x5c] sm:$0x1]
      %v3571 = vld [vmem:[%s3188 + $0x60] sm:$0xf]
      %v3572 = vld [vmem:[%s3188 + $0x64] sm:$0xf]
      %v3573 = vld [vmem:[%s3188 + $0x68] sm:$0x1]
      %v3574 = vld [vmem:[%s3188 + $0x6c] sm:$0xf]
      %v3575 = vld [vmem:[%s3188 + $0x70] sm:$0xf]
      %v3576 = vld [vmem:[%s3188 + $0x74] sm:$0x1]
      %v3577 = vld [vmem:[%s3188 + $0x78] sm:$0xf]
      %v3578 = vld [vmem:[%s3188 + $0x7c] sm:$0xf]
      %v3579 = vld [vmem:[%s3188 + $0x80] sm:$0x1]
      %v3580 = vld [vmem:[%s3188 + $0x84] sm:$0xf]
      %v3581 = vld [vmem:[%s3188 + $0x88] sm:$0xf]
      %v3582 = vld [vmem:[%s3188 + $0x8c] sm:$0x1]
      %v3583 = vld [vmem:[%s3188 + $0x90] sm:$0xf]
      %v3584 = vld [vmem:[%s3188 + $0x94] sm:$0xf]
      %v3585 = vld [vmem:[%s3188 + $0x98] sm:$0x1]
      %v3586 = vld [vmem:[%s3188 + $0x9c] sm:$0xf]
      %v3587 = vld [vmem:[%s3188 + $0xa0] sm:$0xf]
      %v3588 = vld [vmem:[%s3188 + $0xa4] sm:$0x1]
      %v3589 = vld [vmem:[%s3188 + $0xa8] sm:$0xf]
      %v3590 = vld [vmem:[%s3188 + $0xac] sm:$0xf]
      %v3591 = vld [vmem:[%s3188 + $0xb0] sm:$0x1]
      %v3592 = vld [vmem:[%s3188 + $0xb4] sm:$0xf]
      %v3593 = vld [vmem:[%s3188 + $0xb8] sm:$0xf]
      %v3594 = vld [vmem:[%s3188 + $0xbc] sm:$0x1]
      %v3596 = vshrl.u32 %v3547, 16
      %v3598 = vrot.slane %v3596, 4
      %v3599 = vshll.u32 %v3547, 16
      %v3601 = vrot.slane %v3599, 5
      %v3602 = vor.u32 %v3598, %v3601
      %v3603 = vrot.slane %v3602, 4
      %v3605 = vshll.u32 %v3548, 16
      %v3607 = vrot.slane %v3605, 5
      %v3608 = vsel %vm235, %v3603, %v3607
      %v3609 = vshrl.u32 %v3548, 16
      %v3611 = vrot.slane %v3609, 4
      %v3612 = vor.u32 %v3611, %v3607
      %v3613 = vrot.slane %v3612, 4
      %v3615 = vshll.u32 %v3549, 16
      %v3617 = vrot.slane %v3615, 5
      %v3618 = vsel %vm235, %v3613, %v3617
      %v3620 = vshrl.u32 %v3550, 16
      %v3622 = vrot.slane %v3620, 4
      %v3623 = vshll.u32 %v3550, 16
      %v3625 = vrot.slane %v3623, 5
      %v3626 = vor.u32 %v3622, %v3625
      %v3627 = vrot.slane %v3626, 4
      %v3629 = vshll.u32 %v3551, 16
      %v3631 = vrot.slane %v3629, 5
      %v3632 = vsel %vm235, %v3627, %v3631
      %v3633 = vshrl.u32 %v3551, 16
      %v3635 = vrot.slane %v3633, 4
      %v3636 = vor.u32 %v3635, %v3631
      %v3637 = vrot.slane %v3636, 4
      %v3639 = vshll.u32 %v3552, 16
      %v3641 = vrot.slane %v3639, 5
      %v3642 = vsel %vm235, %v3637, %v3641
      %v3644 = vshrl.u32 %v3553, 16
      %v3646 = vrot.slane %v3644, 4
      %v3647 = vshll.u32 %v3553, 16
      %v3649 = vrot.slane %v3647, 5
      %v3650 = vor.u32 %v3646, %v3649
      %v3651 = vrot.slane %v3650, 4
      %v3653 = vshll.u32 %v3554, 16
      %v3655 = vrot.slane %v3653, 5
      %v3656 = vsel %vm235, %v3651, %v3655
      %v3657 = vshrl.u32 %v3554, 16
      %v3659 = vrot.slane %v3657, 4
      %v3660 = vor.u32 %v3659, %v3655
      %v3661 = vrot.slane %v3660, 4
      %v3663 = vshll.u32 %v3555, 16
      %v3665 = vrot.slane %v3663, 5
      %v3666 = vsel %vm235, %v3661, %v3665
      %v3668 = vshrl.u32 %v3556, 16
      %v3670 = vrot.slane %v3668, 4
      %v3671 = vshll.u32 %v3556, 16
      %v3673 = vrot.slane %v3671, 5
      %v3674 = vor.u32 %v3670, %v3673
      %v3675 = vrot.slane %v3674, 4
      %v3677 = vshll.u32 %v3557, 16
      %v3679 = vrot.slane %v3677, 5
      %v3680 = vsel %vm235, %v3675, %v3679
      %v3681 = vshrl.u32 %v3557, 16
      %v3683 = vrot.slane %v3681, 4
      %v3684 = vor.u32 %v3683, %v3679
      %v3685 = vrot.slane %v3684, 4
      %v3687 = vshll.u32 %v3558, 16
      %v3689 = vrot.slane %v3687, 5
      %v3690 = vsel %vm235, %v3685, %v3689
      %v3692 = vshrl.u32 %v3559, 16
      %v3694 = vrot.slane %v3692, 4
      %v3695 = vshll.u32 %v3559, 16
      %v3697 = vrot.slane %v3695, 5
      %v3698 = vor.u32 %v3694, %v3697
      %v3699 = vrot.slane %v3698, 4
      %v3701 = vshll.u32 %v3560, 16
      %v3703 = vrot.slane %v3701, 5
      %v3704 = vsel %vm235, %v3699, %v3703
      %v3705 = vshrl.u32 %v3560, 16
      %v3707 = vrot.slane %v3705, 4
      %v3708 = vor.u32 %v3707, %v3703
      %v3709 = vrot.slane %v3708, 4
      %v3711 = vshll.u32 %v3561, 16
      %v3713 = vrot.slane %v3711, 5
      %v3714 = vsel %vm235, %v3709, %v3713
      %v3716 = vshrl.u32 %v3562, 16
      %v3718 = vrot.slane %v3716, 4
      %v3719 = vshll.u32 %v3562, 16
      %v3721 = vrot.slane %v3719, 5
      %v3722 = vor.u32 %v3718, %v3721
      %v3723 = vrot.slane %v3722, 4
      %v3725 = vshll.u32 %v3563, 16
      %v3727 = vrot.slane %v3725, 5
      %v3728 = vsel %vm235, %v3723, %v3727
      %v3729 = vshrl.u32 %v3563, 16
      %v3731 = vrot.slane %v3729, 4
      %v3732 = vor.u32 %v3731, %v3727
      %v3733 = vrot.slane %v3732, 4
      %v3735 = vshll.u32 %v3564, 16
      %v3737 = vrot.slane %v3735, 5
      %v3738 = vsel %vm235, %v3733, %v3737
      %v3740 = vshrl.u32 %v3565, 16
      %v3742 = vrot.slane %v3740, 4
      %v3743 = vshll.u32 %v3565, 16
      %v3745 = vrot.slane %v3743, 5
      %v3746 = vor.u32 %v3742, %v3745
      %v3747 = vrot.slane %v3746, 4
      %v3749 = vshll.u32 %v3566, 16
      %v3751 = vrot.slane %v3749, 5
      %v3752 = vsel %vm235, %v3747, %v3751
      %v3753 = vshrl.u32 %v3566, 16
      %v3755 = vrot.slane %v3753, 4
      %v3756 = vor.u32 %v3755, %v3751
      %v3757 = vrot.slane %v3756, 4
      %v3759 = vshll.u32 %v3567, 16
      %v3761 = vrot.slane %v3759, 5
      %v3762 = vsel %vm235, %v3757, %v3761
      %v3764 = vshrl.u32 %v3568, 16
      %v3766 = vrot.slane %v3764, 4
      %v3767 = vshll.u32 %v3568, 16
      %v3769 = vrot.slane %v3767, 5
      %v3770 = vor.u32 %v3766, %v3769
      %v3771 = vrot.slane %v3770, 4
      %v3773 = vshll.u32 %v3569, 16
      %v3775 = vrot.slane %v3773, 5
      %v3776 = vsel %vm235, %v3771, %v3775
      %v3777 = vshrl.u32 %v3569, 16
      %v3779 = vrot.slane %v3777, 4
      %v3780 = vor.u32 %v3779, %v3775
      %v3781 = vrot.slane %v3780, 4
      %v3783 = vshll.u32 %v3570, 16
      %v3785 = vrot.slane %v3783, 5
      %v3786 = vsel %vm235, %v3781, %v3785
      %v3788 = vshrl.u32 %v3571, 16
      %v3790 = vrot.slane %v3788, 4
      %v3791 = vshll.u32 %v3571, 16
      %v3793 = vrot.slane %v3791, 5
      %v3794 = vor.u32 %v3790, %v3793
      %v3795 = vrot.slane %v3794, 4
      %v3797 = vshll.u32 %v3572, 16
      %v3799 = vrot.slane %v3797, 5
      %v3800 = vsel %vm235, %v3795, %v3799
      %v3801 = vshrl.u32 %v3572, 16
      %v3803 = vrot.slane %v3801, 4
      %v3804 = vor.u32 %v3803, %v3799
      %v3805 = vrot.slane %v3804, 4
      %v3807 = vshll.u32 %v3573, 16
      %v3809 = vrot.slane %v3807, 5
      %v3810 = vsel %vm235, %v3805, %v3809
      %v3812 = vshrl.u32 %v3574, 16
      %v3814 = vrot.slane %v3812, 4
      %v3815 = vshll.u32 %v3574, 16
      %v3817 = vrot.slane %v3815, 5
      %v3818 = vor.u32 %v3814, %v3817
      %v3819 = vrot.slane %v3818, 4
      %v3821 = vshll.u32 %v3575, 16
      %v3823 = vrot.slane %v3821, 5
      %v3824 = vsel %vm235, %v3819, %v3823
      %v3825 = vshrl.u32 %v3575, 16
      %v3827 = vrot.slane %v3825, 4
      %v3828 = vor.u32 %v3827, %v3823
      %v3829 = vrot.slane %v3828, 4
      %v3831 = vshll.u32 %v3576, 16
      %v3833 = vrot.slane %v3831, 5
      %v3834 = vsel %vm235, %v3829, %v3833
      %v3836 = vshrl.u32 %v3577, 16
      %v3838 = vrot.slane %v3836, 4
      %v3839 = vshll.u32 %v3577, 16
      %v3841 = vrot.slane %v3839, 5
      %v3842 = vor.u32 %v3838, %v3841
      %v3843 = vrot.slane %v3842, 4
      %v3845 = vshll.u32 %v3578, 16
      %v3847 = vrot.slane %v3845, 5
      %v3848 = vsel %vm235, %v3843, %v3847
      %v3849 = vshrl.u32 %v3578, 16
      %v3851 = vrot.slane %v3849, 4
      %v3852 = vor.u32 %v3851, %v3847
      %v3853 = vrot.slane %v3852, 4
      %v3855 = vshll.u32 %v3579, 16
      %v3857 = vrot.slane %v3855, 5
      %v3858 = vsel %vm235, %v3853, %v3857
      %v3860 = vshrl.u32 %v3580, 16
      %v3862 = vrot.slane %v3860, 4
      %v3863 = vshll.u32 %v3580, 16
      %v3865 = vrot.slane %v3863, 5
      %v3866 = vor.u32 %v3862, %v3865
      %v3867 = vrot.slane %v3866, 4
      %v3869 = vshll.u32 %v3581, 16
      %v3871 = vrot.slane %v3869, 5
      %v3872 = vsel %vm235, %v3867, %v3871
      %v3873 = vshrl.u32 %v3581, 16
      %v3875 = vrot.slane %v3873, 4
      %v3876 = vor.u32 %v3875, %v3871
      %v3877 = vrot.slane %v3876, 4
      %v3879 = vshll.u32 %v3582, 16
      %v3881 = vrot.slane %v3879, 5
      %v3882 = vsel %vm235, %v3877, %v3881
      %v3884 = vshrl.u32 %v3583, 16
      %v3886 = vrot.slane %v3884, 4
      %v3887 = vshll.u32 %v3583, 16
      %v3889 = vrot.slane %v3887, 5
      %v3890 = vor.u32 %v3886, %v3889
      %v3891 = vrot.slane %v3890, 4
      %v3893 = vshll.u32 %v3584, 16
      %v3895 = vrot.slane %v3893, 5
      %v3896 = vsel %vm235, %v3891, %v3895
      %v3897 = vshrl.u32 %v3584, 16
      %v3899 = vrot.slane %v3897, 4
      %v3900 = vor.u32 %v3899, %v3895
      %v3901 = vrot.slane %v3900, 4
      %v3903 = vshll.u32 %v3585, 16
      %v3905 = vrot.slane %v3903, 5
      %v3906 = vsel %vm235, %v3901, %v3905
      %v3908 = vshrl.u32 %v3586, 16
      %v3910 = vrot.slane %v3908, 4
      %v3911 = vshll.u32 %v3586, 16
      %v3913 = vrot.slane %v3911, 5
      %v3914 = vor.u32 %v3910, %v3913
      %v3915 = vrot.slane %v3914, 4
      %v3917 = vshll.u32 %v3587, 16
      %v3919 = vrot.slane %v3917, 5
      %v3920 = vsel %vm235, %v3915, %v3919
      %v3921 = vshrl.u32 %v3587, 16
      %v3923 = vrot.slane %v3921, 4
      %v3924 = vor.u32 %v3923, %v3919
      %v3925 = vrot.slane %v3924, 4
      %v3927 = vshll.u32 %v3588, 16
      %v3929 = vrot.slane %v3927, 5
      %v3930 = vsel %vm235, %v3925, %v3929
      %v3932 = vshrl.u32 %v3589, 16
      %v3934 = vrot.slane %v3932, 4
      %v3935 = vshll.u32 %v3589, 16
      %v3937 = vrot.slane %v3935, 5
      %v3938 = vor.u32 %v3934, %v3937
      %v3939 = vrot.slane %v3938, 4
      %v3941 = vshll.u32 %v3590, 16
      %v3943 = vrot.slane %v3941, 5
      %v3944 = vsel %vm235, %v3939, %v3943
      %v3945 = vshrl.u32 %v3590, 16
      %v3947 = vrot.slane %v3945, 4
      %v3948 = vor.u32 %v3947, %v3943
      %v3949 = vrot.slane %v3948, 4
      %v3951 = vshll.u32 %v3591, 16
      %v3953 = vrot.slane %v3951, 5
      %v3954 = vsel %vm235, %v3949, %v3953
      %v3956 = vshrl.u32 %v3592, 16
      %v3958 = vrot.slane %v3956, 4
      %v3959 = vshll.u32 %v3592, 16
      %v3961 = vrot.slane %v3959, 5
      %v3962 = vor.u32 %v3958, %v3961
      %v3963 = vrot.slane %v3962, 4
      %v3965 = vshll.u32 %v3593, 16
      %v3967 = vrot.slane %v3965, 5
      %v3968 = vsel %vm235, %v3963, %v3967
      %v3969 = vshrl.u32 %v3593, 16
      %v3971 = vrot.slane %v3969, 4
      %v3972 = vor.u32 %v3971, %v3967
      %v3973 = vrot.slane %v3972, 4
      %v3975 = vshll.u32 %v3594, 16
      %v3977 = vrot.slane %v3975, 5
      %v3978 = vsel %vm235, %v3973, %v3977
      %s3979 = scalar_lea.vmem %s1, 28
      %v3980 = vld [vmem:[%s3979] sm:$0xf]
      %v3981 = vunpack.c.l.b16 %v3608
      %v3982 = vunpack.c.l.b16 %v3618
      %v3983 = vunpack.c.l.b16 %v3632
      %v3984 = vunpack.c.l.b16 %v3642
      %v3985 = vunpack.c.l.b16 %v3656
      %v3986 = vunpack.c.l.b16 %v3666
      %v3987 = vunpack.c.l.b16 %v3680
      %v3988 = vunpack.c.l.b16 %v3690
      %v3989 = vunpack.c.l.b16 %v3704
      %v3990 = vunpack.c.l.b16 %v3714
      %v3991 = vunpack.c.l.b16 %v3728
      %v3992 = vunpack.c.l.b16 %v3738
      %v3993 = vunpack.c.l.b16 %v3752
      %v3994 = vunpack.c.l.b16 %v3762
      %v3995 = vunpack.c.l.b16 %v3776
      %v3996 = vunpack.c.l.b16 %v3786
      %v3997 = vunpack.c.l.b16 %v3800
      %v3998 = vunpack.c.l.b16 %v3810
      %v3999 = vunpack.c.l.b16 %v3824
      %v4000 = vunpack.c.l.b16 %v3834
      %v4001 = vunpack.c.l.b16 %v3848
      %v4002 = vunpack.c.l.b16 %v3858
      %v4003 = vunpack.c.l.b16 %v3872
      %v4004 = vunpack.c.l.b16 %v3882
      %v4005 = vunpack.c.l.b16 %v3896
      %v4006 = vunpack.c.l.b16 %v3906
      %v4007 = vunpack.c.l.b16 %v3920
      %v4008 = vunpack.c.l.b16 %v3930
      %v4009 = vunpack.c.l.b16 %v3944
      %v4010 = vunpack.c.l.b16 %v3954
      %v4011 = vunpack.c.l.b16 %v3968
      %v4012 = vunpack.c.l.b16 %v3978
      %v4013 = vpack.c.b16 %v3982, %v3981
      %v4014 = vpack.c.b16 %v3984, %v3983
      %v4015 = vpack.c.b16 %v3986, %v3985
      %v4016 = vpack.c.b16 %v3988, %v3987
      %v4017 = vpack.c.b16 %v3990, %v3989
      %v4018 = vpack.c.b16 %v3992, %v3991
      %v4019 = vpack.c.b16 %v3994, %v3993
      %v4020 = vpack.c.b16 %v3996, %v3995
      %v4021 = vpack.c.b16 %v3998, %v3997
      %v4022 = vpack.c.b16 %v4000, %v3999
      %v4023 = vpack.c.b16 %v4002, %v4001
      %v4024 = vpack.c.b16 %v4004, %v4003
      %v4025 = vpack.c.b16 %v4006, %v4005
      %v4026 = vpack.c.b16 %v4008, %v4007
      %v4027 = vpack.c.b16 %v4010, %v4009
      %v4028 = vpack.c.b16 %v4012, %v4011
      %v4030 = vsel %vm670, %v4013, 0
      %v4033 = vsel %vm670, %v4014, 0
      %v4036 = vsel %vm670, %v4015, 0
      %v4039 = vsel %vm670, %v4016, 0
      %v4042 = vsel %vm670, %v4017, 0
      %v4045 = vsel %vm670, %v4018, 0
      %v4048 = vsel %vm670, %v4019, 0
      %v4051 = vsel %vm670, %v4020, 0
      %v4054 = vsel %vm670, %v4021, 0
      %v4057 = vsel %vm670, %v4022, 0
      %v4060 = vsel %vm670, %v4023, 0
      %v4063 = vsel %vm670, %v4024, 0
      %v4066 = vsel %vm670, %v4025, 0
      %v4069 = vsel %vm670, %v4026, 0
      %v4072 = vsel %vm670, %v4027, 0
      %v4075 = vsel %vm670, %v4028, 0
      %v4078 = vsel %vm719, %v3980, 0
      %4080 = vmatprep.subr.bf16.mxu0 0
      %4081 = vmatpush1.bf16.msra.mxu0 %v4078
      %4082 = vmatprep.subr.bf16.mxu0 0
      %4083 = vmatpush1.bf16.msra.mxu0 0
      %4084 = vmatprep.subr.bf16.mxu0 0
      %4085 = vmatpush1.bf16.msra.mxu0 0
      %4086 = vmatprep.subr.bf16.mxu0 0
      %4087 = vmatpush1.bf16.msra.mxu0 0
      %4088 = vmatprep.subr.bf16.mxu0 0
      %4089 = vmatpush1.bf16.msra.mxu0 0
      %4090 = vmatprep.subr.bf16.mxu0 0
      %4091 = vmatpush1.bf16.msra.mxu0 0
      %4092 = vmatprep.subr.bf16.mxu0 0
      %4093 = vmatpush1.bf16.msra.mxu0 0
      %4094 = vmatprep.subr.bf16.mxu0 0
      %4095 = vmatpush1.bf16.msra.mxu0 0
      %4096 = vmatprep.subr.bf16.mxu0 0
      %4097 = vmatpush1.bf16.msra.mxu0 0
      %4098 = vmatprep.subr.bf16.mxu0 0
      %4099 = vmatpush1.bf16.msra.mxu0 0
      %4100 = vmatprep.subr.bf16.mxu0 0
      %4101 = vmatpush1.bf16.msra.mxu0 0
      %4102 = vmatprep.subr.bf16.mxu0 0
      %4103 = vmatpush1.bf16.msra.mxu0 0
      %4104 = vmatprep.subr.bf16.mxu0 0
      %4105 = vmatpush1.bf16.msra.mxu0 0
      %4106 = vmatprep.subr.bf16.mxu0 0
      %4107 = vmatpush1.bf16.msra.mxu0 0
      %4108 = vmatprep.subr.bf16.mxu0 0
      %4109 = vmatpush1.bf16.msra.mxu0 0
      %4110 = vmatprep.subr.bf16.mxu0 0
      %4111 = vmatpush1.bf16.msra.mxu0 0
      %4112 = vmatprep.mubr.bf16.mxu0 0
      %4113 = vmatmul.mubr.bf16.gmra.mrb[0].mxu0 %v4030
      %v4114 = vpop.f32.mrb[0].mxu0
      %v4115 = vadd.f32 0.0, %v4114
      %v4116 = vpop.f32.mrb[0].mxu0
      %v4117 = vpop.f32.mrb[0].mxu0
      %v4118 = vadd.f32 0.0, %v4117
      %v4119 = vpop.f32.mrb[0].mxu0
      %4120 = vmatprep.mubr.bf16.mxu0 0
      %4121 = vmatmul.mubr.bf16.gmra.mrb[0].mxu0 %v4033
      %v4122 = vpop.f32.mrb[0].mxu0
      %v4123 = vadd.f32 0.0, %v4122
      %v4124 = vpop.f32.mrb[0].mxu0
      %v4125 = vpop.f32.mrb[0].mxu0
      %v4126 = vadd.f32 0.0, %v4125
      %v4127 = vpop.f32.mrb[0].mxu0
      %4128 = vmatprep.mubr.bf16.mxu0 0
      %4129 = vmatmul.mubr.bf16.gmra.mrb[0].mxu0 %v4036
      %v4130 = vpop.f32.mrb[0].mxu0
      %v4131 = vadd.f32 0.0, %v4130
      %v4132 = vpop.f32.mrb[0].mxu0
      %v4133 = vpop.f32.mrb[0].mxu0
      %v4134 = vadd.f32 0.0, %v4133
      %v4135 = vpop.f32.mrb[0].mxu0
      %4136 = vmatprep.mubr.bf16.mxu0 0
      %4137 = vmatmul.mubr.bf16.gmra.mrb[0].mxu0 %v4039
      %v4138 = vpop.f32.mrb[0].mxu0
      %v4139 = vadd.f32 0.0, %v4138
      %v4140 = vpop.f32.mrb[0].mxu0
      %v4141 = vpop.f32.mrb[0].mxu0
      %v4142 = vadd.f32 0.0, %v4141
      %v4143 = vpop.f32.mrb[0].mxu0
      %4144 = vmatprep.mubr.bf16.mxu0 0
      %4145 = vmatmul.mubr.bf16.gmra.mrb[0].mxu0 %v4042
      %v4146 = vpop.f32.mrb[0].mxu0
      %v4147 = vadd.f32 0.0, %v4146
      %v4148 = vpop.f32.mrb[0].mxu0
      %v4149 = vpop.f32.mrb[0].mxu0
      %v4150 = vadd.f32 0.0, %v4149
      %v4151 = vpop.f32.mrb[0].mxu0
      %4152 = vmatprep.mubr.bf16.mxu0 0
      %4153 = vmatmul.mubr.bf16.gmra.mrb[0].mxu0 %v4045
      %v4154 = vpop.f32.mrb[0].mxu0
      %v4155 = vadd.f32 0.0, %v4154
      %v4156 = vpop.f32.mrb[0].mxu0
      %v4157 = vpop.f32.mrb[0].mxu0
      %v4158 = vadd.f32 0.0, %v4157
      %v4159 = vpop.f32.mrb[0].mxu0
      %4160 = vmatprep.mubr.bf16.mxu0 0
      %4161 = vmatmul.mubr.bf16.gmra.mrb[0].mxu0 %v4048
      %v4162 = vpop.f32.mrb[0].mxu0
      %v4163 = vadd.f32 0.0, %v4162
      %v4164 = vpop.f32.mrb[0].mxu0
      %v4165 = vpop.f32.mrb[0].mxu0
      %v4166 = vadd.f32 0.0, %v4165
      %v4167 = vpop.f32.mrb[0].mxu0
      %4168 = vmatprep.mubr.bf16.mxu0 0
      %4169 = vmatmul.mubr.bf16.gmra.mrb[0].mxu0 %v4051
      %v4170 = vpop.f32.mrb[0].mxu0
      %v4171 = vadd.f32 0.0, %v4170
      %v4172 = vpop.f32.mrb[0].mxu0
      %v4173 = vpop.f32.mrb[0].mxu0
      %v4174 = vadd.f32 0.0, %v4173
      %v4175 = vpop.f32.mrb[0].mxu0
      %4176 = vmatprep.mubr.bf16.mxu0 0
      %4177 = vmatmul.mubr.bf16.gmra.mrb[0].mxu0 %v4054
      %v4178 = vpop.f32.mrb[0].mxu0
      %v4179 = vadd.f32 0.0, %v4178
      %v4180 = vpop.f32.mrb[0].mxu0
      %v4181 = vpop.f32.mrb[0].mxu0
      %v4182 = vadd.f32 0.0, %v4181
      %v4183 = vpop.f32.mrb[0].mxu0
      %4184 = vmatprep.mubr.bf16.mxu0 0
      %4185 = vmatmul.mubr.bf16.gmra.mrb[0].mxu0 %v4057
      %v4186 = vpop.f32.mrb[0].mxu0
      %v4187 = vadd.f32 0.0, %v4186
      %v4188 = vpop.f32.mrb[0].mxu0
      %v4189 = vpop.f32.mrb[0].mxu0
      %v4190 = vadd.f32 0.0, %v4189
      %v4191 = vpop.f32.mrb[0].mxu0
      %4192 = vmatprep.mubr.bf16.mxu0 0
      %4193 = vmatmul.mubr.bf16.gmra.mrb[0].mxu0 %v4060
      %v4194 = vpop.f32.mrb[0].mxu0
      %v4195 = vadd.f32 0.0, %v4194
      %v4196 = vpop.f32.mrb[0].mxu0
      %v4197 = vpop.f32.mrb[0].mxu0
      %v4198 = vadd.f32 0.0, %v4197
      %v4199 = vpop.f32.mrb[0].mxu0
      %4200 = vmatprep.mubr.bf16.mxu0 0
      %4201 = vmatmul.mubr.bf16.gmra.mrb[0].mxu0 %v4063
      %v4202 = vpop.f32.mrb[0].mxu0
      %v4203 = vadd.f32 0.0, %v4202
      %v4204 = vpop.f32.mrb[0].mxu0
      %v4205 = vpop.f32.mrb[0].mxu0
      %v4206 = vadd.f32 0.0, %v4205
      %v4207 = vpop.f32.mrb[0].mxu0
      %4208 = vmatprep.mubr.bf16.mxu0 0
      %4209 = vmatmul.mubr.bf16.gmra.mrb[0].mxu0 %v4066
      %v4210 = vpop.f32.mrb[0].mxu0
      %v4211 = vadd.f32 0.0, %v4210
      %v4212 = vpop.f32.mrb[0].mxu0
      %v4213 = vpop.f32.mrb[0].mxu0
      %v4214 = vadd.f32 0.0, %v4213
      %v4215 = vpop.f32.mrb[0].mxu0
      %4216 = vmatprep.mubr.bf16.mxu0 0
      %4217 = vmatmul.mubr.bf16.gmra.mrb[0].mxu0 %v4069
      %v4218 = vpop.f32.mrb[0].mxu0
      %v4219 = vadd.f32 0.0, %v4218
      %v4220 = vpop.f32.mrb[0].mxu0
      %v4221 = vpop.f32.mrb[0].mxu0
      %v4222 = vadd.f32 0.0, %v4221
      %v4223 = vpop.f32.mrb[0].mxu0
      %4224 = vmatprep.mubr.bf16.mxu0 0
      %4225 = vmatmul.mubr.bf16.gmra.mrb[0].mxu0 %v4072
      %v4226 = vpop.f32.mrb[0].mxu0
      %v4227 = vadd.f32 0.0, %v4226
      %v4228 = vpop.f32.mrb[0].mxu0
      %v4229 = vpop.f32.mrb[0].mxu0
      %v4230 = vadd.f32 0.0, %v4229
      %v4231 = vpop.f32.mrb[0].mxu0
      %4232 = vmatprep.mubr.bf16.mxu0 0
      %4233 = vmatmul.mubr.bf16.gmra.mrb[0].mxu0 %v4075
      %v4234 = vpop.f32.mrb[0].mxu0
      %v4235 = vadd.f32 0.0, %v4234
      %v4236 = vpop.f32.mrb[0].mxu0
      %v4237 = vpop.f32.mrb[0].mxu0
      %v4238 = vadd.f32 0.0, %v4237
      %v4239 = vpop.f32.mrb[0].mxu0
      %4240 = vdwg.mxu0
      %v4241 = vadd.f32 %v3515, %v4115
      %v4242 = vadd.f32 %v3516, %v4118
      %v4243 = vadd.f32 %v3517, %v4123
      %v4244 = vadd.f32 %v3518, %v4126
      %v4245 = vadd.f32 %v3519, %v4131
      %v4246 = vadd.f32 %v3520, %v4134
      %v4247 = vadd.f32 %v3521, %v4139
      %v4248 = vadd.f32 %v3522, %v4142
      %v4249 = vadd.f32 %v3523, %v4147
      %v4250 = vadd.f32 %v3524, %v4150
      %v4251 = vadd.f32 %v3525, %v4155
      %v4252 = vadd.f32 %v3526, %v4158
      %v4253 = vadd.f32 %v3527, %v4163
      %v4254 = vadd.f32 %v3528, %v4166
      %v4255 = vadd.f32 %v3529, %v4171
      %v4256 = vadd.f32 %v3530, %v4174
      %v4257 = vadd.f32 %v3531, %v4179
      %v4258 = vadd.f32 %v3532, %v4182
      %v4259 = vadd.f32 %v3533, %v4187
      %v4260 = vadd.f32 %v3534, %v4190
      %v4261 = vadd.f32 %v3535, %v4195
      %v4262 = vadd.f32 %v3536, %v4198
      %v4263 = vadd.f32 %v3537, %v4203
      %v4264 = vadd.f32 %v3538, %v4206
      %v4265 = vadd.f32 %v3539, %v4211
      %v4266 = vadd.f32 %v3540, %v4214
      %v4267 = vadd.f32 %v3541, %v4219
      %v4268 = vadd.f32 %v3542, %v4222
      %v4269 = vadd.f32 %v3543, %v4227
      %v4270 = vadd.f32 %v3544, %v4230
      %v4271 = vadd.f32 %v3545, %v4235
      %v4272 = vadd.f32 %v3546, %v4238
      %v4273 = vld [vmem:[%s3188] sm:$0xe]
      %v4274 = vld [vmem:[%s3188 + $0xc] sm:$0xe]
      %v4275 = vld [vmem:[%s3188 + $0x18] sm:$0xe]
      %v4276 = vld [vmem:[%s3188 + $0x24] sm:$0xe]
      %v4277 = vld [vmem:[%s3188 + $0x30] sm:$0xe]
      %v4278 = vld [vmem:[%s3188 + $0x3c] sm:$0xe]
      %v4279 = vld [vmem:[%s3188 + $0x48] sm:$0xe]
      %v4280 = vld [vmem:[%s3188 + $0x54] sm:$0xe]
      %v4281 = vld [vmem:[%s3188 + $0x60] sm:$0xe]
      %v4282 = vld [vmem:[%s3188 + $0x6c] sm:$0xe]
      %v4283 = vld [vmem:[%s3188 + $0x78] sm:$0xe]
      %v4284 = vld [vmem:[%s3188 + $0x84] sm:$0xe]
      %v4285 = vld [vmem:[%s3188 + $0x90] sm:$0xe]
      %v4286 = vld [vmem:[%s3188 + $0x9c] sm:$0xe]
      %v4287 = vld [vmem:[%s3188 + $0xa8] sm:$0xe]
      %v4288 = vld [vmem:[%s3188 + $0xb4] sm:$0xe]
      %v4337 = vrot.slane %v4273, 5
      %v4338 = vrot.slane %v4337, 4
      %v4339 = vrot.slane %v3548, 5
      %v4340 = vsel %vm1226, %v4338, %v4339
      %v4341 = vrot.slane %v4339, 4
      %v4342 = vrot.slane %v3549, 5
      %v4343 = vsel %vm1226, %v4341, %v4342
      %v4344 = vrot.slane %v4274, 5
      %v4345 = vrot.slane %v4344, 4
      %v4346 = vrot.slane %v3551, 5
      %v4347 = vsel %vm1226, %v4345, %v4346
      %v4348 = vrot.slane %v4346, 4
      %v4349 = vrot.slane %v3552, 5
      %v4350 = vsel %vm1226, %v4348, %v4349
      %v4351 = vrot.slane %v4275, 5
      %v4352 = vrot.slane %v4351, 4
      %v4353 = vrot.slane %v3554, 5
      %v4354 = vsel %vm1226, %v4352, %v4353
      %v4355 = vrot.slane %v4353, 4
      %v4356 = vrot.slane %v3555, 5
      %v4357 = vsel %vm1226, %v4355, %v4356
      %v4358 = vrot.slane %v4276, 5
      %v4359 = vrot.slane %v4358, 4
      %v4360 = vrot.slane %v3557, 5
      %v4361 = vsel %vm1226, %v4359, %v4360
      %v4362 = vrot.slane %v4360, 4
      %v4363 = vrot.slane %v3558, 5
      %v4364 = vsel %vm1226, %v4362, %v4363
      %v4365 = vrot.slane %v4277, 5
      %v4366 = vrot.slane %v4365, 4
      %v4367 = vrot.slane %v3560, 5
      %v4368 = vsel %vm1226, %v4366, %v4367
      %v4369 = vrot.slane %v4367, 4
      %v4370 = vrot.slane %v3561, 5
      %v4371 = vsel %vm1226, %v4369, %v4370
      %v4372 = vrot.slane %v4278, 5
      %v4373 = vrot.slane %v4372, 4
      %v4374 = vrot.slane %v3563, 5
      %v4375 = vsel %vm1226, %v4373, %v4374
      %v4376 = vrot.slane %v4374, 4
      %v4377 = vrot.slane %v3564, 5
      %v4378 = vsel %vm1226, %v4376, %v4377
      %v4379 = vrot.slane %v4279, 5
      %v4380 = vrot.slane %v4379, 4
      %v4381 = vrot.slane %v3566, 5
      %v4382 = vsel %vm1226, %v4380, %v4381
      %v4383 = vrot.slane %v4381, 4
      %v4384 = vrot.slane %v3567, 5
      %v4385 = vsel %vm1226, %v4383, %v4384
      %v4386 = vrot.slane %v4280, 5
      %v4387 = vrot.slane %v4386, 4
      %v4388 = vrot.slane %v3569, 5
      %v4389 = vsel %vm1226, %v4387, %v4388
      %v4390 = vrot.slane %v4388, 4
      %v4391 = vrot.slane %v3570, 5
      %v4392 = vsel %vm1226, %v4390, %v4391
      %v4393 = vrot.slane %v4281, 5
      %v4394 = vrot.slane %v4393, 4
      %v4395 = vrot.slane %v3572, 5
      %v4396 = vsel %vm1226, %v4394, %v4395
      %v4397 = vrot.slane %v4395, 4
      %v4398 = vrot.slane %v3573, 5
      %v4399 = vsel %vm1226, %v4397, %v4398
      %v4400 = vrot.slane %v4282, 5
      %v4401 = vrot.slane %v4400, 4
      %v4402 = vrot.slane %v3575, 5
      %v4403 = vsel %vm1226, %v4401, %v4402
      %v4404 = vrot.slane %v4402, 4
      %v4405 = vrot.slane %v3576, 5
      %v4406 = vsel %vm1226, %v4404, %v4405
      %v4407 = vrot.slane %v4283, 5
      %v4408 = vrot.slane %v4407, 4
      %v4409 = vrot.slane %v3578, 5
      %v4410 = vsel %vm1226, %v4408, %v4409
      %v4411 = vrot.slane %v4409, 4
      %v4412 = vrot.slane %v3579, 5
      %v4413 = vsel %vm1226, %v4411, %v4412
      %v4414 = vrot.slane %v4284, 5
      %v4415 = vrot.slane %v4414, 4
      %v4416 = vrot.slane %v3581, 5
      %v4417 = vsel %vm1226, %v4415, %v4416
      %v4418 = vrot.slane %v4416, 4
      %v4419 = vrot.slane %v3582, 5
      %v4420 = vsel %vm1226, %v4418, %v4419
      %v4421 = vrot.slane %v4285, 5
      %v4422 = vrot.slane %v4421, 4
      %v4423 = vrot.slane %v3584, 5
      %v4424 = vsel %vm1226, %v4422, %v4423
      %v4425 = vrot.slane %v4423, 4
      %v4426 = vrot.slane %v3585, 5
      %v4427 = vsel %vm1226, %v4425, %v4426
      %v4428 = vrot.slane %v4286, 5
      %v4429 = vrot.slane %v4428, 4
      %v4430 = vrot.slane %v3587, 5
      %v4431 = vsel %vm1226, %v4429, %v4430
      %v4432 = vrot.slane %v4430, 4
      %v4433 = vrot.slane %v3588, 5
      %v4434 = vsel %vm1226, %v4432, %v4433
      %v4435 = vrot.slane %v4287, 5
      %v4436 = vrot.slane %v4435, 4
      %v4437 = vrot.slane %v3590, 5
      %v4438 = vsel %vm1226, %v4436, %v4437
      %v4439 = vrot.slane %v4437, 4
      %v4440 = vrot.slane %v3591, 5
      %v4441 = vsel %vm1226, %v4439, %v4440
      %v4442 = vrot.slane %v4288, 5
      %v4443 = vrot.slane %v4442, 4
      %v4444 = vrot.slane %v3593, 5
      %v4445 = vsel %vm1226, %v4443, %v4444
      %v4446 = vrot.slane %v4444, 4
      %v4447 = vrot.slane %v3594, 5
      %v4448 = vsel %vm1226, %v4446, %v4447
      %s4449 = scalar_lea.vmem %s1, 32
      %v4450 = vld [vmem:[%s4449] sm:$0xf]
      %v4451 = vunpack.c.l.b16 %v4340
      %v4452 = vunpack.c.l.b16 %v4343
      %v4453 = vunpack.c.l.b16 %v4347
      %v4454 = vunpack.c.l.b16 %v4350
      %v4455 = vunpack.c.l.b16 %v4354
      %v4456 = vunpack.c.l.b16 %v4357
      %v4457 = vunpack.c.l.b16 %v4361
      %v4458 = vunpack.c.l.b16 %v4364
      %v4459 = vunpack.c.l.b16 %v4368
      %v4460 = vunpack.c.l.b16 %v4371
      %v4461 = vunpack.c.l.b16 %v4375
      %v4462 = vunpack.c.l.b16 %v4378
      %v4463 = vunpack.c.l.b16 %v4382
      %v4464 = vunpack.c.l.b16 %v4385
      %v4465 = vunpack.c.l.b16 %v4389
      %v4466 = vunpack.c.l.b16 %v4392
      %v4467 = vunpack.c.l.b16 %v4396
      %v4468 = vunpack.c.l.b16 %v4399
      %v4469 = vunpack.c.l.b16 %v4403
      %v4470 = vunpack.c.l.b16 %v4406
      %v4471 = vunpack.c.l.b16 %v4410
      %v4472 = vunpack.c.l.b16 %v4413
      %v4473 = vunpack.c.l.b16 %v4417
      %v4474 = vunpack.c.l.b16 %v4420
      %v4475 = vunpack.c.l.b16 %v4424
      %v4476 = vunpack.c.l.b16 %v4427
      %v4477 = vunpack.c.l.b16 %v4431
      %v4478 = vunpack.c.l.b16 %v4434
      %v4479 = vunpack.c.l.b16 %v4438
      %v4480 = vunpack.c.l.b16 %v4441
      %v4481 = vunpack.c.l.b16 %v4445
      %v4482 = vunpack.c.l.b16 %v4448
      %v4483 = vpack.c.b16 %v4452, %v4451
      %v4484 = vpack.c.b16 %v4454, %v4453
      %v4485 = vpack.c.b16 %v4456, %v4455
      %v4486 = vpack.c.b16 %v4458, %v4457
      %v4487 = vpack.c.b16 %v4460, %v4459
      %v4488 = vpack.c.b16 %v4462, %v4461
      %v4489 = vpack.c.b16 %v4464, %v4463
      %v4490 = vpack.c.b16 %v4466, %v4465
      %v4491 = vpack.c.b16 %v4468, %v4467
      %v4492 = vpack.c.b16 %v4470, %v4469
      %v4493 = vpack.c.b16 %v4472, %v4471
      %v4494 = vpack.c.b16 %v4474, %v4473
      %v4495 = vpack.c.b16 %v4476, %v4475
      %v4496 = vpack.c.b16 %v4478, %v4477
      %v4497 = vpack.c.b16 %v4480, %v4479
      %v4498 = vpack.c.b16 %v4482, %v4481
      %v4500 = vsel %vm670, %v4483, 0
      %v4503 = vsel %vm670, %v4484, 0
      %v4506 = vsel %vm670, %v4485, 0
      %v4509 = vsel %vm670, %v4486, 0
      %v4512 = vsel %vm670, %v4487, 0
      %v4515 = vsel %vm670, %v4488, 0
      %v4518 = vsel %vm670, %v4489, 0
      %v4521 = vsel %vm670, %v4490, 0
      %v4524 = vsel %vm670, %v4491, 0
      %v4527 = vsel %vm670, %v4492, 0
      %v4530 = vsel %vm670, %v4493, 0
      %v4533 = vsel %vm670, %v4494, 0
      %v4536 = vsel %vm670, %v4495, 0
      %v4539 = vsel %vm670, %v4496, 0
      %v4542 = vsel %vm670, %v4497, 0
      %v4545 = vsel %vm670, %v4498, 0
      %v4548 = vsel %vm719, %v4450, 0
      %4550 = vmatprep.subr.bf16.mxu0 0
      %4551 = vmatpush1.bf16.msra.mxu0 %v4548
      %4552 = vmatprep.subr.bf16.mxu0 0
      %4553 = vmatpush1.bf16.msra.mxu0 0
      %4554 = vmatprep.subr.bf16.mxu0 0
      %4555 = vmatpush1.bf16.msra.mxu0 0
      %4556 = vmatprep.subr.bf16.mxu0 0
      %4557 = vmatpush1.bf16.msra.mxu0 0
      %4558 = vmatprep.subr.bf16.mxu0 0
      %4559 = vmatpush1.bf16.msra.mxu0 0
      %4560 = vmatprep.subr.bf16.mxu0 0
      %4561 = vmatpush1.bf16.msra.mxu0 0
      %4562 = vmatprep.subr.bf16.mxu0 0
      %4563 = vmatpush1.bf16.msra.mxu0 0
      %4564 = vmatprep.subr.bf16.mxu0 0
      %4565 = vmatpush1.bf16.msra.mxu0 0
      %4566 = vmatprep.subr.bf16.mxu0 0
      %4567 = vmatpush1.bf16.msra.mxu0 0
      %4568 = vmatprep.subr.bf16.mxu0 0
      %4569 = vmatpush1.bf16.msra.mxu0 0
      %4570 = vmatprep.subr.bf16.mxu0 0
      %4571 = vmatpush1.bf16.msra.mxu0 0
      %4572 = vmatprep.subr.bf16.mxu0 0
      %4573 = vmatpush1.bf16.msra.mxu0 0
      %4574 = vmatprep.subr.bf16.mxu0 0
      %4575 = vmatpush1.bf16.msra.mxu0 0
      %4576 = vmatprep.subr.bf16.mxu0 0
      %4577 = vmatpush1.bf16.msra.mxu0 0
      %4578 = vmatprep.subr.bf16.mxu0 0
      %4579 = vmatpush1.bf16.msra.mxu0 0
      %4580 = vmatprep.subr.bf16.mxu0 0
      %4581 = vmatpush1.bf16.msra.mxu0 0
      %4582 = vmatprep.mubr.bf16.mxu0 0
      %4583 = vmatmul.mubr.bf16.gmra.mrb[0].mxu0 %v4500
      %v4584 = vpop.f32.mrb[0].mxu0
      %v4585 = vadd.f32 0.0, %v4584
      %v4586 = vpop.f32.mrb[0].mxu0
      %v4587 = vpop.f32.mrb[0].mxu0
      %v4588 = vadd.f32 0.0, %v4587
      %v4589 = vpop.f32.mrb[0].mxu0
      %4590 = vmatprep.mubr.bf16.mxu0 0
      %4591 = vmatmul.mubr.bf16.gmra.mrb[0].mxu0 %v4503
      %v4592 = vpop.f32.mrb[0].mxu0
      %v4593 = vadd.f32 0.0, %v4592
      %v4594 = vpop.f32.mrb[0].mxu0
      %v4595 = vpop.f32.mrb[0].mxu0
      %v4596 = vadd.f32 0.0, %v4595
      %v4597 = vpop.f32.mrb[0].mxu0
      %4598 = vmatprep.mubr.bf16.mxu0 0
      %4599 = vmatmul.mubr.bf16.gmra.mrb[0].mxu0 %v4506
      %v4600 = vpop.f32.mrb[0].mxu0
      %v4601 = vadd.f32 0.0, %v4600
      %v4602 = vpop.f32.mrb[0].mxu0
      %v4603 = vpop.f32.mrb[0].mxu0
      %v4604 = vadd.f32 0.0, %v4603
      %v4605 = vpop.f32.mrb[0].mxu0
      %4606 = vmatprep.mubr.bf16.mxu0 0
      %4607 = vmatmul.mubr.bf16.gmra.mrb[0].mxu0 %v4509
      %v4608 = vpop.f32.mrb[0].mxu0
      %v4609 = vadd.f32 0.0, %v4608
      %v4610 = vpop.f32.mrb[0].mxu0
      %v4611 = vpop.f32.mrb[0].mxu0
      %v4612 = vadd.f32 0.0, %v4611
      %v4613 = vpop.f32.mrb[0].mxu0
      %4614 = vmatprep.mubr.bf16.mxu0 0
      %4615 = vmatmul.mubr.bf16.gmra.mrb[0].mxu0 %v4512
      %v4616 = vpop.f32.mrb[0].mxu0
      %v4617 = vadd.f32 0.0, %v4616
      %v4618 = vpop.f32.mrb[0].mxu0
      %v4619 = vpop.f32.mrb[0].mxu0
      %v4620 = vadd.f32 0.0, %v4619
      %v4621 = vpop.f32.mrb[0].mxu0
      %4622 = vmatprep.mubr.bf16.mxu0 0
      %4623 = vmatmul.mubr.bf16.gmra.mrb[0].mxu0 %v4515
      %v4624 = vpop.f32.mrb[0].mxu0
      %v4625 = vadd.f32 0.0, %v4624
      %v4626 = vpop.f32.mrb[0].mxu0
      %v4627 = vpop.f32.mrb[0].mxu0
      %v4628 = vadd.f32 0.0, %v4627
      %v4629 = vpop.f32.mrb[0].mxu0
      %4630 = vmatprep.mubr.bf16.mxu0 0
      %4631 = vmatmul.mubr.bf16.gmra.mrb[0].mxu0 %v4518
      %v4632 = vpop.f32.mrb[0].mxu0
      %v4633 = vadd.f32 0.0, %v4632
      %v4634 = vpop.f32.mrb[0].mxu0
      %v4635 = vpop.f32.mrb[0].mxu0
      %v4636 = vadd.f32 0.0, %v4635
      %v4637 = vpop.f32.mrb[0].mxu0
      %4638 = vmatprep.mubr.bf16.mxu0 0
      %4639 = vmatmul.mubr.bf16.gmra.mrb[0].mxu0 %v4521
      %v4640 = vpop.f32.mrb[0].mxu0
      %v4641 = vadd.f32 0.0, %v4640
      %v4642 = vpop.f32.mrb[0].mxu0
      %v4643 = vpop.f32.mrb[0].mxu0
      %v4644 = vadd.f32 0.0, %v4643
      %v4645 = vpop.f32.mrb[0].mxu0
      %4646 = vmatprep.mubr.bf16.mxu0 0
      %4647 = vmatmul.mubr.bf16.gmra.mrb[0].mxu0 %v4524
      %v4648 = vpop.f32.mrb[0].mxu0
      %v4649 = vadd.f32 0.0, %v4648
      %v4650 = vpop.f32.mrb[0].mxu0
      %v4651 = vpop.f32.mrb[0].mxu0
      %v4652 = vadd.f32 0.0, %v4651
      %v4653 = vpop.f32.mrb[0].mxu0
      %4654 = vmatprep.mubr.bf16.mxu0 0
      %4655 = vmatmul.mubr.bf16.gmra.mrb[0].mxu0 %v4527
      %v4656 = vpop.f32.mrb[0].mxu0
      %v4657 = vadd.f32 0.0, %v4656
      %v4658 = vpop.f32.mrb[0].mxu0
      %v4659 = vpop.f32.mrb[0].mxu0
      %v4660 = vadd.f32 0.0, %v4659
      %v4661 = vpop.f32.mrb[0].mxu0
      %4662 = vmatprep.mubr.bf16.mxu0 0
      %4663 = vmatmul.mubr.bf16.gmra.mrb[0].mxu0 %v4530
      %v4664 = vpop.f32.mrb[0].mxu0
      %v4665 = vadd.f32 0.0, %v4664
      %v4666 = vpop.f32.mrb[0].mxu0
      %v4667 = vpop.f32.mrb[0].mxu0
      %v4668 = vadd.f32 0.0, %v4667
      %v4669 = vpop.f32.mrb[0].mxu0
      %4670 = vmatprep.mubr.bf16.mxu0 0
      %4671 = vmatmul.mubr.bf16.gmra.mrb[0].mxu0 %v4533
      %v4672 = vpop.f32.mrb[0].mxu0
      %v4673 = vadd.f32 0.0, %v4672
      %v4674 = vpop.f32.mrb[0].mxu0
      %v4675 = vpop.f32.mrb[0].mxu0
      %v4676 = vadd.f32 0.0, %v4675
      %v4677 = vpop.f32.mrb[0].mxu0
      %4678 = vmatprep.mubr.bf16.mxu0 0
      %4679 = vmatmul.mubr.bf16.gmra.mrb[0].mxu0 %v4536
      %v4680 = vpop.f32.mrb[0].mxu0
      %v4681 = vadd.f32 0.0, %v4680
      %v4682 = vpop.f32.mrb[0].mxu0
      %v4683 = vpop.f32.mrb[0].mxu0
      %v4684 = vadd.f32 0.0, %v4683
      %v4685 = vpop.f32.mrb[0].mxu0
      %4686 = vmatprep.mubr.bf16.mxu0 0
      %4687 = vmatmul.mubr.bf16.gmra.mrb[0].mxu0 %v4539
      %v4688 = vpop.f32.mrb[0].mxu0
      %v4689 = vadd.f32 0.0, %v4688
      %v4690 = vpop.f32.mrb[0].mxu0
      %v4691 = vpop.f32.mrb[0].mxu0
      %v4692 = vadd.f32 0.0, %v4691
      %v4693 = vpop.f32.mrb[0].mxu0
      %4694 = vmatprep.mubr.bf16.mxu0 0
      %4695 = vmatmul.mubr.bf16.gmra.mrb[0].mxu0 %v4542
      %v4696 = vpop.f32.mrb[0].mxu0
      %v4697 = vadd.f32 0.0, %v4696
      %v4698 = vpop.f32.mrb[0].mxu0
      %v4699 = vpop.f32.mrb[0].mxu0
      %v4700 = vadd.f32 0.0, %v4699
      %v4701 = vpop.f32.mrb[0].mxu0
      %4702 = vmatprep.mubr.bf16.mxu0 0
      %4703 = vmatmul.mubr.bf16.gmra.mrb[0].mxu0 %v4545
      %v4704 = vpop.f32.mrb[0].mxu0
      %v4705 = vadd.f32 0.0, %v4704
      %v4706 = vpop.f32.mrb[0].mxu0
      %v4707 = vpop.f32.mrb[0].mxu0
      %v4708 = vadd.f32 0.0, %v4707
      %v4709 = vpop.f32.mrb[0].mxu0
      %4710 = vdwg.mxu0
      %v4711 = vadd.f32 %v4241, %v4585
      %v4712 = vadd.f32 %v4242, %v4588
      %v4713 = vadd.f32 %v4243, %v4593
      %v4714 = vadd.f32 %v4244, %v4596
      %v4715 = vadd.f32 %v4245, %v4601
      %v4716 = vadd.f32 %v4246, %v4604
      %v4717 = vadd.f32 %v4247, %v4609
      %v4718 = vadd.f32 %v4248, %v4612
      %v4719 = vadd.f32 %v4249, %v4617
      %v4720 = vadd.f32 %v4250, %v4620
      %v4721 = vadd.f32 %v4251, %v4625
      %v4722 = vadd.f32 %v4252, %v4628
      %v4723 = vadd.f32 %v4253, %v4633
      %v4724 = vadd.f32 %v4254, %v4636
      %v4725 = vadd.f32 %v4255, %v4641
      %v4726 = vadd.f32 %v4256, %v4644
      %v4727 = vadd.f32 %v4257, %v4649
      %v4728 = vadd.f32 %v4258, %v4652
      %v4729 = vadd.f32 %v4259, %v4657
      %v4730 = vadd.f32 %v4260, %v4660
      %v4731 = vadd.f32 %v4261, %v4665
      %v4732 = vadd.f32 %v4262, %v4668
      %v4733 = vadd.f32 %v4263, %v4673
      %v4734 = vadd.f32 %v4264, %v4676
      %v4735 = vadd.f32 %v4265, %v4681
      %v4736 = vadd.f32 %v4266, %v4684
      %v4737 = vadd.f32 %v4267, %v4689
      %v4738 = vadd.f32 %v4268, %v4692
      %v4739 = vadd.f32 %v4269, %v4697
      %v4740 = vadd.f32 %v4270, %v4700
      %v4741 = vadd.f32 %v4271, %v4705
      %v4742 = vadd.f32 %v4272, %v4708
      %v4743 = vpack.c.bf16 %v4712, %v4711
      %v4744 = vpack.c.bf16 %v4714, %v4713
      %v4745 = vpack.c.bf16 %v4716, %v4715
      %v4746 = vpack.c.bf16 %v4718, %v4717
      %v4747 = vpack.c.bf16 %v4720, %v4719
      %v4748 = vpack.c.bf16 %v4722, %v4721
      %v4749 = vpack.c.bf16 %v4724, %v4723
      %v4750 = vpack.c.bf16 %v4726, %v4725
      %v4751 = vpack.c.bf16 %v4728, %v4727
      %v4752 = vpack.c.bf16 %v4730, %v4729
      %v4753 = vpack.c.bf16 %v4732, %v4731
      %v4754 = vpack.c.bf16 %v4734, %v4733
      %v4755 = vpack.c.bf16 %v4736, %v4735
      %v4756 = vpack.c.bf16 %v4738, %v4737
      %v4757 = vpack.c.bf16 %v4740, %v4739
      %v4758 = vpack.c.bf16 %v4742, %v4741
      %v4775 = vunpack.c.l.b16 %v4743
      %v4776 = vunpack.c.h.b16 %v4743
      %v4777 = vunpack.c.l.b16 %v4744
      %v4778 = vunpack.c.h.b16 %v4744
      %v4779 = vunpack.c.l.b16 %v4745
      %v4780 = vunpack.c.h.b16 %v4745
      %v4781 = vunpack.c.l.b16 %v4746
      %v4782 = vunpack.c.h.b16 %v4746
      %v4783 = vunpack.c.l.b16 %v4747
      %v4784 = vunpack.c.h.b16 %v4747
      %v4785 = vunpack.c.l.b16 %v4748
      %v4786 = vunpack.c.h.b16 %v4748
      %v4787 = vunpack.c.l.b16 %v4749
      %v4788 = vunpack.c.h.b16 %v4749
      %v4789 = vunpack.c.l.b16 %v4750
      %v4790 = vunpack.c.h.b16 %v4750
      %v4791 = vunpack.c.l.b16 %v4751
      %v4792 = vunpack.c.h.b16 %v4751
      %v4793 = vunpack.c.l.b16 %v4752
      %v4794 = vunpack.c.h.b16 %v4752
      %v4795 = vunpack.c.l.b16 %v4753
      %v4796 = vunpack.c.h.b16 %v4753
      %v4797 = vunpack.c.l.b16 %v4754
      %v4798 = vunpack.c.h.b16 %v4754
      %v4799 = vunpack.c.l.b16 %v4755
      %v4800 = vunpack.c.h.b16 %v4755
      %v4801 = vunpack.c.l.b16 %v4756
      %v4802 = vunpack.c.h.b16 %v4756
      %v4803 = vunpack.c.l.b16 %v4757
      %v4804 = vunpack.c.h.b16 %v4757
      %v4805 = vunpack.c.l.b16 %v4758
      %v4806 = vunpack.c.h.b16 %v4758
      %v4807 = vpack.c.b16 %v4775, %v4775
      %v4808 = vpack.c.b16 %v4776, %v4776
      %v4809 = vpack.c.b16 %v4777, %v4777
      %v4810 = vpack.c.b16 %v4778, %v4778
      %v4811 = vpack.c.b16 %v4779, %v4779
      %v4812 = vpack.c.b16 %v4780, %v4780
      %v4813 = vpack.c.b16 %v4781, %v4781
      %v4814 = vpack.c.b16 %v4782, %v4782
      %v4815 = vpack.c.b16 %v4783, %v4783
      %v4816 = vpack.c.b16 %v4784, %v4784
      %v4817 = vpack.c.b16 %v4785, %v4785
      %v4818 = vpack.c.b16 %v4786, %v4786
      %v4819 = vpack.c.b16 %v4787, %v4787
      %v4820 = vpack.c.b16 %v4788, %v4788
      %v4821 = vpack.c.b16 %v4789, %v4789
      %v4822 = vpack.c.b16 %v4790, %v4790
      %v4823 = vpack.c.b16 %v4791, %v4791
      %v4824 = vpack.c.b16 %v4792, %v4792
      %v4825 = vpack.c.b16 %v4793, %v4793
      %v4826 = vpack.c.b16 %v4794, %v4794
      %v4827 = vpack.c.b16 %v4795, %v4795
      %v4828 = vpack.c.b16 %v4796, %v4796
      %v4829 = vpack.c.b16 %v4797, %v4797
      %v4830 = vpack.c.b16 %v4798, %v4798
      %v4831 = vpack.c.b16 %v4799, %v4799
      %v4832 = vpack.c.b16 %v4800, %v4800
      %v4833 = vpack.c.b16 %v4801, %v4801
      %v4834 = vpack.c.b16 %v4802, %v4802
      %v4835 = vpack.c.b16 %v4803, %v4803
      %v4836 = vpack.c.b16 %v4804, %v4804
      %v4837 = vpack.c.b16 %v4805, %v4805
      %v4838 = vpack.c.b16 %v4806, %v4806
      %4871 = vst [vmem:[%s177] sm:$0xf] %v4807
      %4872 = vst [vmem:[%s177 + $0x4] sm:$0xf] %v4808
      %4873 = vst [vmem:[%s177 + $0x8] sm:$0xf] %v4809
      %4874 = vst [vmem:[%s177 + $0xc] sm:$0xf] %v4810
      %4875 = vst [vmem:[%s177 + $0x10] sm:$0xf] %v4811
      %4876 = vst [vmem:[%s177 + $0x14] sm:$0xf] %v4812
      %4877 = vst [vmem:[%s177 + $0x18] sm:$0xf] %v4813
      %4878 = vst [vmem:[%s177 + $0x1c] sm:$0xf] %v4814
      %4879 = vst [vmem:[%s177 + $0x20] sm:$0xf] %v4815
      %4880 = vst [vmem:[%s177 + $0x24] sm:$0xf] %v4816
      %4881 = vst [vmem:[%s177 + $0x28] sm:$0xf] %v4817
      %4882 = vst [vmem:[%s177 + $0x2c] sm:$0xf] %v4818
      %4883 = vst [vmem:[%s177 + $0x30] sm:$0xf] %v4819
      %4884 = vst [vmem:[%s177 + $0x34] sm:$0xf] %v4820
      %4885 = vst [vmem:[%s177 + $0x38] sm:$0xf] %v4821
      %4886 = vst [vmem:[%s177 + $0x3c] sm:$0xf] %v4822
      %4887 = vst [vmem:[%s177 + $0x40] sm:$0xf] %v4823
      %4888 = vst [vmem:[%s177 + $0x44] sm:$0xf] %v4824
      %4889 = vst [vmem:[%s177 + $0x48] sm:$0xf] %v4825
      %4890 = vst [vmem:[%s177 + $0x4c] sm:$0xf] %v4826
      %4891 = vst [vmem:[%s177 + $0x50] sm:$0xf] %v4827
      %4892 = vst [vmem:[%s177 + $0x54] sm:$0xf] %v4828
      %4893 = vst [vmem:[%s177 + $0x58] sm:$0xf] %v4829
      %4894 = vst [vmem:[%s177 + $0x5c] sm:$0xf] %v4830
      %4895 = vst [vmem:[%s177 + $0x60] sm:$0xf] %v4831
      %4896 = vst [vmem:[%s177 + $0x64] sm:$0xf] %v4832
      %4897 = vst [vmem:[%s177 + $0x68] sm:$0xf] %v4833
      %4898 = vst [vmem:[%s177 + $0x6c] sm:$0xf] %v4834
      %4899 = vst [vmem:[%s177 + $0x70] sm:$0xf] %v4835
      %4900 = vst [vmem:[%s177 + $0x74] sm:$0xf] %v4836
      %4901 = vst [vmem:[%s177 + $0x78] sm:$0xf] %v4837
      %4902 = vst [vmem:[%s177 + $0x7c] sm:$0xf] %v4838
      %v4903 = vadd.f32 %v4711, %v4712
      %v4904 = vadd.f32 %v4903, %v4713
      %v4905 = vadd.f32 %v4904, %v4714
      %v4906 = vadd.f32 %v4905, %v4715
      %v4907 = vadd.f32 %v4906, %v4716
      %v4908 = vadd.f32 %v4907, %v4717
      %v4909 = vadd.f32 %v4908, %v4718
      %v4910 = vadd.f32 %v4909, %v4719
      %v4911 = vadd.f32 %v4910, %v4720
      %v4912 = vadd.f32 %v4911, %v4721
      %v4913 = vadd.f32 %v4912, %v4722
      %v4914 = vadd.f32 %v4913, %v4723
      %v4915 = vadd.f32 %v4914, %v4724
      %v4916 = vadd.f32 %v4915, %v4725
      %v4917 = vadd.f32 %v4916, %v4726
      %v4918 = vadd.f32 %v4917, %v4727
      %v4919 = vadd.f32 %v4918, %v4728
      %v4920 = vadd.f32 %v4919, %v4729
      %v4921 = vadd.f32 %v4920, %v4730
      %v4922 = vadd.f32 %v4921, %v4731
      %v4923 = vadd.f32 %v4922, %v4732
      %v4924 = vadd.f32 %v4923, %v4733
      %v4925 = vadd.f32 %v4924, %v4734
      %v4926 = vadd.f32 %v4925, %v4735
      %v4927 = vadd.f32 %v4926, %v4736
      %v4928 = vadd.f32 %v4927, %v4737
      %v4929 = vadd.f32 %v4928, %v4738
      %v4930 = vadd.f32 %v4929, %v4739
      %v4931 = vadd.f32 %v4930, %v4740
      %v4932 = vadd.f32 %v4931, %v4741
      %v4933 = vadd.f32 %v4932, %v4742
      %v4934 = vrot.slane %v4933, 4
      %v4935 = vadd.f32 %v4933, %v4934
      %v4936 = vrot.slane %v4935, 2
      %v4937 = vadd.f32 %v4935, %v4936
      %v4938 = vrot.slane %v4937, 1
      %v4939 = vadd.f32 %v4937, %v4938
      %4940 = vst [vmem:[%s182] sm:$0x1] %v4939
      %v4941 = vmul.f32 %v4711, %v4711
      %v4942 = vmul.f32 %v4712, %v4712
      %v4943 = vmul.f32 %v4713, %v4713
      %v4944 = vmul.f32 %v4714, %v4714
      %v4945 = vmul.f32 %v4715, %v4715
      %v4946 = vmul.f32 %v4716, %v4716
      %v4947 = vmul.f32 %v4717, %v4717
      %v4948 = vmul.f32 %v4718, %v4718
      %v4949 = vmul.f32 %v4719, %v4719
      %v4950 = vmul.f32 %v4720, %v4720
      %v4951 = vmul.f32 %v4721, %v4721
      %v4952 = vmul.f32 %v4722, %v4722
      %v4953 = vmul.f32 %v4723, %v4723
      %v4954 = vmul.f32 %v4724, %v4724
      %v4955 = vmul.f32 %v4725, %v4725
      %v4956 = vmul.f32 %v4726, %v4726
      %v4957 = vmul.f32 %v4727, %v4727
      %v4958 = vmul.f32 %v4728, %v4728
      %v4959 = vmul.f32 %v4729, %v4729
      %v4960 = vmul.f32 %v4730, %v4730
      %v4961 = vmul.f32 %v4731, %v4731
      %v4962 = vmul.f32 %v4732, %v4732
      %v4963 = vmul.f32 %v4733, %v4733
      %v4964 = vmul.f32 %v4734, %v4734
      %v4965 = vmul.f32 %v4735, %v4735
      %v4966 = vmul.f32 %v4736, %v4736
      %v4967 = vmul.f32 %v4737, %v4737
      %v4968 = vmul.f32 %v4738, %v4738
      %v4969 = vmul.f32 %v4739, %v4739
      %v4970 = vmul.f32 %v4740, %v4740
      %v4971 = vmul.f32 %v4741, %v4741
      %v4972 = vmul.f32 %v4742, %v4742
      %v4973 = vadd.f32 %v4941, %v4942
      %v4974 = vadd.f32 %v4973, %v4943
      %v4975 = vadd.f32 %v4974, %v4944
      %v4976 = vadd.f32 %v4975, %v4945
      %v4977 = vadd.f32 %v4976, %v4946
      %v4978 = vadd.f32 %v4977, %v4947
      %v4979 = vadd.f32 %v4978, %v4948
      %v4980 = vadd.f32 %v4979, %v4949
      %v4981 = vadd.f32 %v4980, %v4950
      %v4982 = vadd.f32 %v4981, %v4951
      %v4983 = vadd.f32 %v4982, %v4952
      %v4984 = vadd.f32 %v4983, %v4953
      %v4985 = vadd.f32 %v4984, %v4954
      %v4986 = vadd.f32 %v4985, %v4955
      %v4987 = vadd.f32 %v4986, %v4956
      %v4988 = vadd.f32 %v4987, %v4957
      %v4989 = vadd.f32 %v4988, %v4958
      %v4990 = vadd.f32 %v4989, %v4959
      %v4991 = vadd.f32 %v4990, %v4960
      %v4992 = vadd.f32 %v4991, %v4961
      %v4993 = vadd.f32 %v4992, %v4962
      %v4994 = vadd.f32 %v4993, %v4963
      %v4995 = vadd.f32 %v4994, %v4964
      %v4996 = vadd.f32 %v4995, %v4965
      %v4997 = vadd.f32 %v4996, %v4966
      %v4998 = vadd.f32 %v4997, %v4967
      %v4999 = vadd.f32 %v4998, %v4968
      %v5000 = vadd.f32 %v4999, %v4969
      %v5001 = vadd.f32 %v5000, %v4970
      %v5002 = vadd.f32 %v5001, %v4971
      %v5003 = vadd.f32 %v5002, %v4972
      %v5004 = vrot.slane %v5003, 4
      %v5005 = vadd.f32 %v5003, %v5004
      %v5006 = vrot.slane %v5005, 2
      %v5007 = vadd.f32 %v5005, %v5006
      %v5008 = vrot.slane %v5007, 1
      %v5009 = vadd.f32 %v5007, %v5008
      %5010 = vst [vmem:[%s182 + $0x1] sm:$0x1] %v5009
      %s5011 = smul.u32 32, %s15
      %p5012 = scmp.lt.s32.totalorder %s5011, 63
      %s5013 = scalar_select %p5012, %s5011, 63
      %s5014 = smul.addr %s5013, 4
      %s5015 = scalar_lea.vmem %s2, %s5014
      %p5016 = scmp.lt.s32.totalorder %s15, 1
      %s5017 = scalar_select %p5016, %s15, 1
      %s5018 = smul.addr %s5017, 2
      %s5019 = scalar_lea.vmem %s3, %s5018
      // Predicated region
      $region29: #{basic_block_forward.4} parent=27 // pred_check
        %p5020 = pneg %p80
      $region30: #{basic_block_forward.4} parent=27 // pred_check_branch
        %5022 = sbr.rel (%p5020) target = $region32
      $region31: #{basic_block_forward.4} parent=27 // pred_region
        %s5023 = smul.u32 32, %s15
      $region32: #{basic_block_forward.4} parent=27 // pred_fallthru
        _
      // Predicated region
      $region33: #{basic_block_forward.4} parent=27 // pred_check
        %p5024 = pneg %p106
      $region34: #{basic_block_forward.4} parent=27 // pred_check_branch
        %5026 = sbr.rel (%p5024) target = $region36
      $region35: #{basic_block_forward.4} parent=27 // pred_region
        _
      $region36: #{basic_block_forward.4} parent=27 // pred_fallthru
        _
    $region28: #{basic_block_forward.4} parent=5 // pred_fallthru
      _
    %p5027 = scmp.le.s32.totalorder 2, %s10
    // Predicated region
    $region37: #{basic_block_forward.4} parent=5 // pred_check
      %p5028 = pneg %p5027
    $region38: #{basic_block_forward.4} parent=5 // pred_check_branch
      %5030 = sbr.rel (%p5028) target = $region40
    $region39: #{basic_block_forward.4} parent=5 // pred_region
      %s5031 = ssub.s32 %s10, 2
      // Predicated region
      $region41: #{basic_block_forward.4} parent=39 // pred_check
        %p5032 = pneg %p86
      $region42: #{basic_block_forward.4} parent=39 // pred_check_branch
        %5034 = sbr.rel (%p5032) target = $region44
      $region43: #{basic_block_forward.4} parent=39 // pred_region
        %s5035 = smul.u32 32, %s16
        %p5036 = scmp.lt.s32.totalorder %s5035, 63
        %s5037 = scalar_select %p5036, %s5035, 63
        %s5038 = smul.addr %s5037, 4
        %s5039 = scalar_lea.vmem %s2, %s5038
      $region44: #{basic_block_forward.4} parent=39 // pred_fallthru
        _
      // Predicated region
      $region45: #{basic_block_forward.4} parent=39 // pred_check
        %p5040 = pneg %p112
      $region46: #{basic_block_forward.4} parent=39 // pred_check_branch
        %5042 = sbr.rel (%p5040) target = $region48
      $region47: #{basic_block_forward.4} parent=39 // pred_region
        %p5043 = scmp.lt.s32.totalorder %s16, 1
        %s5044 = scalar_select %p5043, %s16, 1
        %s5045 = smul.addr %s5044, 2
        %s5046 = scalar_lea.vmem %s3, %s5045
      $region48: #{basic_block_forward.4} parent=39 // pred_fallthru
        _
    $region40: #{basic_block_forward.4} parent=5 // pred_fallthru
      _
  $region6: #{basic_block_forward.4} parent=0 // loop_footer
    %s14 = sadd.s32 1, %s10
  $region7: #{basic_block_forward.4} parent=0 // loop_footer_branch
    %9 = sbr.rel target = $region3
  $region8: #{basic_block_forward.4} parent=0 // loop_exit
    _

</llo_original>
